<compile_context>
chip_gen: v5e
topology: v5e:2x2
jax: 0.10.0
libtpu: 0.0.40
codegen_flags: <defaults>
</compile_context>

<pallas_src>
import functools
import math

import jax
import jax.numpy as jnp
from jax import lax
from jax.experimental import pallas as pl
from jax.experimental.pallas import tpu as pltpu

LN_EPS = 1e-5  # torch TransformerEncoderLayer default layer_norm_eps


# ---------------------------------------------------------------------------
# helpers
# ---------------------------------------------------------------------------
def _layer_norm(x, gamma, beta):
    mean = jnp.mean(x, axis=-1, keepdims=True)
    var = jnp.mean((x - mean) ** 2, axis=-1, keepdims=True)
    return (x - mean) * lax.rsqrt(var + LN_EPS) * gamma + beta


def _vmem_limit_bytes():
    """Generation-aware scoped-VMEM limit (~85% of physical VMEM)."""
    try:
        cap = int(pltpu.get_tpu_info().vmem_capacity_bytes)
        return int(0.85 * cap)
    except Exception:
        return 48 * 1024 * 1024


# ---------------------------------------------------------------------------
# fused whole-model kernel: grid = (batch_tile, layer)
# ---------------------------------------------------------------------------
def _stock_transformer_kernel(
    x_ref,       # (M, F)        f32   raw input rows for this batch tile
    pe_ref,      # (S, D)        f32   positional encoding
    w_in_ref,    # (F, D)        bf16
    b_in_ref,    # (1, D)        f32
    wq_ref,      # (1, H, D, Dh) bf16  (scale pre-folded)
    wk_ref,      # (1, H, D, Dh) bf16
    wv_ref,      # (1, H, D, Dh) bf16
    bq_ref,      # (1, H, Dh)    f32   (scale pre-folded)
    bk_ref,      # (1, H, Dh)    f32
    bv_ref,      # (1, H, Dh)    f32
    wo_ref,      # (1, H, Dh, D) bf16  per-head rows of the out-projection
    vec_ref,     # (1, 6, D)     f32   [bo, ln1_g, ln1_b, b2, ln2_g, ln2_b]
    w1_ref,      # (1, D, Dff)   bf16
    b1_ref,      # (1, 1, Dff)   f32
    w2_ref,      # (1, Dff, D)   bf16
    w_out_ref,   # (D, F)        bf16
    b_out_ref,   # (1, F)        f32
    o_ref,       # (M, F)        f32   written only at the last layer
    carry_ref,   # (M, D)        f32   VMEM scratch, resident across the layer axis
):
    l = pl.program_id(1)
    n_layers = pl.num_programs(1)

    M, _ = x_ref.shape
    S, D = pe_ref.shape
    bt = M // S
    H = wq_ref.shape[1]
    Dh = wq_ref.shape[3]

    # --- layer 0: fused input projection + positional encoding ---------------
    @pl.when(l == 0)
    def _():
        xin = x_ref[...].astype(jnp.bfloat16)                       # (M, F)
        h0 = (
            jnp.dot(xin, w_in_ref[...], preferred_element_type=jnp.float32)
            + b_in_ref[...]
        )
        pe = pe_ref[...]
        if bt > 1:
            pe = jnp.concatenate([pe] * bt, axis=0)                 # (M, D)
        carry_ref[...] = h0 + pe

    x = carry_ref[...]                                              # (M, D) f32

    vec = vec_ref[0]                                                # (6, D)
    bo, g1, be1, b2, g2, be2 = (vec[i:i + 1] for i in range(6))

    xb = x.astype(jnp.bfloat16)
    wq = wq_ref[0]    # (H, D, Dh)
    wk = wk_ref[0]
    wv = wv_ref[0]
    wo = wo_ref[0]    # (H, Dh, D)
    bq = bq_ref[0]    # (H, Dh)
    bk = bk_ref[0]
    bv = bv_ref[0]

    # --- multi-head self-attention (dropout = identity in eval mode) ---------
    # Per-head weights are indexed on their leading axis (free); no lane-slices
    # of activations and no head concat (out-projection is accumulated).
    attn = jnp.zeros((M, D), jnp.float32)
    for h in range(H):
        qh = jnp.dot(xb, wq[h], preferred_element_type=jnp.float32) + bq[h:h + 1, :]
        kh = jnp.dot(xb, wk[h], preferred_element_type=jnp.float32) + bk[h:h + 1, :]
        vh = jnp.dot(xb, wv[h], preferred_element_type=jnp.float32) + bv[h:h + 1, :]

        q3 = qh.reshape(bt, S, Dh).astype(jnp.bfloat16)
        k3 = kh.reshape(bt, S, Dh).astype(jnp.bfloat16)
        v3 = vh.reshape(bt, S, Dh).astype(jnp.bfloat16)

        s = jnp.einsum("bqd,bkd->bqk", q3, k3, preferred_element_type=jnp.float32)
        s = s - jnp.max(s, axis=-1, keepdims=True)
        p = jnp.exp(s)
        p = p * pl.reciprocal(jnp.sum(p, axis=-1, keepdims=True), approx=True)
        a3 = jnp.einsum(
            "bqk,bkd->bqd", p.astype(jnp.bfloat16), v3,
            preferred_element_type=jnp.float32,
        )                                                           # (bt, S, Dh)

        attn = attn + jnp.dot(
            a3.reshape(M, Dh).astype(jnp.bfloat16), wo[h],
            preferred_element_type=jnp.float32,
        )
    attn = attn + bo

    # residual + LayerNorm 1
    x = _layer_norm(x + attn, g1, be1)

    # --- feed-forward (relu) --------------------------------------------------
    h1 = (
        jnp.dot(x.astype(jnp.bfloat16), w1_ref[0], preferred_element_type=jnp.float32)
        + b1_ref[0]
    )
    h1 = jnp.maximum(h1, 0.0)
    ff = (
        jnp.dot(h1.astype(jnp.bfloat16), w2_ref[0], preferred_element_type=jnp.float32)
        + b2
    )

    # residual + LayerNorm 2
    y = _layer_norm(x + ff, g2, be2)
    carry_ref[...] = y

    # --- last layer: fused output projection ---------------------------------
    @pl.when(l == n_layers - 1)
    def _():
        o_ref[...] = (
            jnp.dot(y.astype(jnp.bfloat16), w_out_ref[...],
                    preferred_element_type=jnp.float32)
            + b_out_ref[...]
        )


def stock_transformer_forward(x, params, num_batch_tiles=1):
    """Full StockTransformer forward.  num_batch_tiles: 1 on v5e/v6e, 2 on v7x."""
    B, S, F = x.shape
    sp = params["stack"]
    L, H, D, Dh = sp["wq"].shape
    Dff = sp["w1"].shape[2]

    assert B % num_batch_tiles == 0
    bt = B // num_batch_tiles
    M = bt * S

    x_flat = x.reshape(B * S, F)

    out_flat = pl.pallas_call(
        _stock_transformer_kernel,
        grid=(num_batch_tiles, L),
        in_specs=[
            pl.BlockSpec((M, F), lambda b, l: (b, 0)),               # x
            pl.BlockSpec((S, D), lambda b, l: (0, 0)),               # pos encoding
            pl.BlockSpec((F, D), lambda b, l: (0, 0)),               # w_in
            pl.BlockSpec((1, D), lambda b, l: (0, 0)),               # b_in
            pl.BlockSpec((1, H, D, Dh), lambda b, l: (l, 0, 0, 0)),  # wq (per head)
            pl.BlockSpec((1, H, D, Dh), lambda b, l: (l, 0, 0, 0)),  # wk
            pl.BlockSpec((1, H, D, Dh), lambda b, l: (l, 0, 0, 0)),  # wv
            pl.BlockSpec((1, H, Dh), lambda b, l: (l, 0, 0)),        # bq
            pl.BlockSpec((1, H, Dh), lambda b, l: (l, 0, 0)),        # bk
            pl.BlockSpec((1, H, Dh), lambda b, l: (l, 0, 0)),        # bv
            pl.BlockSpec((1, H, Dh, D), lambda b, l: (l, 0, 0, 0)),  # wo (per head)
            pl.BlockSpec((1, 6, D), lambda b, l: (l, 0, 0)),         # packed vectors
            pl.BlockSpec((1, D, Dff), lambda b, l: (l, 0, 0)),       # w1
            pl.BlockSpec((1, 1, Dff), lambda b, l: (l, 0, 0)),       # b1
            pl.BlockSpec((1, Dff, D), lambda b, l: (l, 0, 0)),       # w2
            pl.BlockSpec((D, F), lambda b, l: (0, 0)),               # w_out
            pl.BlockSpec((1, F), lambda b, l: (0, 0)),               # b_out
        ],
        out_specs=pl.BlockSpec((M, F), lambda b, l: (b, 0)),
        out_shape=jax.ShapeDtypeStruct((B * S, F), jnp.float32),
        scratch_shapes=[pltpu.VMEM((M, D), jnp.float32)],            # activation carry
        compiler_params=pltpu.CompilerParams(
            dimension_semantics=("parallel", "arbitrary"),
            vmem_limit_bytes=_vmem_limit_bytes(),
        ),
    )(
        x_flat, params["pos_enc"], params["w_in"], params["b_in"],
        sp["wq"], sp["wk"], sp["wv"], sp["bq"], sp["bk"], sp["bv"],
        sp["wo"], sp["vec"], sp["w1"], sp["b1"], sp["w2"],
        params["w_out"], params["b_out"],
    )
    return out_flat.reshape(B, S, F)


# ---------------------------------------------------------------------------
# deterministic parameter construction
# ---------------------------------------------------------------------------
def make_pos_encoding(seq_length, d_model):
    pos = jnp.arange(seq_length, dtype=jnp.float32)[:, None]
    div = jnp.exp(
        jnp.arange(0, d_model, 2, dtype=jnp.float32) * (-math.log(10000.0) / d_model)
    )
    pe = jnp.zeros((seq_length, d_model), jnp.float32)
    pe = pe.at[:, 0::2].set(jnp.sin(pos * div))
    pe = pe.at[:, 1::2].set(jnp.cos(pos * div))
    return pe


def init_params(key, n_features, seq_length, d_model, d_ff, n_layers, n_heads):
    assert d_model % n_heads == 0
    dh = d_model // n_heads
    scale = 1.0 / math.sqrt(dh)

    def w(k, shape, mult=1.0):
        return (0.02 * mult * jax.random.normal(k, shape, jnp.float32)).astype(
            jnp.bfloat16
        )

    keys = iter(jax.random.split(key, 2 + 6 * n_layers))

    params = {
        "w_in": w(next(keys), (n_features, d_model)),
        "b_in": jnp.zeros((1, d_model), jnp.float32),
        "w_out": w(next(keys), (d_model, n_features)),
        "b_out": jnp.zeros((1, n_features), jnp.float32),
        "pos_enc": make_pos_encoding(seq_length, d_model),
    }

    wq, wk, wv, bq, bk, bv, wo, vec, w1, b1, w2 = ([] for _ in range(11))
    for _ in range(n_layers):
        # per-head q/k/v weights; the 1/sqrt(dh) attention scale is folded into
        # w_q (and would be folded into b_q if it were non-zero).
        wq.append(w(next(keys), (n_heads, d_model, dh), mult=scale))
        wk.append(w(next(keys), (n_heads, d_model, dh)))
        wv.append(w(next(keys), (n_heads, d_model, dh)))
        bq.append(jnp.zeros((n_heads, dh), jnp.float32))
        bk.append(jnp.zeros((n_heads, dh), jnp.float32))
        bv.append(jnp.zeros((n_heads, dh), jnp.float32))
        wo.append(w(next(keys), (n_heads, dh, d_model)))
        vec.append(
            jnp.stack(
                [
                    jnp.zeros((d_model,), jnp.float32),   # out-proj bias
                    jnp.ones((d_model,), jnp.float32),    # ln1 gamma
                    jnp.zeros((d_model,), jnp.float32),   # ln1 beta
                    jnp.zeros((d_model,), jnp.float32),   # ffn linear2 bias
                    jnp.ones((d_model,), jnp.float32),    # ln2 gamma
                    jnp.zeros((d_model,), jnp.float32),   # ln2 beta
                ],
                axis=0,
            )
        )
        w1.append(w(next(keys), (d_model, d_ff)))
        b1.append(jnp.zeros((1, d_ff), jnp.float32))
        w2.append(w(next(keys), (d_ff, d_model)))

    params["stack"] = {
        "wq": jnp.stack(wq),    # (L, H, D, Dh) bf16
        "wk": jnp.stack(wk),
        "wv": jnp.stack(wv),
        "bq": jnp.stack(bq),    # (L, H, Dh) f32
        "bk": jnp.stack(bk),
        "bv": jnp.stack(bv),
        "wo": jnp.stack(wo),    # (L, H, Dh, D) bf16
        "vec": jnp.stack(vec),  # (L, 6, D) f32
        "w1": jnp.stack(w1),    # (L, D, Dff) bf16
        "b1": jnp.stack(b1),    # (L, 1, Dff) f32
        "w2": jnp.stack(w2),    # (L, Dff, D) bf16
    }
    return params


# ---------------------------------------------------------------------------
# pure-JAX reference (same bf16 casting strategy) for a sanity check
# ---------------------------------------------------------------------------
def reference_forward(x, params):
    sp = params["stack"]
    B, S, F = x.shape
    L, H, D, Dh = sp["wq"].shape
    M = B * S

    xf = x.reshape(M, F).astype(jnp.bfloat16)
    h = jnp.dot(xf, params["w_in"], preferred_element_type=jnp.float32) + params["b_in"]
    h = (h.reshape(B, S, D) + params["pos_enc"][None]).reshape(M, D)

    for l in range(L):
        vec = sp["vec"][l]
        bo, g1, be1, b2, g2, be2 = (vec[i:i + 1] for i in range(6))
        xb = h.astype(jnp.bfloat16)
        attn = jnp.zeros((M, D), jnp.float32)
        for hd in range(H):
            q = jnp.dot(xb, sp["wq"][l, hd], preferred_element_type=jnp.float32) + sp["bq"][l, hd]
            k = jnp.dot(xb, sp["wk"][l, hd], preferred_element_type=jnp.float32) + sp["bk"][l, hd]
            v = jnp.dot(xb, sp["wv"][l, hd], preferred_element_type=jnp.float32) + sp["bv"][l, hd]
            q = q.reshape(B, S, Dh).astype(jnp.bfloat16)
            k = k.reshape(B, S, Dh).astype(jnp.bfloat16)
            v = v.reshape(B, S, Dh).astype(jnp.bfloat16)
            s = jnp.einsum("bqd,bkd->bqk", q, k, preferred_element_type=jnp.float32)
            p = jax.nn.softmax(s, axis=-1)
            a = jnp.einsum("bqk,bkd->bqd", p.astype(jnp.bfloat16), v,
                           preferred_element_type=jnp.float32)
            attn = attn + jnp.dot(a.reshape(M, Dh).astype(jnp.bfloat16), sp["wo"][l, hd],
                                  preferred_element_type=jnp.float32)
        attn = attn + bo
        h = _layer_norm(h + attn, g1, be1)
        f1 = jnp.maximum(
            jnp.dot(h.astype(jnp.bfloat16), sp["w1"][l], preferred_element_type=jnp.float32)
            + sp["b1"][l], 0.0)
        ff = jnp.dot(f1.astype(jnp.bfloat16), sp["w2"][l], preferred_element_type=jnp.float32) + b2
        h = _layer_norm(h + ff, g2, be2)

    out = jnp.dot(h.astype(jnp.bfloat16), params["w_out"],
                  preferred_element_type=jnp.float32) + params["b_out"]
    return out.reshape(B, S, F)


# ---------------------------------------------------------------------------
if __name__ == "__main__":
    # small, lane-dense shapes consistent with the module's (B, S, n_features) input
    B, SEQ, N_FEATURES = 2, 8, 4
    D_MODEL, N_HEADS, N_LAYERS, D_FF = 128, 4, 2, 256

    key = jax.random.PRNGKey(0)
    k_params, k_x = jax.random.split(key)
    params = init_params(k_params, N_FEATURES, SEQ, D_MODEL, D_FF, N_LAYERS, N_HEADS)
    x = jax.random.normal(k_x, (B, SEQ, N_FEATURES), jnp.float32)

    # TODO(synk): dropout layers are identity here (eval-mode forward).
    # num_batch_tiles=1 collapses the batch into one block (best on 1-TC v5e/v6e);
    # on v7x use num_batch_tiles=2 so the "parallel" axis shards across both TCs.
    fwd = jax.jit(functools.partial(stock_transformer_forward, num_batch_tiles=1))
    out = jax.block_until_ready(fwd(x, params))

    ref = reference_forward(x, params)
    assert out.shape == (B, SEQ, N_FEATURES)
    assert bool(jnp.all(jnp.isfinite(out)))
    assert bool(jnp.allclose(out, ref, rtol=2e-2, atol=2e-2)), float(
        jnp.max(jnp.abs(out - ref))
    )
    print("KERNEL_OK")
</pallas_src>

<mosaic_0001>
module attributes {stable_mosaic.version = 11 : i64} {
  func.func @_stock_transformer_kernel(%arg0: i32, %arg1: i32, %arg2: memref<16x4xf32, #tpu.memory_space<vmem>>, %arg3: memref<8x128xf32, #tpu.memory_space<vmem>>, %arg4: memref<4x128xbf16, #tpu.memory_space<vmem>>, %arg5: memref<1x128xf32, #tpu.memory_space<vmem>>, %arg6: memref<1x4x128x32xbf16, #tpu.memory_space<vmem>>, %arg7: memref<1x4x128x32xbf16, #tpu.memory_space<vmem>>, %arg8: memref<1x4x128x32xbf16, #tpu.memory_space<vmem>>, %arg9: memref<1x4x32xf32, #tpu.memory_space<vmem>>, %arg10: memref<1x4x32xf32, #tpu.memory_space<vmem>>, %arg11: memref<1x4x32xf32, #tpu.memory_space<vmem>>, %arg12: memref<1x4x32x128xbf16, #tpu.memory_space<vmem>>, %arg13: memref<1x6x128xf32, #tpu.memory_space<vmem>>, %arg14: memref<1x128x256xbf16, #tpu.memory_space<vmem>>, %arg15: memref<1x1x256xf32, #tpu.memory_space<vmem>>, %arg16: memref<1x256x128xbf16, #tpu.memory_space<vmem>>, %arg17: memref<128x4xbf16, #tpu.memory_space<vmem>>, %arg18: memref<1x4xf32, #tpu.memory_space<vmem>>, %arg19: memref<16x4xf32, #tpu.memory_space<vmem>>, %arg20: memref<16x128xf32, #tpu.memory_space<vmem>>) attributes {dimension_semantics = [#tpu.dimension_semantics<parallel>, #tpu.dimension_semantics<arbitrary>], iteration_bounds = array<i64: 1, 2>, scalar_prefetch = 0 : i64, scratch_operands = 1 : i64, tpu.core_type = #tpu.core_type<tc>, window_params = [{transform_indices = @transform_0, window_bounds = array<i64: 16, 4>}, {pipeline_mode = #tpu.pipeline_mode<synchronous>, transform_indices = @transform_1, window_bounds = array<i64: 8, 128>}, {pipeline_mode = #tpu.pipeline_mode<synchronous>, transform_indices = @transform_2, window_bounds = array<i64: 4, 128>}, {pipeline_mode = #tpu.pipeline_mode<synchronous>, transform_indices = @transform_3, window_bounds = array<i64: 1, 128>}, {transform_indices = @transform_4, window_bounds = array<i64: 1, 4, 128, 32>}, {transform_indices = @transform_5, window_bounds = array<i64: 1, 4, 128, 32>}, {transform_indices = @transform_6, window_bounds = array<i64: 1, 4, 128, 32>}, {transform_indices = @transform_7, window_bounds = array<i64: 1, 4, 32>}, {transform_indices = @transform_8, window_bounds = array<i64: 1, 4, 32>}, {transform_indices = @transform_9, window_bounds = array<i64: 1, 4, 32>}, {transform_indices = @transform_10, window_bounds = array<i64: 1, 4, 32, 128>}, {transform_indices = @transform_11, window_bounds = array<i64: 1, 6, 128>}, {transform_indices = @transform_12, window_bounds = array<i64: 1, 128, 256>}, {transform_indices = @transform_13, window_bounds = array<i64: 1, 1, 256>}, {transform_indices = @transform_14, window_bounds = array<i64: 1, 256, 128>}, {pipeline_mode = #tpu.pipeline_mode<synchronous>, transform_indices = @transform_15, window_bounds = array<i64: 128, 4>}, {pipeline_mode = #tpu.pipeline_mode<synchronous>, transform_indices = @transform_16, window_bounds = array<i64: 1, 4>}, {transform_indices = @transform_17, window_bounds = array<i64: 16, 4>}]} {
    %c0_i32 = arith.constant 0 : i32
    %0 = arith.cmpi eq, %arg1, %c0_i32 : i32
    %1 = arith.extui %0 : i1 to i32
    %c0_i32_0 = arith.constant 0 : i32
    %2 = arith.cmpi ne, %1, %c0_i32_0 : i32
    scf.if %2 {
      %c0_87 = arith.constant 0 : index
      %c0_88 = arith.constant 0 : index
      %268 = vector.load %arg2[%c0_87, %c0_88] : memref<16x4xf32, #tpu.memory_space<vmem>>, vector<16x4xf32>
      %269 = arith.truncf %268 : vector<16x4xf32> to vector<16x4xbf16>
      %c0_89 = arith.constant 0 : index
      %c0_90 = arith.constant 0 : index
      %270 = vector.load %arg4[%c0_89, %c0_90] : memref<4x128xbf16, #tpu.memory_space<vmem>>, vector<4x128xbf16>
      %cst_91 = arith.constant dense<0.000000e+00> : vector<16x128xf32>
      %271 = tpu.matmul %269, %270, %cst_91 {dimension_numbers = #tpu.dot_dimension_numbers<[1], [0], [0], [1], [0, 0, 1, 1], [], []>} : vector<16x4xbf16>, vector<4x128xbf16>, vector<16x128xf32> -> vector<16x128xf32>
      %c0_92 = arith.constant 0 : index
      %c0_93 = arith.constant 0 : index
      %272 = vector.load %arg5[%c0_92, %c0_93] : memref<1x128xf32, #tpu.memory_space<vmem>>, vector<1x128xf32>
      %273 = vector.broadcast %272 : vector<1x128xf32> to vector<16x128xf32>
      %274 = arith.addf %271, %273 : vector<16x128xf32>
      %c0_94 = arith.constant 0 : index
      %c0_95 = arith.constant 0 : index
      %275 = vector.load %arg3[%c0_94, %c0_95] : memref<8x128xf32, #tpu.memory_space<vmem>>, vector<8x128xf32>
      %276 = tpu.concatenate %275, %275 in 0 : vector<8x128xf32>, vector<8x128xf32> -> vector<16x128xf32>
      %277 = arith.addf %274, %276 : vector<16x128xf32>
      %c0_96 = arith.constant 0 : index
      %c0_97 = arith.constant 0 : index
      %278 = vector.load %arg20[%c0_96, %c0_97] : memref<16x128xf32, #tpu.memory_space<vmem>>, vector<16x128xf32>
      tpu.vector_store %arg20[%c0_96, %c0_97], %277 {strides = array<i32>} : memref<16x128xf32, #tpu.memory_space<vmem>>, vector<16x128xf32>,
    } else {
    }
    %c0 = arith.constant 0 : index
    %c0_1 = arith.constant 0 : index
    %3 = vector.load %arg20[%c0, %c0_1] : memref<16x128xf32, #tpu.memory_space<vmem>>, vector<16x128xf32>
    %c0_2 = arith.constant 0 : index
    %c0_3 = arith.constant 0 : index
    %c0_4 = arith.constant 0 : index
    %4 = vector.load %arg13[%c0_2, %c0_3, %c0_4] : memref<1x6x128xf32, #tpu.memory_space<vmem>>, vector<1x6x128xf32>
    %5 = vector.shape_cast %4 : vector<1x6x128xf32> to vector<6x128xf32>
    %6 = vector.extract_strided_slice %5 {offsets = [0, 0], sizes = [1, 128], strides = [1, 1]} : vector<6x128xf32> to vector<1x128xf32>
    %7 = vector.extract_strided_slice %5 {offsets = [1, 0], sizes = [1, 128], strides = [1, 1]} : vector<6x128xf32> to vector<1x128xf32>
    %8 = vector.extract_strided_slice %5 {offsets = [2, 0], sizes = [1, 128], strides = [1, 1]} : vector<6x128xf32> to vector<1x128xf32>
    %9 = vector.extract_strided_slice %5 {offsets = [3, 0], sizes = [1, 128], strides = [1, 1]} : vector<6x128xf32> to vector<1x128xf32>
    %10 = vector.extract_strided_slice %5 {offsets = [4, 0], sizes = [1, 128], strides = [1, 1]} : vector<6x128xf32> to vector<1x128xf32>
    %11 = vector.extract_strided_slice %5 {offsets = [5, 0], sizes = [1, 128], strides = [1, 1]} : vector<6x128xf32> to vector<1x128xf32>
    %12 = arith.truncf %3 : vector<16x128xf32> to vector<16x128xbf16>
    %c0_5 = arith.constant 0 : index
    %c0_6 = arith.constant 0 : index
    %c0_7 = arith.constant 0 : index
    %c0_8 = arith.constant 0 : index
    %13 = vector.load %arg6[%c0_5, %c0_6, %c0_7, %c0_8] : memref<1x4x128x32xbf16, #tpu.memory_space<vmem>>, vector<1x4x128x32xbf16>
    %14 = vector.shape_cast %13 : vector<1x4x128x32xbf16> to vector<4x128x32xbf16>
    %c0_9 = arith.constant 0 : index
    %c0_10 = arith.constant 0 : index
    %c0_11 = arith.constant 0 : index
    %c0_12 = arith.constant 0 : index
    %15 = vector.load %arg7[%c0_9, %c0_10, %c0_11, %c0_12] : memref<1x4x128x32xbf16, #tpu.memory_space<vmem>>, vector<1x4x128x32xbf16>
    %16 = vector.shape_cast %15 : vector<1x4x128x32xbf16> to vector<4x128x32xbf16>
    %c0_13 = arith.constant 0 : index
    %c0_14 = arith.constant 0 : index
    %c0_15 = arith.constant 0 : index
    %c0_16 = arith.constant 0 : index
    %17 = vector.load %arg8[%c0_13, %c0_14, %c0_15, %c0_16] : memref<1x4x128x32xbf16, #tpu.memory_space<vmem>>, vector<1x4x128x32xbf16>
    %18 = vector.shape_cast %17 : vector<1x4x128x32xbf16> to vector<4x128x32xbf16>
    %c0_17 = arith.constant 0 : index
    %c0_18 = arith.constant 0 : index
    %c0_19 = arith.constant 0 : index
    %c0_20 = arith.constant 0 : index
    %19 = vector.load %arg12[%c0_17, %c0_18, %c0_19, %c0_20] : memref<1x4x32x128xbf16, #tpu.memory_space<vmem>>, vector<1x4x32x128xbf16>
    %20 = vector.shape_cast %19 : vector<1x4x32x128xbf16> to vector<4x32x128xbf16>
    %c0_21 = arith.constant 0 : index
    %c0_22 = arith.constant 0 : index
    %c0_23 = arith.constant 0 : index
    %21 = vector.load %arg9[%c0_21, %c0_22, %c0_23] : memref<1x4x32xf32, #tpu.memory_space<vmem>>, vector<1x4x32xf32>
    %22 = vector.shape_cast %21 : vector<1x4x32xf32> to vector<4x32xf32>
    %c0_24 = arith.constant 0 : index
    %c0_25 = arith.constant 0 : index
    %c0_26 = arith.constant 0 : index
    %23 = vector.load %arg10[%c0_24, %c0_25, %c0_26] : memref<1x4x32xf32, #tpu.memory_space<vmem>>, vector<1x4x32xf32>
    %24 = vector.shape_cast %23 : vector<1x4x32xf32> to vector<4x32xf32>
    %c0_27 = arith.constant 0 : index
    %c0_28 = arith.constant 0 : index
    %c0_29 = arith.constant 0 : index
    %25 = vector.load %arg11[%c0_27, %c0_28, %c0_29] : memref<1x4x32xf32, #tpu.memory_space<vmem>>, vector<1x4x32xf32>
    %26 = vector.shape_cast %25 : vector<1x4x32xf32> to vector<4x32xf32>
    %cst = arith.constant 0.000000e+00 : f32
    %27 = vector.broadcast %cst : f32 to vector<16x128xf32>
    %28 = vector.extract_strided_slice %14 {offsets = [0, 0, 0], sizes = [1, 128, 32], strides = [1, 1, 1]} : vector<4x128x32xbf16> to vector<1x128x32xbf16>
    %29 = vector.shape_cast %28 : vector<1x128x32xbf16> to vector<128x32xbf16>
    %cst_30 = arith.constant dense<0.000000e+00> : vector<16x32xf32>
    %30 = tpu.matmul %12, %29, %cst_30 {dimension_numbers = #tpu.dot_dimension_numbers<[1], [0], [0], [1], [0, 0, 1, 1], [], []>} : vector<16x128xbf16>, vector<128x32xbf16>, vector<16x32xf32> -> vector<16x32xf32>
    %31 = vector.extract_strided_slice %22 {offsets = [0, 0], sizes = [1, 32], strides = [1, 1]} : vector<4x32xf32> to vector<1x32xf32>
    %32 = vector.broadcast %31 : vector<1x32xf32> to vector<16x32xf32>
    %33 = arith.addf %30, %32 : vector<16x32xf32>
    %34 = vector.extract_strided_slice %16 {offsets = [0, 0, 0], sizes = [1, 128, 32], strides = [1, 1, 1]} : vector<4x128x32xbf16> to vector<1x128x32xbf16>
    %35 = vector.shape_cast %34 : vector<1x128x32xbf16> to vector<128x32xbf16>
    %cst_31 = arith.constant dense<0.000000e+00> : vector<16x32xf32>
    %36 = tpu.matmul %12, %35, %cst_31 {dimension_numbers = #tpu.dot_dimension_numbers<[1], [0], [0], [1], [0, 0, 1, 1], [], []>} : vector<16x128xbf16>, vector<128x32xbf16>, vector<16x32xf32> -> vector<16x32xf32>
    %37 = vector.extract_strided_slice %24 {offsets = [0, 0], sizes = [1, 32], strides = [1, 1]} : vector<4x32xf32> to vector<1x32xf32>
    %38 = vector.broadcast %37 : vector<1x32xf32> to vector<16x32xf32>
    %39 = arith.addf %36, %38 : vector<16x32xf32>
    %40 = vector.extract_strided_slice %18 {offsets = [0, 0, 0], sizes = [1, 128, 32], strides = [1, 1, 1]} : vector<4x128x32xbf16> to vector<1x128x32xbf16>
    %41 = vector.shape_cast %40 : vector<1x128x32xbf16> to vector<128x32xbf16>
    %cst_32 = arith.constant dense<0.000000e+00> : vector<16x32xf32>
    %42 = tpu.matmul %12, %41, %cst_32 {dimension_numbers = #tpu.dot_dimension_numbers<[1], [0], [0], [1], [0, 0, 1, 1], [], []>} : vector<16x128xbf16>, vector<128x32xbf16>, vector<16x32xf32> -> vector<16x32xf32>
    %43 = vector.extract_strided_slice %26 {offsets = [0, 0], sizes = [1, 32], strides = [1, 1]} : vector<4x32xf32> to vector<1x32xf32>
    %44 = vector.broadcast %43 : vector<1x32xf32> to vector<16x32xf32>
    %45 = arith.addf %42, %44 : vector<16x32xf32>
    %46 = vector.shape_cast %33 : vector<16x32xf32> to vector<2x8x32xf32>
    %47 = arith.truncf %46 : vector<2x8x32xf32> to vector<2x8x32xbf16>
    %48 = vector.shape_cast %39 : vector<16x32xf32> to vector<2x8x32xf32>
    %49 = arith.truncf %48 : vector<2x8x32xf32> to vector<2x8x32xbf16>
    %50 = vector.shape_cast %45 : vector<16x32xf32> to vector<2x8x32xf32>
    %51 = arith.truncf %50 : vector<2x8x32xf32> to vector<2x8x32xbf16>
    "tpu.trace_start"() <{level = 10 : i32, message = "bqd,bkd->bqk"}> : () -> ()
    %cst_33 = arith.constant dense<0.000000e+00> : vector<2x8x8xf32>
    %52 = tpu.matmul %47, %49, %cst_33 {dimension_numbers = #tpu.dot_dimension_numbers<[2], [2], [1], [1], [0, 0, 0, 1, 1, 1], [0], [0]>} : vector<2x8x32xbf16>, vector<2x8x32xbf16>, vector<2x8x8xf32> -> vector<2x8x8xf32>
    "tpu.trace_stop"() : () -> ()
    %cst_34 = arith.constant dense<0xFF800000> : vector<2x8xf32>
    %53 = vector.multi_reduction <maximumf>, %52, %cst_34 [2] : vector<2x8x8xf32> to vector<2x8xf32>
    %54 = vector.shape_cast %53 : vector<2x8xf32> to vector<2x8x1xf32>
    %55 = vector.broadcast %54 : vector<2x8x1xf32> to vector<2x8x8xf32>
    %56 = arith.subf %52, %55 : vector<2x8x8xf32>
    %57 = math.exp %56 : vector<2x8x8xf32>
    %cst_35 = arith.constant dense<0.000000e+00> : vector<2x8xf32>
    %58 = vector.multi_reduction <add>, %57, %cst_35 [2] : vector<2x8x8xf32> to vector<2x8xf32>
    %59 = vector.shape_cast %58 : vector<2x8xf32> to vector<2x8x1xf32>
    %60 = tpu.reciprocal %59 {approx = true} : vector<2x8x1xf32> -> vector<2x8x1xf32>
    %61 = vector.broadcast %60 : vector<2x8x1xf32> to vector<2x8x8xf32>
    %62 = arith.mulf %57, %61 : vector<2x8x8xf32>
    %63 = arith.truncf %62 : vector<2x8x8xf32> to vector<2x8x8xbf16>
    "tpu.trace_start"() <{level = 10 : i32, message = "bqk,bkd->bqd"}> : () -> ()
    %cst_36 = arith.constant dense<0.000000e+00> : vector<2x8x32xf32>
    %64 = tpu.matmul %63, %51, %cst_36 {dimension_numbers = #tpu.dot_dimension_numbers<[2], [1], [1], [2], [0, 0, 0, 1, 1, 2], [0], [0]>} : vector<2x8x8xbf16>, vector<2x8x32xbf16>, vector<2x8x32xf32> -> vector<2x8x32xf32>
    "tpu.trace_stop"() : () -> ()
    %65 = vector.shape_cast %64 : vector<2x8x32xf32> to vector<16x32xf32>
    %66 = arith.truncf %65 : vector<16x32xf32> to vector<16x32xbf16>
    %67 = vector.extract_strided_slice %20 {offsets = [0, 0, 0], sizes = [1, 32, 128], strides = [1, 1, 1]} : vector<4x32x128xbf16> to vector<1x32x128xbf16>
    %68 = vector.shape_cast %67 : vector<1x32x128xbf16> to vector<32x128xbf16>
    %cst_37 = arith.constant dense<0.000000e+00> : vector<16x128xf32>
    %69 = tpu.matmul %66, %68, %cst_37 {dimension_numbers = #tpu.dot_dimension_numbers<[1], [0], [0], [1], [0, 0, 1, 1], [], []>} : vector<16x32xbf16>, vector<32x128xbf16>, vector<16x128xf32> -> vector<16x128xf32>
    %70 = arith.addf %27, %69 : vector<16x128xf32>
    %71 = vector.extract_strided_slice %14 {offsets = [1, 0, 0], sizes = [1, 128, 32], strides = [1, 1, 1]} : vector<4x128x32xbf16> to vector<1x128x32xbf16>
    %72 = vector.shape_cast %71 : vector<1x128x32xbf16> to vector<128x32xbf16>
    %cst_38 = arith.constant dense<0.000000e+00> : vector<16x32xf32>
    %73 = tpu.matmul %12, %72, %cst_38 {dimension_numbers = #tpu.dot_dimension_numbers<[1], [0], [0], [1], [0, 0, 1, 1], [], []>} : vector<16x128xbf16>, vector<128x32xbf16>, vector<16x32xf32> -> vector<16x32xf32>
    %74 = vector.extract_strided_slice %22 {offsets = [1, 0], sizes = [1, 32], strides = [1, 1]} : vector<4x32xf32> to vector<1x32xf32>
    %75 = vector.broadcast %74 : vector<1x32xf32> to vector<16x32xf32>
    %76 = arith.addf %73, %75 : vector<16x32xf32>
    %77 = vector.extract_strided_slice %16 {offsets = [1, 0, 0], sizes = [1, 128, 32], strides = [1, 1, 1]} : vector<4x128x32xbf16> to vector<1x128x32xbf16>
    %78 = vector.shape_cast %77 : vector<1x128x32xbf16> to vector<128x32xbf16>
    %cst_39 = arith.constant dense<0.000000e+00> : vector<16x32xf32>
    %79 = tpu.matmul %12, %78, %cst_39 {dimension_numbers = #tpu.dot_dimension_numbers<[1], [0], [0], [1], [0, 0, 1, 1], [], []>} : vector<16x128xbf16>, vector<128x32xbf16>, vector<16x32xf32> -> vector<16x32xf32>
    %80 = vector.extract_strided_slice %24 {offsets = [1, 0], sizes = [1, 32], strides = [1, 1]} : vector<4x32xf32> to vector<1x32xf32>
    %81 = vector.broadcast %80 : vector<1x32xf32> to vector<16x32xf32>
    %82 = arith.addf %79, %81 : vector<16x32xf32>
    %83 = vector.extract_strided_slice %18 {offsets = [1, 0, 0], sizes = [1, 128, 32], strides = [1, 1, 1]} : vector<4x128x32xbf16> to vector<1x128x32xbf16>
    %84 = vector.shape_cast %83 : vector<1x128x32xbf16> to vector<128x32xbf16>
    %cst_40 = arith.constant dense<0.000000e+00> : vector<16x32xf32>
    %85 = tpu.matmul %12, %84, %cst_40 {dimension_numbers = #tpu.dot_dimension_numbers<[1], [0], [0], [1], [0, 0, 1, 1], [], []>} : vector<16x128xbf16>, vector<128x32xbf16>, vector<16x32xf32> -> vector<16x32xf32>
    %86 = vector.extract_strided_slice %26 {offsets = [1, 0], sizes = [1, 32], strides = [1, 1]} : vector<4x32xf32> to vector<1x32xf32>
    %87 = vector.broadcast %86 : vector<1x32xf32> to vector<16x32xf32>
    %88 = arith.addf %85, %87 : vector<16x32xf32>
    %89 = vector.shape_cast %76 : vector<16x32xf32> to vector<2x8x32xf32>
    %90 = arith.truncf %89 : vector<2x8x32xf32> to vector<2x8x32xbf16>
    %91 = vector.shape_cast %82 : vector<16x32xf32> to vector<2x8x32xf32>
    %92 = arith.truncf %91 : vector<2x8x32xf32> to vector<2x8x32xbf16>
    %93 = vector.shape_cast %88 : vector<16x32xf32> to vector<2x8x32xf32>
    %94 = arith.truncf %93 : vector<2x8x32xf32> to vector<2x8x32xbf16>
    "tpu.trace_start"() <{level = 10 : i32, message = "bqd,bkd->bqk"}> : () -> ()
    %cst_41 = arith.constant dense<0.000000e+00> : vector<2x8x8xf32>
    %95 = tpu.matmul %90, %92, %cst_41 {dimension_numbers = #tpu.dot_dimension_numbers<[2], [2], [1], [1], [0, 0, 0, 1, 1, 1], [0], [0]>} : vector<2x8x32xbf16>, vector<2x8x32xbf16>, vector<2x8x8xf32> -> vector<2x8x8xf32>
    "tpu.trace_stop"() : () -> ()
    %cst_42 = arith.constant dense<0xFF800000> : vector<2x8xf32>
    %96 = vector.multi_reduction <maximumf>, %95, %cst_42 [2] : vector<2x8x8xf32> to vector<2x8xf32>
    %97 = vector.shape_cast %96 : vector<2x8xf32> to vector<2x8x1xf32>
    %98 = vector.broadcast %97 : vector<2x8x1xf32> to vector<2x8x8xf32>
    %99 = arith.subf %95, %98 : vector<2x8x8xf32>
    %100 = math.exp %99 : vector<2x8x8xf32>
    %cst_43 = arith.constant dense<0.000000e+00> : vector<2x8xf32>
    %101 = vector.multi_reduction <add>, %100, %cst_43 [2] : vector<2x8x8xf32> to vector<2x8xf32>
    %102 = vector.shape_cast %101 : vector<2x8xf32> to vector<2x8x1xf32>
    %103 = tpu.reciprocal %102 {approx = true} : vector<2x8x1xf32> -> vector<2x8x1xf32>
    %104 = vector.broadcast %103 : vector<2x8x1xf32> to vector<2x8x8xf32>
    %105 = arith.mulf %100, %104 : vector<2x8x8xf32>
    %106 = arith.truncf %105 : vector<2x8x8xf32> to vector<2x8x8xbf16>
    "tpu.trace_start"() <{level = 10 : i32, message = "bqk,bkd->bqd"}> : () -> ()
    %cst_44 = arith.constant dense<0.000000e+00> : vector<2x8x32xf32>
    %107 = tpu.matmul %106, %94, %cst_44 {dimension_numbers = #tpu.dot_dimension_numbers<[2], [1], [1], [2], [0, 0, 0, 1, 1, 2], [0], [0]>} : vector<2x8x8xbf16>, vector<2x8x32xbf16>, vector<2x8x32xf32> -> vector<2x8x32xf32>
    "tpu.trace_stop"() : () -> ()
    %108 = vector.shape_cast %107 : vector<2x8x32xf32> to vector<16x32xf32>
    %109 = arith.truncf %108 : vector<16x32xf32> to vector<16x32xbf16>
    %110 = vector.extract_strided_slice %20 {offsets = [1, 0, 0], sizes = [1, 32, 128], strides = [1, 1, 1]} : vector<4x32x128xbf16> to vector<1x32x128xbf16>
    %111 = vector.shape_cast %110 : vector<1x32x128xbf16> to vector<32x128xbf16>
    %cst_45 = arith.constant dense<0.000000e+00> : vector<16x128xf32>
    %112 = tpu.matmul %109, %111, %cst_45 {dimension_numbers = #tpu.dot_dimension_numbers<[1], [0], [0], [1], [0, 0, 1, 1], [], []>} : vector<16x32xbf16>, vector<32x128xbf16>, vector<16x128xf32> -> vector<16x128xf32>
    %113 = arith.addf %70, %112 : vector<16x128xf32>
    %114 = vector.extract_strided_slice %14 {offsets = [2, 0, 0], sizes = [1, 128, 32], strides = [1, 1, 1]} : vector<4x128x32xbf16> to vector<1x128x32xbf16>
    %115 = vector.shape_cast %114 : vector<1x128x32xbf16> to vector<128x32xbf16>
    %cst_46 = arith.constant dense<0.000000e+00> : vector<16x32xf32>
    %116 = tpu.matmul %12, %115, %cst_46 {dimension_numbers = #tpu.dot_dimension_numbers<[1], [0], [0], [1], [0, 0, 1, 1], [], []>} : vector<16x128xbf16>, vector<128x32xbf16>, vector<16x32xf32> -> vector<16x32xf32>
    %117 = vector.extract_strided_slice %22 {offsets = [2, 0], sizes = [1, 32], strides = [1, 1]} : vector<4x32xf32> to vector<1x32xf32>
    %118 = vector.broadcast %117 : vector<1x32xf32> to vector<16x32xf32>
    %119 = arith.addf %116, %118 : vector<16x32xf32>
    %120 = vector.extract_strided_slice %16 {offsets = [2, 0, 0], sizes = [1, 128, 32], strides = [1, 1, 1]} : vector<4x128x32xbf16> to vector<1x128x32xbf16>
    %121 = vector.shape_cast %120 : vector<1x128x32xbf16> to vector<128x32xbf16>
    %cst_47 = arith.constant dense<0.000000e+00> : vector<16x32xf32>
    %122 = tpu.matmul %12, %121, %cst_47 {dimension_numbers = #tpu.dot_dimension_numbers<[1], [0], [0], [1], [0, 0, 1, 1], [], []>} : vector<16x128xbf16>, vector<128x32xbf16>, vector<16x32xf32> -> vector<16x32xf32>
    %123 = vector.extract_strided_slice %24 {offsets = [2, 0], sizes = [1, 32], strides = [1, 1]} : vector<4x32xf32> to vector<1x32xf32>
    %124 = vector.broadcast %123 : vector<1x32xf32> to vector<16x32xf32>
    %125 = arith.addf %122, %124 : vector<16x32xf32>
    %126 = vector.extract_strided_slice %18 {offsets = [2, 0, 0], sizes = [1, 128, 32], strides = [1, 1, 1]} : vector<4x128x32xbf16> to vector<1x128x32xbf16>
    %127 = vector.shape_cast %126 : vector<1x128x32xbf16> to vector<128x32xbf16>
    %cst_48 = arith.constant dense<0.000000e+00> : vector<16x32xf32>
    %128 = tpu.matmul %12, %127, %cst_48 {dimension_numbers = #tpu.dot_dimension_numbers<[1], [0], [0], [1], [0, 0, 1, 1], [], []>} : vector<16x128xbf16>, vector<128x32xbf16>, vector<16x32xf32> -> vector<16x32xf32>
    %129 = vector.extract_strided_slice %26 {offsets = [2, 0], sizes = [1, 32], strides = [1, 1]} : vector<4x32xf32> to vector<1x32xf32>
    %130 = vector.broadcast %129 : vector<1x32xf32> to vector<16x32xf32>
    %131 = arith.addf %128, %130 : vector<16x32xf32>
    %132 = vector.shape_cast %119 : vector<16x32xf32> to vector<2x8x32xf32>
    %133 = arith.truncf %132 : vector<2x8x32xf32> to vector<2x8x32xbf16>
    %134 = vector.shape_cast %125 : vector<16x32xf32> to vector<2x8x32xf32>
    %135 = arith.truncf %134 : vector<2x8x32xf32> to vector<2x8x32xbf16>
    %136 = vector.shape_cast %131 : vector<16x32xf32> to vector<2x8x32xf32>
    %137 = arith.truncf %136 : vector<2x8x32xf32> to vector<2x8x32xbf16>
    "tpu.trace_start"() <{level = 10 : i32, message = "bqd,bkd->bqk"}> : () -> ()
    %cst_49 = arith.constant dense<0.000000e+00> : vector<2x8x8xf32>
    %138 = tpu.matmul %133, %135, %cst_49 {dimension_numbers = #tpu.dot_dimension_numbers<[2], [2], [1], [1], [0, 0, 0, 1, 1, 1], [0], [0]>} : vector<2x8x32xbf16>, vector<2x8x32xbf16>, vector<2x8x8xf32> -> vector<2x8x8xf32>
    "tpu.trace_stop"() : () -> ()
    %cst_50 = arith.constant dense<0xFF800000> : vector<2x8xf32>
    %139 = vector.multi_reduction <maximumf>, %138, %cst_50 [2] : vector<2x8x8xf32> to vector<2x8xf32>
    %140 = vector.shape_cast %139 : vector<2x8xf32> to vector<2x8x1xf32>
    %141 = vector.broadcast %140 : vector<2x8x1xf32> to vector<2x8x8xf32>
    %142 = arith.subf %138, %141 : vector<2x8x8xf32>
    %143 = math.exp %142 : vector<2x8x8xf32>
    %cst_51 = arith.constant dense<0.000000e+00> : vector<2x8xf32>
    %144 = vector.multi_reduction <add>, %143, %cst_51 [2] : vector<2x8x8xf32> to vector<2x8xf32>
    %145 = vector.shape_cast %144 : vector<2x8xf32> to vector<2x8x1xf32>
    %146 = tpu.reciprocal %145 {approx = true} : vector<2x8x1xf32> -> vector<2x8x1xf32>
    %147 = vector.broadcast %146 : vector<2x8x1xf32> to vector<2x8x8xf32>
    %148 = arith.mulf %143, %147 : vector<2x8x8xf32>
    %149 = arith.truncf %148 : vector<2x8x8xf32> to vector<2x8x8xbf16>
    "tpu.trace_start"() <{level = 10 : i32, message = "bqk,bkd->bqd"}> : () -> ()
    %cst_52 = arith.constant dense<0.000000e+00> : vector<2x8x32xf32>
    %150 = tpu.matmul %149, %137, %cst_52 {dimension_numbers = #tpu.dot_dimension_numbers<[2], [1], [1], [2], [0, 0, 0, 1, 1, 2], [0], [0]>} : vector<2x8x8xbf16>, vector<2x8x32xbf16>, vector<2x8x32xf32> -> vector<2x8x32xf32>
    "tpu.trace_stop"() : () -> ()
    %151 = vector.shape_cast %150 : vector<2x8x32xf32> to vector<16x32xf32>
    %152 = arith.truncf %151 : vector<16x32xf32> to vector<16x32xbf16>
    %153 = vector.extract_strided_slice %20 {offsets = [2, 0, 0], sizes = [1, 32, 128], strides = [1, 1, 1]} : vector<4x32x128xbf16> to vector<1x32x128xbf16>
    %154 = vector.shape_cast %153 : vector<1x32x128xbf16> to vector<32x128xbf16>
    %cst_53 = arith.constant dense<0.000000e+00> : vector<16x128xf32>
    %155 = tpu.matmul %152, %154, %cst_53 {dimension_numbers = #tpu.dot_dimension_numbers<[1], [0], [0], [1], [0, 0, 1, 1], [], []>} : vector<16x32xbf16>, vector<32x128xbf16>, vector<16x128xf32> -> vector<16x128xf32>
    %156 = arith.addf %113, %155 : vector<16x128xf32>
    %157 = vector.extract_strided_slice %14 {offsets = [3, 0, 0], sizes = [1, 128, 32], strides = [1, 1, 1]} : vector<4x128x32xbf16> to vector<1x128x32xbf16>
    %158 = vector.shape_cast %157 : vector<1x128x32xbf16> to vector<128x32xbf16>
    %cst_54 = arith.constant dense<0.000000e+00> : vector<16x32xf32>
    %159 = tpu.matmul %12, %158, %cst_54 {dimension_numbers = #tpu.dot_dimension_numbers<[1], [0], [0], [1], [0, 0, 1, 1], [], []>} : vector<16x128xbf16>, vector<128x32xbf16>, vector<16x32xf32> -> vector<16x32xf32>
    %160 = vector.extract_strided_slice %22 {offsets = [3, 0], sizes = [1, 32], strides = [1, 1]} : vector<4x32xf32> to vector<1x32xf32>
    %161 = vector.broadcast %160 : vector<1x32xf32> to vector<16x32xf32>
    %162 = arith.addf %159, %161 : vector<16x32xf32>
    %163 = vector.extract_strided_slice %16 {offsets = [3, 0, 0], sizes = [1, 128, 32], strides = [1, 1, 1]} : vector<4x128x32xbf16> to vector<1x128x32xbf16>
    %164 = vector.shape_cast %163 : vector<1x128x32xbf16> to vector<128x32xbf16>
    %cst_55 = arith.constant dense<0.000000e+00> : vector<16x32xf32>
    %165 = tpu.matmul %12, %164, %cst_55 {dimension_numbers = #tpu.dot_dimension_numbers<[1], [0], [0], [1], [0, 0, 1, 1], [], []>} : vector<16x128xbf16>, vector<128x32xbf16>, vector<16x32xf32> -> vector<16x32xf32>
    %166 = vector.extract_strided_slice %24 {offsets = [3, 0], sizes = [1, 32], strides = [1, 1]} : vector<4x32xf32> to vector<1x32xf32>
    %167 = vector.broadcast %166 : vector<1x32xf32> to vector<16x32xf32>
    %168 = arith.addf %165, %167 : vector<16x32xf32>
    %169 = vector.extract_strided_slice %18 {offsets = [3, 0, 0], sizes = [1, 128, 32], strides = [1, 1, 1]} : vector<4x128x32xbf16> to vector<1x128x32xbf16>
    %170 = vector.shape_cast %169 : vector<1x128x32xbf16> to vector<128x32xbf16>
    %cst_56 = arith.constant dense<0.000000e+00> : vector<16x32xf32>
    %171 = tpu.matmul %12, %170, %cst_56 {dimension_numbers = #tpu.dot_dimension_numbers<[1], [0], [0], [1], [0, 0, 1, 1], [], []>} : vector<16x128xbf16>, vector<128x32xbf16>, vector<16x32xf32> -> vector<16x32xf32>
    %172 = vector.extract_strided_slice %26 {offsets = [3, 0], sizes = [1, 32], strides = [1, 1]} : vector<4x32xf32> to vector<1x32xf32>
    %173 = vector.broadcast %172 : vector<1x32xf32> to vector<16x32xf32>
    %174 = arith.addf %171, %173 : vector<16x32xf32>
    %175 = vector.shape_cast %162 : vector<16x32xf32> to vector<2x8x32xf32>
    %176 = arith.truncf %175 : vector<2x8x32xf32> to vector<2x8x32xbf16>
    %177 = vector.shape_cast %168 : vector<16x32xf32> to vector<2x8x32xf32>
    %178 = arith.truncf %177 : vector<2x8x32xf32> to vector<2x8x32xbf16>
    %179 = vector.shape_cast %174 : vector<16x32xf32> to vector<2x8x32xf32>
    %180 = arith.truncf %179 : vector<2x8x32xf32> to vector<2x8x32xbf16>
    "tpu.trace_start"() <{level = 10 : i32, message = "bqd,bkd->bqk"}> : () -> ()
    %cst_57 = arith.constant dense<0.000000e+00> : vector<2x8x8xf32>
    %181 = tpu.matmul %176, %178, %cst_57 {dimension_numbers = #tpu.dot_dimension_numbers<[2], [2], [1], [1], [0, 0, 0, 1, 1, 1], [0], [0]>} : vector<2x8x32xbf16>, vector<2x8x32xbf16>, vector<2x8x8xf32> -> vector<2x8x8xf32>
    "tpu.trace_stop"() : () -> ()
    %cst_58 = arith.constant dense<0xFF800000> : vector<2x8xf32>
    %182 = vector.multi_reduction <maximumf>, %181, %cst_58 [2] : vector<2x8x8xf32> to vector<2x8xf32>
    %183 = vector.shape_cast %182 : vector<2x8xf32> to vector<2x8x1xf32>
    %184 = vector.broadcast %183 : vector<2x8x1xf32> to vector<2x8x8xf32>
    %185 = arith.subf %181, %184 : vector<2x8x8xf32>
    %186 = math.exp %185 : vector<2x8x8xf32>
    %cst_59 = arith.constant dense<0.000000e+00> : vector<2x8xf32>
    %187 = vector.multi_reduction <add>, %186, %cst_59 [2] : vector<2x8x8xf32> to vector<2x8xf32>
    %188 = vector.shape_cast %187 : vector<2x8xf32> to vector<2x8x1xf32>
    %189 = tpu.reciprocal %188 {approx = true} : vector<2x8x1xf32> -> vector<2x8x1xf32>
    %190 = vector.broadcast %189 : vector<2x8x1xf32> to vector<2x8x8xf32>
    %191 = arith.mulf %186, %190 : vector<2x8x8xf32>
    %192 = arith.truncf %191 : vector<2x8x8xf32> to vector<2x8x8xbf16>
    "tpu.trace_start"() <{level = 10 : i32, message = "bqk,bkd->bqd"}> : () -> ()
    %cst_60 = arith.constant dense<0.000000e+00> : vector<2x8x32xf32>
    %193 = tpu.matmul %192, %180, %cst_60 {dimension_numbers = #tpu.dot_dimension_numbers<[2], [1], [1], [2], [0, 0, 0, 1, 1, 2], [0], [0]>} : vector<2x8x8xbf16>, vector<2x8x32xbf16>, vector<2x8x32xf32> -> vector<2x8x32xf32>
    "tpu.trace_stop"() : () -> ()
    %194 = vector.shape_cast %193 : vector<2x8x32xf32> to vector<16x32xf32>
    %195 = arith.truncf %194 : vector<16x32xf32> to vector<16x32xbf16>
    %196 = vector.extract_strided_slice %20 {offsets = [3, 0, 0], sizes = [1, 32, 128], strides = [1, 1, 1]} : vector<4x32x128xbf16> to vector<1x32x128xbf16>
    %197 = vector.shape_cast %196 : vector<1x32x128xbf16> to vector<32x128xbf16>
    %cst_61 = arith.constant dense<0.000000e+00> : vector<16x128xf32>
    %198 = tpu.matmul %195, %197, %cst_61 {dimension_numbers = #tpu.dot_dimension_numbers<[1], [0], [0], [1], [0, 0, 1, 1], [], []>} : vector<16x32xbf16>, vector<32x128xbf16>, vector<16x128xf32> -> vector<16x128xf32>
    %199 = arith.addf %156, %198 : vector<16x128xf32>
    %200 = vector.broadcast %6 : vector<1x128xf32> to vector<16x128xf32>
    %201 = arith.addf %199, %200 : vector<16x128xf32>
    %202 = arith.addf %3, %201 : vector<16x128xf32>
    %cst_62 = arith.constant dense<0.000000e+00> : vector<16xf32>
    %203 = vector.multi_reduction <add>, %202, %cst_62 [1] : vector<16x128xf32> to vector<16xf32>
    %204 = vector.shape_cast %203 : vector<16xf32> to vector<16x1xf32>
    %cst_63 = arith.constant 1.280000e+02 : f32
    %205 = vector.broadcast %cst_63 : f32 to vector<16x1xf32>
    %206 = arith.divf %204, %205 : vector<16x1xf32>
    %207 = vector.broadcast %206 : vector<16x1xf32> to vector<16x128xf32>
    %208 = arith.subf %202, %207 : vector<16x128xf32>
    %209 = arith.mulf %208, %208 : vector<16x128xf32>
    %cst_64 = arith.constant dense<0.000000e+00> : vector<16xf32>
    %210 = vector.multi_reduction <add>, %209, %cst_64 [1] : vector<16x128xf32> to vector<16xf32>
    %211 = vector.shape_cast %210 : vector<16xf32> to vector<16x1xf32>
    %cst_65 = arith.constant 1.280000e+02 : f32
    %212 = vector.broadcast %cst_65 : f32 to vector<16x1xf32>
    %213 = arith.divf %211, %212 : vector<16x1xf32>
    %214 = vector.broadcast %206 : vector<16x1xf32> to vector<16x128xf32>
    %215 = arith.subf %202, %214 : vector<16x128xf32>
    %cst_66 = arith.constant 9.99999974E-6 : f32
    %216 = vector.broadcast %cst_66 : f32 to vector<16x1xf32>
    %217 = arith.addf %213, %216 : vector<16x1xf32>
    %218 = math.rsqrt %217 : vector<16x1xf32>
    %219 = vector.broadcast %218 : vector<16x1xf32> to vector<16x128xf32>
    %220 = arith.mulf %215, %219 : vector<16x128xf32>
    %221 = vector.broadcast %7 : vector<1x128xf32> to vector<16x128xf32>
    %222 = arith.mulf %220, %221 : vector<16x128xf32>
    %223 = vector.broadcast %8 : vector<1x128xf32> to vector<16x128xf32>
    %224 = arith.addf %222, %223 : vector<16x128xf32>
    %225 = arith.truncf %224 : vector<16x128xf32> to vector<16x128xbf16>
    %c0_67 = arith.constant 0 : index
    %c0_68 = arith.constant 0 : index
    %c0_69 = arith.constant 0 : index
    %226 = vector.load %arg14[%c0_67, %c0_68, %c0_69] : memref<1x128x256xbf16, #tpu.memory_space<vmem>>, vector<1x128x256xbf16>
    %227 = vector.shape_cast %226 : vector<1x128x256xbf16> to vector<128x256xbf16>
    %cst_70 = arith.constant dense<0.000000e+00> : vector<16x256xf32>
    %228 = tpu.matmul %225, %227, %cst_70 {dimension_numbers = #tpu.dot_dimension_numbers<[1], [0], [0], [1], [0, 0, 1, 1], [], []>} : vector<16x128xbf16>, vector<128x256xbf16>, vector<16x256xf32> -> vector<16x256xf32>
    %c0_71 = arith.constant 0 : index
    %c0_72 = arith.constant 0 : index
    %c0_73 = arith.constant 0 : index
    %229 = vector.load %arg15[%c0_71, %c0_72, %c0_73] : memref<1x1x256xf32, #tpu.memory_space<vmem>>, vector<1x1x256xf32>
    %230 = vector.shape_cast %229 : vector<1x1x256xf32> to vector<1x256xf32>
    %231 = vector.broadcast %230 : vector<1x256xf32> to vector<16x256xf32>
    %232 = arith.addf %228, %231 : vector<16x256xf32>
    %cst_74 = arith.constant 0.000000e+00 : f32
    %233 = vector.broadcast %cst_74 : f32 to vector<16x256xf32>
    %234 = arith.maximumf %232, %233 : vector<16x256xf32>
    %235 = arith.truncf %234 : vector<16x256xf32> to vector<16x256xbf16>
    %c0_75 = arith.constant 0 : index
    %c0_76 = arith.constant 0 : index
    %c0_77 = arith.constant 0 : index
    %236 = vector.load %arg16[%c0_75, %c0_76, %c0_77] : memref<1x256x128xbf16, #tpu.memory_space<vmem>>, vector<1x256x128xbf16>
    %237 = vector.shape_cast %236 : vector<1x256x128xbf16> to vector<256x128xbf16>
    %cst_78 = arith.constant dense<0.000000e+00> : vector<16x128xf32>
    %238 = tpu.matmul %235, %237, %cst_78 {dimension_numbers = #tpu.dot_dimension_numbers<[1], [0], [0], [1], [0, 0, 1, 1], [], []>} : vector<16x256xbf16>, vector<256x128xbf16>, vector<16x128xf32> -> vector<16x128xf32>
    %239 = vector.broadcast %9 : vector<1x128xf32> to vector<16x128xf32>
    %240 = arith.addf %238, %239 : vector<16x128xf32>
    %241 = arith.addf %224, %240 : vector<16x128xf32>
    %cst_79 = arith.constant dense<0.000000e+00> : vector<16xf32>
    %242 = vector.multi_reduction <add>, %241, %cst_79 [1] : vector<16x128xf32> to vector<16xf32>
    %243 = vector.shape_cast %242 : vector<16xf32> to vector<16x1xf32>
    %cst_80 = arith.constant 1.280000e+02 : f32
    %244 = vector.broadcast %cst_80 : f32 to vector<16x1xf32>
    %245 = arith.divf %243, %244 : vector<16x1xf32>
    %246 = vector.broadcast %245 : vector<16x1xf32> to vector<16x128xf32>
    %247 = arith.subf %241, %246 : vector<16x128xf32>
    %248 = arith.mulf %247, %247 : vector<16x128xf32>
    %cst_81 = arith.constant dense<0.000000e+00> : vector<16xf32>
    %249 = vector.multi_reduction <add>, %248, %cst_81 [1] : vector<16x128xf32> to vector<16xf32>
    %250 = vector.shape_cast %249 : vector<16xf32> to vector<16x1xf32>
    %cst_82 = arith.constant 1.280000e+02 : f32
    %251 = vector.broadcast %cst_82 : f32 to vector<16x1xf32>
    %252 = arith.divf %250, %251 : vector<16x1xf32>
    %253 = vector.broadcast %245 : vector<16x1xf32> to vector<16x128xf32>
    %254 = arith.subf %241, %253 : vector<16x128xf32>
    %cst_83 = arith.constant 9.99999974E-6 : f32
    %255 = vector.broadcast %cst_83 : f32 to vector<16x1xf32>
    %256 = arith.addf %252, %255 : vector<16x1xf32>
    %257 = math.rsqrt %256 : vector<16x1xf32>
    %258 = vector.broadcast %257 : vector<16x1xf32> to vector<16x128xf32>
    %259 = arith.mulf %254, %258 : vector<16x128xf32>
    %260 = vector.broadcast %10 : vector<1x128xf32> to vector<16x128xf32>
    %261 = arith.mulf %259, %260 : vector<16x128xf32>
    %262 = vector.broadcast %11 : vector<1x128xf32> to vector<16x128xf32>
    %263 = arith.addf %261, %262 : vector<16x128xf32>
    %c0_84 = arith.constant 0 : index
    %c0_85 = arith.constant 0 : index
    %264 = vector.load %arg20[%c0_84, %c0_85] : memref<16x128xf32, #tpu.memory_space<vmem>>, vector<16x128xf32>
    tpu.vector_store %arg20[%c0_84, %c0_85], %263 {strides = array<i32>} : memref<16x128xf32, #tpu.memory_space<vmem>>, vector<16x128xf32>,
    %c1_i32 = arith.constant 1 : i32
    %265 = arith.cmpi eq, %arg1, %c1_i32 : i32
    %266 = arith.extui %265 : i1 to i32
    %c0_i32_86 = arith.constant 0 : i32
    %267 = arith.cmpi ne, %266, %c0_i32_86 : i32
    scf.if %267 {
      %268 = arith.truncf %263 : vector<16x128xf32> to vector<16x128xbf16>
      %c0_87 = arith.constant 0 : index
      %c0_88 = arith.constant 0 : index
      %269 = vector.load %arg17[%c0_87, %c0_88] : memref<128x4xbf16, #tpu.memory_space<vmem>>, vector<128x4xbf16>
      %cst_89 = arith.constant dense<0.000000e+00> : vector<16x4xf32>
      %270 = tpu.matmul %268, %269, %cst_89 {dimension_numbers = #tpu.dot_dimension_numbers<[1], [0], [0], [1], [0, 0, 1, 1], [], []>} : vector<16x128xbf16>, vector<128x4xbf16>, vector<16x4xf32> -> vector<16x4xf32>
      %c0_90 = arith.constant 0 : index
      %c0_91 = arith.constant 0 : index
      %271 = vector.load %arg18[%c0_90, %c0_91] : memref<1x4xf32, #tpu.memory_space<vmem>>, vector<1x4xf32>
      %272 = vector.broadcast %271 : vector<1x4xf32> to vector<16x4xf32>
      %273 = arith.addf %270, %272 : vector<16x4xf32>
      %c0_92 = arith.constant 0 : index
      %c0_93 = arith.constant 0 : index
      %274 = vector.load %arg19[%c0_92, %c0_93] : memref<16x4xf32, #tpu.memory_space<vmem>>, vector<16x4xf32>
      tpu.vector_store %arg19[%c0_92, %c0_93], %273 {strides = array<i32>} : memref<16x4xf32, #tpu.memory_space<vmem>>, vector<16x4xf32>,
    } else {
    }
    return
  }
  func.func @transform_0(%arg0: i32, %arg1: i32) -> (i32, i32) {
    %c0_i32 = arith.constant 0 : i32
    %c0_i32_0 = arith.constant 0 : i32
    return %arg0, %c0_i32 : i32, i32
  }
  func.func @transform_1(%arg0: i32, %arg1: i32) -> (i32, i32) {
    %c0_i32 = arith.constant 0 : i32
    %c0_i32_0 = arith.constant 0 : i32
    %c0_i32_1 = arith.constant 0 : i32
    return %c0_i32, %c0_i32_0 : i32, i32
  }
  func.func @transform_2(%arg0: i32, %arg1: i32) -> (i32, i32) {
    %c0_i32 = arith.constant 0 : i32
    %c0_i32_0 = arith.constant 0 : i32
    %c0_i32_1 = arith.constant 0 : i32
    return %c0_i32, %c0_i32_0 : i32, i32
  }
  func.func @transform_3(%arg0: i32, %arg1: i32) -> (i32, i32) {
    %c0_i32 = arith.constant 0 : i32
    %c0_i32_0 = arith.constant 0 : i32
    %c0_i32_1 = arith.constant 0 : i32
    return %c0_i32, %c0_i32_0 : i32, i32
  }
  func.func @transform_4(%arg0: i32, %arg1: i32) -> (i32, i32, i32, i32) {
    %c0_i32 = arith.constant 0 : i32
    %c0_i32_0 = arith.constant 0 : i32
    %c0_i32_1 = arith.constant 0 : i32
    %c0_i32_2 = arith.constant 0 : i32
    return %arg1, %c0_i32, %c0_i32_0, %c0_i32_1 : i32, i32, i32, i32
  }
  func.func @transform_5(%arg0: i32, %arg1: i32) -> (i32, i32, i32, i32) {
    %c0_i32 = arith.constant 0 : i32
    %c0_i32_0 = arith.constant 0 : i32
    %c0_i32_1 = arith.constant 0 : i32
    %c0_i32_2 = arith.constant 0 : i32
    return %arg1, %c0_i32, %c0_i32_0, %c0_i32_1 : i32, i32, i32, i32
  }
  func.func @transform_6(%arg0: i32, %arg1: i32) -> (i32, i32, i32, i32) {
    %c0_i32 = arith.constant 0 : i32
    %c0_i32_0 = arith.constant 0 : i32
    %c0_i32_1 = arith.constant 0 : i32
    %c0_i32_2 = arith.constant 0 : i32
    return %arg1, %c0_i32, %c0_i32_0, %c0_i32_1 : i32, i32, i32, i32
  }
  func.func @transform_7(%arg0: i32, %arg1: i32) -> (i32, i32, i32) {
    %c0_i32 = arith.constant 0 : i32
    %c0_i32_0 = arith.constant 0 : i32
    %c0_i32_1 = arith.constant 0 : i32
    return %arg1, %c0_i32, %c0_i32_0 : i32, i32, i32
  }
  func.func @transform_8(%arg0: i32, %arg1: i32) -> (i32, i32, i32) {
    %c0_i32 = arith.constant 0 : i32
    %c0_i32_0 = arith.constant 0 : i32
    %c0_i32_1 = arith.constant 0 : i32
    return %arg1, %c0_i32, %c0_i32_0 : i32, i32, i32
  }
  func.func @transform_9(%arg0: i32, %arg1: i32) -> (i32, i32, i32) {
    %c0_i32 = arith.constant 0 : i32
    %c0_i32_0 = arith.constant 0 : i32
    %c0_i32_1 = arith.constant 0 : i32
    return %arg1, %c0_i32, %c0_i32_0 : i32, i32, i32
  }
  func.func @transform_10(%arg0: i32, %arg1: i32) -> (i32, i32, i32, i32) {
    %c0_i32 = arith.constant 0 : i32
    %c0_i32_0 = arith.constant 0 : i32
    %c0_i32_1 = arith.constant 0 : i32
    %c0_i32_2 = arith.constant 0 : i32
    return %arg1, %c0_i32, %c0_i32_0, %c0_i32_1 : i32, i32, i32, i32
  }
  func.func @transform_11(%arg0: i32, %arg1: i32) -> (i32, i32, i32) {
    %c0_i32 = arith.constant 0 : i32
    %c0_i32_0 = arith.constant 0 : i32
    %c0_i32_1 = arith.constant 0 : i32
    return %arg1, %c0_i32, %c0_i32_0 : i32, i32, i32
  }
  func.func @transform_12(%arg0: i32, %arg1: i32) -> (i32, i32, i32) {
    %c0_i32 = arith.constant 0 : i32
    %c0_i32_0 = arith.constant 0 : i32
    %c0_i32_1 = arith.constant 0 : i32
    return %arg1, %c0_i32, %c0_i32_0 : i32, i32, i32
  }
  func.func @transform_13(%arg0: i32, %arg1: i32) -> (i32, i32, i32) {
    %c0_i32 = arith.constant 0 : i32
    %c0_i32_0 = arith.constant 0 : i32
    %c0_i32_1 = arith.constant 0 : i32
    return %arg1, %c0_i32, %c0_i32_0 : i32, i32, i32
  }
  func.func @transform_14(%arg0: i32, %arg1: i32) -> (i32, i32, i32) {
    %c0_i32 = arith.constant 0 : i32
    %c0_i32_0 = arith.constant 0 : i32
    %c0_i32_1 = arith.constant 0 : i32
    return %arg1, %c0_i32, %c0_i32_0 : i32, i32, i32
  }
  func.func @transform_15(%arg0: i32, %arg1: i32) -> (i32, i32) {
    %c0_i32 = arith.constant 0 : i32
    %c0_i32_0 = arith.constant 0 : i32
    %c0_i32_1 = arith.constant 0 : i32
    return %c0_i32, %c0_i32_0 : i32, i32
  }
  func.func @transform_16(%arg0: i32, %arg1: i32) -> (i32, i32) {
    %c0_i32 = arith.constant 0 : i32
    %c0_i32_0 = arith.constant 0 : i32
    %c0_i32_1 = arith.constant 0 : i32
    return %c0_i32, %c0_i32_0 : i32, i32
  }
  func.func @transform_17(%arg0: i32, %arg1: i32) -> (i32, i32) {
    %c0_i32 = arith.constant 0 : i32
    %c0_i32_0 = arith.constant 0 : i32
    return %arg0, %c0_i32 : i32, i32
  }
}

</mosaic_0001>

<llo_original>
// kernel: stock_transformer_forward.1
$region0: #{stock_transformer_forward.1}
  #allocation0 [shape = 'u32[]', space=smem, size = 0x4, offset = 0x4, fixed_abs, tag = 'smem constant byte address 0x4 - core index']
  #allocation1 [shape = 'u32[72,128]{1,0:T(1,128)}', space=vmem, size = 0x9000, scoped, tag = 'internal scratch']
  #allocation2 [shape = 'f32[16,128]{1,0:T(8,128)}', space=vmem, size = 0x2000, scoped, tag = 'scratch operand']
  %s0 = inlined_call_operand.vmem [shape: f32[16,4], index: 0, kind: input, shape index: {}]
  %s1 = inlined_call_operand.vmem [shape: f32[8,128], index: 1, kind: input, shape index: {}]
  %s2 = inlined_call_operand.vmem [shape: bf16[4,128], index: 2, kind: input, shape index: {}]
  %s3 = inlined_call_operand.vmem [shape: f32[1,128], index: 3, kind: input, shape index: {}]
  %s4 = inlined_call_operand.vmem [shape: bf16[2,4,128,32], index: 4, kind: input, shape index: {}]
  %s5 = inlined_call_operand.vmem [shape: bf16[2,4,128,32], index: 5, kind: input, shape index: {}]
  %s6 = inlined_call_operand.vmem [shape: bf16[2,4,128,32], index: 6, kind: input, shape index: {}]
  %s7 = inlined_call_operand.vmem [shape: f32[2,4,32], index: 7, kind: input, shape index: {}]
  %s8 = inlined_call_operand.vmem [shape: f32[2,4,32], index: 8, kind: input, shape index: {}]
  %s9 = inlined_call_operand.vmem [shape: f32[2,4,32], index: 9, kind: input, shape index: {}]
  %s10 = inlined_call_operand.vmem [shape: bf16[2,4,32,128], index: 10, kind: input, shape index: {}]
  %s11 = inlined_call_operand.vmem [shape: f32[2,6,128], index: 11, kind: input, shape index: {}]
  %s12 = inlined_call_operand.vmem [shape: bf16[2,128,256], index: 12, kind: input, shape index: {}]
  %s13 = inlined_call_operand.vmem [shape: f32[2,1,256], index: 13, kind: input, shape index: {}]
  %s14 = inlined_call_operand.vmem [shape: bf16[2,256,128], index: 14, kind: input, shape index: {}]
  %s15 = inlined_call_operand.vmem [shape: bf16[128,4], index: 15, kind: input, shape index: {}]
  %s16 = inlined_call_operand.vmem [shape: f32[1,4], index: 16, kind: input, shape index: {}]
  %s17 = inlined_call_operand.vmem [shape: f32[16,4], index: 17, kind: output, shape index: {}]
  %s18 = sld [smem:[#allocation0]]
  $region109: #{stock_transformer_forward.1} parent=0
    _
  %s20 = ssub.s32 1, %s18
  %s21 = scalar_select 0, %s20, %s18
  loop: start=0, step=1, limit=4
  $region2: #{stock_transformer_forward.1} parent=0 // loop_pre_header
    _
  $region3: #{stock_transformer_forward.1} parent=0 // loop_header
    %s23 = sphi 0, %s27
    %p24 = scmp.ge.s32.totalorder %s23, 4
    %s30 = sphi 0, %s42
    %s31 = sphi 0, %s38
    %s32 = sphi 0, %s30
    %s33 = sphi 0, %s31
    %s34 = sphi 0, %s32
    %s35 = sphi 0, %s33
    %s45 = sphi 0, %s47
    %s48 = sphi 0, %s45
    %s49 = sphi 0, %s48
    %s65 = sphi 0, %s49
    %s69 = sphi 0, %s69
    %s71 = sphi 0, %s69
    %s72 = sphi 0, %s71
    %s86 = sphi 0, %s72
    %s90 = sphi 0, %s90
    %s92 = sphi 0, %s90
    %s93 = sphi 0, %s92
    %s107 = sphi 0, %s93
    %s111 = sphi 0, %s111
    %s113 = sphi 0, %s111
    %s114 = sphi 0, %s113
    %s128 = sphi 0, %s114
    %s134 = sphi 0, %s136
    %s137 = sphi 0, %s134
    %s138 = sphi 0, %s137
    %s154 = sphi 0, %s138
    %s160 = sphi 0, %s162
    %s163 = sphi 0, %s160
    %s164 = sphi 0, %s163
    %s180 = sphi 0, %s164
    %s186 = sphi 0, %s188
    %s189 = sphi 0, %s186
    %s190 = sphi 0, %s189
    %s206 = sphi 0, %s190
    %s212 = sphi 0, %s214
    %s215 = sphi 0, %s212
    %s216 = sphi 0, %s215
    %s232 = sphi 0, %s216
    %s238 = sphi 0, %s240
    %s241 = sphi 0, %s238
    %s242 = sphi 0, %s241
    %s258 = sphi 0, %s242
    %s264 = sphi 0, %s266
    %s267 = sphi 0, %s264
    %s268 = sphi 0, %s267
    %s284 = sphi 0, %s268
    %s290 = sphi 0, %s292
    %s293 = sphi 0, %s290
    %s294 = sphi 0, %s293
    %s310 = sphi 0, %s294
    %s316 = sphi 0, %s318
    %s319 = sphi 0, %s316
    %s320 = sphi 0, %s319
    %s336 = sphi 0, %s320
    %s342 = sphi 0, %s344
    %s345 = sphi 0, %s342
    %s346 = sphi 0, %s345
    %s362 = sphi 0, %s346
    %s368 = sphi 0, %s370
    %s371 = sphi 0, %s368
    %s372 = sphi 0, %s371
    %s388 = sphi 0, %s372
    %s394 = sphi 0, %s396
    %s397 = sphi 0, %s394
    %s398 = sphi 0, %s397
    %s414 = sphi 0, %s398
    %s418 = sphi 0, %s418
    %s420 = sphi 0, %s418
    %s421 = sphi 0, %s420
    %s435 = sphi 0, %s421
    %s439 = sphi 0, %s439
    %s441 = sphi 0, %s439
    %s442 = sphi 0, %s441
    %s456 = sphi 0, %s442
    %s462 = sphi 0, %s464
    %s465 = sphi 0, %s462
    %s466 = sphi 0, %s465
    %s482 = sphi 0, %s466
  $region4: #{stock_transformer_forward.1} parent=0 // loop_header_branch
    %26 = sbr.rel (%p24) target = $region8
  $region5: #{stock_transformer_forward.1} parent=0 // loop_body
    %s28 = ssub.s32 %s23, 1
    %s29 = ssub.s32 %s23, 2
    %s36 = sadd.s32 1, %s31
    %p37 = scmp.ge.s32.totalorder %s36, 2
    %s38 = scalar_select %p37, 0, %s36
    %s39 = sadd.s32 1, %s30
    %s40 = scalar_select %p37, %s39, %s30
    %p41 = scmp.ge.s32.totalorder %s40, 1
    %s42 = scalar_select %p41, 0, %s40
    %s43 = ssub.s32 %s30, %s42
    %p44 = scmp.eq.s32.totalorder %s43, 0
    %s46 = sadd.s32 %s45, 1
    %s47 = scalar_select %p44, %s45, %s46
    %p50 = pneg %p44
    %p51 = scmp.eq.s32.totalorder %s23, 1
    %p52 = por %p50, %p51
    %p53 = scmp.ne.s32.totalorder %s45, %s48
    %p54 = scmp.eq.s32.totalorder %s23, 0
    %p55 = por %p53, %p54
    %p56 = scmp.ne.s32.totalorder %s45, %s48
    %p57 = scmp.eq.s32.totalorder %s28, 1
    %p58 = por %p56, %p57
    %p59 = scmp.ne.s32.totalorder %s48, %s49
    %p60 = scmp.eq.s32.totalorder %s28, 0
    %p61 = por %p59, %p60
    %p62 = scmp.ne.s32.totalorder %s48, %s49
    %p63 = scmp.eq.s32.totalorder %s29, 1
    %p64 = por %p62, %p63
    %p66 = scmp.ne.s32.totalorder %s49, %s65
    %p67 = scmp.eq.s32.totalorder %s29, 0
    %p68 = por %p66, %p67
    %s70 = sadd.s32 %s69, 1
    %p73 = scmp.eq.s32.totalorder %s23, 1
    %p74 = scmp.ne.s32.totalorder %s69, %s71
    %p75 = scmp.eq.s32.totalorder %s23, 0
    %p76 = por %p74, %p75
    %p77 = scmp.ne.s32.totalorder %s69, %s71
    %p78 = scmp.eq.s32.totalorder %s28, 1
    %p79 = por %p77, %p78
    %p80 = scmp.ne.s32.totalorder %s71, %s72
    %p81 = scmp.eq.s32.totalorder %s28, 0
    %p82 = por %p80, %p81
    %p83 = scmp.ne.s32.totalorder %s71, %s72
    %p84 = scmp.eq.s32.totalorder %s29, 1
    %p85 = por %p83, %p84
    %p87 = scmp.ne.s32.totalorder %s72, %s86
    %p88 = scmp.eq.s32.totalorder %s29, 0
    %p89 = por %p87, %p88
    %s91 = sadd.s32 %s90, 1
    %p94 = scmp.eq.s32.totalorder %s23, 1
    %p95 = scmp.ne.s32.totalorder %s90, %s92
    %p96 = scmp.eq.s32.totalorder %s23, 0
    %p97 = por %p95, %p96
    %p98 = scmp.ne.s32.totalorder %s90, %s92
    %p99 = scmp.eq.s32.totalorder %s28, 1
    %p100 = por %p98, %p99
    %p101 = scmp.ne.s32.totalorder %s92, %s93
    %p102 = scmp.eq.s32.totalorder %s28, 0
    %p103 = por %p101, %p102
    %p104 = scmp.ne.s32.totalorder %s92, %s93
    %p105 = scmp.eq.s32.totalorder %s29, 1
    %p106 = por %p104, %p105
    %p108 = scmp.ne.s32.totalorder %s93, %s107
    %p109 = scmp.eq.s32.totalorder %s29, 0
    %p110 = por %p108, %p109
    %s112 = sadd.s32 %s111, 1
    %p115 = scmp.eq.s32.totalorder %s23, 1
    %p116 = scmp.ne.s32.totalorder %s111, %s113
    %p117 = scmp.eq.s32.totalorder %s23, 0
    %p118 = por %p116, %p117
    %p119 = scmp.ne.s32.totalorder %s111, %s113
    %p120 = scmp.eq.s32.totalorder %s28, 1
    %p121 = por %p119, %p120
    %p122 = scmp.ne.s32.totalorder %s113, %s114
    %p123 = scmp.eq.s32.totalorder %s28, 0
    %p124 = por %p122, %p123
    %p125 = scmp.ne.s32.totalorder %s113, %s114
    %p126 = scmp.eq.s32.totalorder %s29, 1
    %p127 = por %p125, %p126
    %p129 = scmp.ne.s32.totalorder %s114, %s128
    %p130 = scmp.eq.s32.totalorder %s29, 0
    %p131 = por %p129, %p130
    %s132 = ssub.s32 %s31, %s38
    %p133 = scmp.eq.s32.totalorder %s132, 0
    %s135 = sadd.s32 %s134, 1
    %s136 = scalar_select %p133, %s134, %s135
    %p139 = pneg %p133
    %p140 = scmp.eq.s32.totalorder %s23, 1
    %p141 = por %p139, %p140
    %p142 = scmp.ne.s32.totalorder %s134, %s137
    %p143 = scmp.eq.s32.totalorder %s23, 0
    %p144 = por %p142, %p143
    %p145 = scmp.ne.s32.totalorder %s134, %s137
    %p146 = scmp.eq.s32.totalorder %s28, 1
    %p147 = por %p145, %p146
    %p148 = scmp.ne.s32.totalorder %s137, %s138
    %p149 = scmp.eq.s32.totalorder %s28, 0
    %p150 = por %p148, %p149
    %p151 = scmp.ne.s32.totalorder %s137, %s138
    %p152 = scmp.eq.s32.totalorder %s29, 1
    %p153 = por %p151, %p152
    %p155 = scmp.ne.s32.totalorder %s138, %s154
    %p156 = scmp.eq.s32.totalorder %s29, 0
    %p157 = por %p155, %p156
    %s158 = ssub.s32 %s31, %s38
    %p159 = scmp.eq.s32.totalorder %s158, 0
    %s161 = sadd.s32 %s160, 1
    %s162 = scalar_select %p159, %s160, %s161
    %p165 = pneg %p159
    %p166 = scmp.eq.s32.totalorder %s23, 1
    %p167 = por %p165, %p166
    %p168 = scmp.ne.s32.totalorder %s160, %s163
    %p169 = scmp.eq.s32.totalorder %s23, 0
    %p170 = por %p168, %p169
    %p171 = scmp.ne.s32.totalorder %s160, %s163
    %p172 = scmp.eq.s32.totalorder %s28, 1
    %p173 = por %p171, %p172
    %p174 = scmp.ne.s32.totalorder %s163, %s164
    %p175 = scmp.eq.s32.totalorder %s28, 0
    %p176 = por %p174, %p175
    %p177 = scmp.ne.s32.totalorder %s163, %s164
    %p178 = scmp.eq.s32.totalorder %s29, 1
    %p179 = por %p177, %p178
    %p181 = scmp.ne.s32.totalorder %s164, %s180
    %p182 = scmp.eq.s32.totalorder %s29, 0
    %p183 = por %p181, %p182
    %s184 = ssub.s32 %s31, %s38
    %p185 = scmp.eq.s32.totalorder %s184, 0
    %s187 = sadd.s32 %s186, 1
    %s188 = scalar_select %p185, %s186, %s187
    %p191 = pneg %p185
    %p192 = scmp.eq.s32.totalorder %s23, 1
    %p193 = por %p191, %p192
    %p194 = scmp.ne.s32.totalorder %s186, %s189
    %p195 = scmp.eq.s32.totalorder %s23, 0
    %p196 = por %p194, %p195
    %p197 = scmp.ne.s32.totalorder %s186, %s189
    %p198 = scmp.eq.s32.totalorder %s28, 1
    %p199 = por %p197, %p198
    %p200 = scmp.ne.s32.totalorder %s189, %s190
    %p201 = scmp.eq.s32.totalorder %s28, 0
    %p202 = por %p200, %p201
    %p203 = scmp.ne.s32.totalorder %s189, %s190
    %p204 = scmp.eq.s32.totalorder %s29, 1
    %p205 = por %p203, %p204
    %p207 = scmp.ne.s32.totalorder %s190, %s206
    %p208 = scmp.eq.s32.totalorder %s29, 0
    %p209 = por %p207, %p208
    %s210 = ssub.s32 %s31, %s38
    %p211 = scmp.eq.s32.totalorder %s210, 0
    %s213 = sadd.s32 %s212, 1
    %s214 = scalar_select %p211, %s212, %s213
    %p217 = pneg %p211
    %p218 = scmp.eq.s32.totalorder %s23, 1
    %p219 = por %p217, %p218
    %p220 = scmp.ne.s32.totalorder %s212, %s215
    %p221 = scmp.eq.s32.totalorder %s23, 0
    %p222 = por %p220, %p221
    %p223 = scmp.ne.s32.totalorder %s212, %s215
    %p224 = scmp.eq.s32.totalorder %s28, 1
    %p225 = por %p223, %p224
    %p226 = scmp.ne.s32.totalorder %s215, %s216
    %p227 = scmp.eq.s32.totalorder %s28, 0
    %p228 = por %p226, %p227
    %p229 = scmp.ne.s32.totalorder %s215, %s216
    %p230 = scmp.eq.s32.totalorder %s29, 1
    %p231 = por %p229, %p230
    %p233 = scmp.ne.s32.totalorder %s216, %s232
    %p234 = scmp.eq.s32.totalorder %s29, 0
    %p235 = por %p233, %p234
    %s236 = ssub.s32 %s31, %s38
    %p237 = scmp.eq.s32.totalorder %s236, 0
    %s239 = sadd.s32 %s238, 1
    %s240 = scalar_select %p237, %s238, %s239
    %p243 = pneg %p237
    %p244 = scmp.eq.s32.totalorder %s23, 1
    %p245 = por %p243, %p244
    %p246 = scmp.ne.s32.totalorder %s238, %s241
    %p247 = scmp.eq.s32.totalorder %s23, 0
    %p248 = por %p246, %p247
    %p249 = scmp.ne.s32.totalorder %s238, %s241
    %p250 = scmp.eq.s32.totalorder %s28, 1
    %p251 = por %p249, %p250
    %p252 = scmp.ne.s32.totalorder %s241, %s242
    %p253 = scmp.eq.s32.totalorder %s28, 0
    %p254 = por %p252, %p253
    %p255 = scmp.ne.s32.totalorder %s241, %s242
    %p256 = scmp.eq.s32.totalorder %s29, 1
    %p257 = por %p255, %p256
    %p259 = scmp.ne.s32.totalorder %s242, %s258
    %p260 = scmp.eq.s32.totalorder %s29, 0
    %p261 = por %p259, %p260
    %s262 = ssub.s32 %s31, %s38
    %p263 = scmp.eq.s32.totalorder %s262, 0
    %s265 = sadd.s32 %s264, 1
    %s266 = scalar_select %p263, %s264, %s265
    %p269 = pneg %p263
    %p270 = scmp.eq.s32.totalorder %s23, 1
    %p271 = por %p269, %p270
    %p272 = scmp.ne.s32.totalorder %s264, %s267
    %p273 = scmp.eq.s32.totalorder %s23, 0
    %p274 = por %p272, %p273
    %p275 = scmp.ne.s32.totalorder %s264, %s267
    %p276 = scmp.eq.s32.totalorder %s28, 1
    %p277 = por %p275, %p276
    %p278 = scmp.ne.s32.totalorder %s267, %s268
    %p279 = scmp.eq.s32.totalorder %s28, 0
    %p280 = por %p278, %p279
    %p281 = scmp.ne.s32.totalorder %s267, %s268
    %p282 = scmp.eq.s32.totalorder %s29, 1
    %p283 = por %p281, %p282
    %p285 = scmp.ne.s32.totalorder %s268, %s284
    %p286 = scmp.eq.s32.totalorder %s29, 0
    %p287 = por %p285, %p286
    %s288 = ssub.s32 %s31, %s38
    %p289 = scmp.eq.s32.totalorder %s288, 0
    %s291 = sadd.s32 %s290, 1
    %s292 = scalar_select %p289, %s290, %s291
    %p295 = pneg %p289
    %p296 = scmp.eq.s32.totalorder %s23, 1
    %p297 = por %p295, %p296
    %p298 = scmp.ne.s32.totalorder %s290, %s293
    %p299 = scmp.eq.s32.totalorder %s23, 0
    %p300 = por %p298, %p299
    %p301 = scmp.ne.s32.totalorder %s290, %s293
    %p302 = scmp.eq.s32.totalorder %s28, 1
    %p303 = por %p301, %p302
    %p304 = scmp.ne.s32.totalorder %s293, %s294
    %p305 = scmp.eq.s32.totalorder %s28, 0
    %p306 = por %p304, %p305
    %p307 = scmp.ne.s32.totalorder %s293, %s294
    %p308 = scmp.eq.s32.totalorder %s29, 1
    %p309 = por %p307, %p308
    %p311 = scmp.ne.s32.totalorder %s294, %s310
    %p312 = scmp.eq.s32.totalorder %s29, 0
    %p313 = por %p311, %p312
    %s314 = ssub.s32 %s31, %s38
    %p315 = scmp.eq.s32.totalorder %s314, 0
    %s317 = sadd.s32 %s316, 1
    %s318 = scalar_select %p315, %s316, %s317
    %p321 = pneg %p315
    %p322 = scmp.eq.s32.totalorder %s23, 1
    %p323 = por %p321, %p322
    %p324 = scmp.ne.s32.totalorder %s316, %s319
    %p325 = scmp.eq.s32.totalorder %s23, 0
    %p326 = por %p324, %p325
    %p327 = scmp.ne.s32.totalorder %s316, %s319
    %p328 = scmp.eq.s32.totalorder %s28, 1
    %p329 = por %p327, %p328
    %p330 = scmp.ne.s32.totalorder %s319, %s320
    %p331 = scmp.eq.s32.totalorder %s28, 0
    %p332 = por %p330, %p331
    %p333 = scmp.ne.s32.totalorder %s319, %s320
    %p334 = scmp.eq.s32.totalorder %s29, 1
    %p335 = por %p333, %p334
    %p337 = scmp.ne.s32.totalorder %s320, %s336
    %p338 = scmp.eq.s32.totalorder %s29, 0
    %p339 = por %p337, %p338
    %s340 = ssub.s32 %s31, %s38
    %p341 = scmp.eq.s32.totalorder %s340, 0
    %s343 = sadd.s32 %s342, 1
    %s344 = scalar_select %p341, %s342, %s343
    %p347 = pneg %p341
    %p348 = scmp.eq.s32.totalorder %s23, 1
    %p349 = por %p347, %p348
    %p350 = scmp.ne.s32.totalorder %s342, %s345
    %p351 = scmp.eq.s32.totalorder %s23, 0
    %p352 = por %p350, %p351
    %p353 = scmp.ne.s32.totalorder %s342, %s345
    %p354 = scmp.eq.s32.totalorder %s28, 1
    %p355 = por %p353, %p354
    %p356 = scmp.ne.s32.totalorder %s345, %s346
    %p357 = scmp.eq.s32.totalorder %s28, 0
    %p358 = por %p356, %p357
    %p359 = scmp.ne.s32.totalorder %s345, %s346
    %p360 = scmp.eq.s32.totalorder %s29, 1
    %p361 = por %p359, %p360
    %p363 = scmp.ne.s32.totalorder %s346, %s362
    %p364 = scmp.eq.s32.totalorder %s29, 0
    %p365 = por %p363, %p364
    %s366 = ssub.s32 %s31, %s38
    %p367 = scmp.eq.s32.totalorder %s366, 0
    %s369 = sadd.s32 %s368, 1
    %s370 = scalar_select %p367, %s368, %s369
    %p373 = pneg %p367
    %p374 = scmp.eq.s32.totalorder %s23, 1
    %p375 = por %p373, %p374
    %p376 = scmp.ne.s32.totalorder %s368, %s371
    %p377 = scmp.eq.s32.totalorder %s23, 0
    %p378 = por %p376, %p377
    %p379 = scmp.ne.s32.totalorder %s368, %s371
    %p380 = scmp.eq.s32.totalorder %s28, 1
    %p381 = por %p379, %p380
    %p382 = scmp.ne.s32.totalorder %s371, %s372
    %p383 = scmp.eq.s32.totalorder %s28, 0
    %p384 = por %p382, %p383
    %p385 = scmp.ne.s32.totalorder %s371, %s372
    %p386 = scmp.eq.s32.totalorder %s29, 1
    %p387 = por %p385, %p386
    %p389 = scmp.ne.s32.totalorder %s372, %s388
    %p390 = scmp.eq.s32.totalorder %s29, 0
    %p391 = por %p389, %p390
    %s392 = ssub.s32 %s31, %s38
    %p393 = scmp.eq.s32.totalorder %s392, 0
    %s395 = sadd.s32 %s394, 1
    %s396 = scalar_select %p393, %s394, %s395
    %p399 = pneg %p393
    %p400 = scmp.eq.s32.totalorder %s23, 1
    %p401 = por %p399, %p400
    %p402 = scmp.ne.s32.totalorder %s394, %s397
    %p403 = scmp.eq.s32.totalorder %s23, 0
    %p404 = por %p402, %p403
    %p405 = scmp.ne.s32.totalorder %s394, %s397
    %p406 = scmp.eq.s32.totalorder %s28, 1
    %p407 = por %p405, %p406
    %p408 = scmp.ne.s32.totalorder %s397, %s398
    %p409 = scmp.eq.s32.totalorder %s28, 0
    %p410 = por %p408, %p409
    %p411 = scmp.ne.s32.totalorder %s397, %s398
    %p412 = scmp.eq.s32.totalorder %s29, 1
    %p413 = por %p411, %p412
    %p415 = scmp.ne.s32.totalorder %s398, %s414
    %p416 = scmp.eq.s32.totalorder %s29, 0
    %p417 = por %p415, %p416
    %s419 = sadd.s32 %s418, 1
    %p422 = scmp.eq.s32.totalorder %s23, 1
    %p423 = scmp.ne.s32.totalorder %s418, %s420
    %p424 = scmp.eq.s32.totalorder %s23, 0
    %p425 = por %p423, %p424
    %p426 = scmp.ne.s32.totalorder %s418, %s420
    %p427 = scmp.eq.s32.totalorder %s28, 1
    %p428 = por %p426, %p427
    %p429 = scmp.ne.s32.totalorder %s420, %s421
    %p430 = scmp.eq.s32.totalorder %s28, 0
    %p431 = por %p429, %p430
    %p432 = scmp.ne.s32.totalorder %s420, %s421
    %p433 = scmp.eq.s32.totalorder %s29, 1
    %p434 = por %p432, %p433
    %p436 = scmp.ne.s32.totalorder %s421, %s435
    %p437 = scmp.eq.s32.totalorder %s29, 0
    %p438 = por %p436, %p437
    %s440 = sadd.s32 %s439, 1
    %p443 = scmp.eq.s32.totalorder %s23, 1
    %p444 = scmp.ne.s32.totalorder %s439, %s441
    %p445 = scmp.eq.s32.totalorder %s23, 0
    %p446 = por %p444, %p445
    %p447 = scmp.ne.s32.totalorder %s439, %s441
    %p448 = scmp.eq.s32.totalorder %s28, 1
    %p449 = por %p447, %p448
    %p450 = scmp.ne.s32.totalorder %s441, %s442
    %p451 = scmp.eq.s32.totalorder %s28, 0
    %p452 = por %p450, %p451
    %p453 = scmp.ne.s32.totalorder %s441, %s442
    %p454 = scmp.eq.s32.totalorder %s29, 1
    %p455 = por %p453, %p454
    %p457 = scmp.ne.s32.totalorder %s442, %s456
    %p458 = scmp.eq.s32.totalorder %s29, 0
    %p459 = por %p457, %p458
    %s460 = ssub.s32 %s30, %s42
    %p461 = scmp.eq.s32.totalorder %s460, 0
    %s463 = sadd.s32 %s462, 1
    %s464 = scalar_select %p461, %s462, %s463
    %p467 = pneg %p461
    %p468 = scmp.eq.s32.totalorder %s23, 1
    %p469 = por %p467, %p468
    %p470 = scmp.ne.s32.totalorder %s462, %s465
    %p471 = scmp.eq.s32.totalorder %s23, 0
    %p472 = por %p470, %p471
    %p473 = scmp.ne.s32.totalorder %s462, %s465
    %p474 = scmp.eq.s32.totalorder %s28, 1
    %p475 = por %p473, %p474
    %p476 = scmp.ne.s32.totalorder %s465, %s466
    %p477 = scmp.eq.s32.totalorder %s28, 0
    %p478 = por %p476, %p477
    %p479 = scmp.ne.s32.totalorder %s465, %s466
    %p480 = scmp.eq.s32.totalorder %s29, 1
    %p481 = por %p479, %p480
    %p483 = scmp.ne.s32.totalorder %s466, %s482
    %p484 = scmp.eq.s32.totalorder %s29, 0
    %p485 = por %p483, %p484
    %p486 = scmp.le.s32.totalorder 1, %s23
    %p487 = scmp.lt.s32.totalorder %s23, 3
    %p488 = pnand %p486, %p487
    %p489 = pneg %p488
    // Predicated region
    $region9: #{stock_transformer_forward.1} parent=5 // pred_check
      _
    $region10: #{stock_transformer_forward.1} parent=5 // pred_check_branch
      %491 = sbr.rel (%p488) target = $region12
    $region11: #{stock_transformer_forward.1} parent=5 // pred_region
      %s492 = ssub.s32 %s23, 1
      // Predicated region
      $region13: #{stock_transformer_forward.1} parent=11 // pred_check
        %p493 = pneg %p61
      $region14: #{stock_transformer_forward.1} parent=11 // pred_check_branch
        %495 = sbr.rel (%p493) target = $region16
      $region15: #{stock_transformer_forward.1} parent=11 // pred_region
        %s496 = smul.u32 2, %s32
        %p497 = scmp.lt.s32.totalorder %s496, 1
        %s498 = scalar_select %p497, %s496, 1
        %s499 = smul.addr %s498, 8
        %s500 = scalar_lea.vmem %s0, %s499
        %s501 = smul.u32 2, %s32
      $region16: #{stock_transformer_forward.1} parent=11 // pred_fallthru
        _
      // Predicated region
      $region17: #{stock_transformer_forward.1} parent=11 // pred_check
        %p502 = pneg %p82
      $region18: #{stock_transformer_forward.1} parent=11 // pred_check_branch
        %504 = sbr.rel (%p502) target = $region20
      $region19: #{stock_transformer_forward.1} parent=11 // pred_region
        _
      $region20: #{stock_transformer_forward.1} parent=11 // pred_fallthru
        _
      // Predicated region
      $region21: #{stock_transformer_forward.1} parent=11 // pred_check
        %p505 = pneg %p103
      $region22: #{stock_transformer_forward.1} parent=11 // pred_check_branch
        %507 = sbr.rel (%p505) target = $region24
      $region23: #{stock_transformer_forward.1} parent=11 // pred_region
        _
      $region24: #{stock_transformer_forward.1} parent=11 // pred_fallthru
        _
      // Predicated region
      $region25: #{stock_transformer_forward.1} parent=11 // pred_check
        %p508 = pneg %p124
      $region26: #{stock_transformer_forward.1} parent=11 // pred_check_branch
        %510 = sbr.rel (%p508) target = $region28
      $region27: #{stock_transformer_forward.1} parent=11 // pred_region
        _
      $region28: #{stock_transformer_forward.1} parent=11 // pred_fallthru
        _
      // Predicated region
      $region29: #{stock_transformer_forward.1} parent=11 // pred_check
        %p511 = pneg %p431
      $region30: #{stock_transformer_forward.1} parent=11 // pred_check_branch
        %513 = sbr.rel (%p511) target = $region32
      $region31: #{stock_transformer_forward.1} parent=11 // pred_region
        _
      $region32: #{stock_transformer_forward.1} parent=11 // pred_fallthru
        _
      // Predicated region
      $region33: #{stock_transformer_forward.1} parent=11 // pred_check
        %p514 = pneg %p452
      $region34: #{stock_transformer_forward.1} parent=11 // pred_check_branch
        %516 = sbr.rel (%p514) target = $region36
      $region35: #{stock_transformer_forward.1} parent=11 // pred_region
        _
      $region36: #{stock_transformer_forward.1} parent=11 // pred_fallthru
        _
    $region12: #{stock_transformer_forward.1} parent=5 // pred_fallthru
      _
    %p517 = scmp.lt.s32.totalorder %s23, 2
    // Predicated region
    $region37: #{stock_transformer_forward.1} parent=5 // pred_check
      %p518 = pneg %p517
    $region38: #{stock_transformer_forward.1} parent=5 // pred_check_branch
      %520 = sbr.rel (%p518) target = $region40
    $region39: #{stock_transformer_forward.1} parent=5 // pred_region
      // Predicated region
      $region41: #{stock_transformer_forward.1} parent=39 // pred_check
        %p521 = pneg %p144
      $region42: #{stock_transformer_forward.1} parent=39 // pred_check_branch
        %523 = sbr.rel (%p521) target = $region44
      $region43: #{stock_transformer_forward.1} parent=39 // pred_region
        %p524 = scmp.lt.s32.totalorder %s31, 1
        %s525 = scalar_select %p524, %s31, 1
        %s526 = smul.addr %s525, 64
        %s527 = smul.addr %s526, 4
        %s528 = scalar_lea.vmem %s4, %s527
      $region44: #{stock_transformer_forward.1} parent=39 // pred_fallthru
        _
      // Predicated region
      $region45: #{stock_transformer_forward.1} parent=39 // pred_check
        %p529 = pneg %p170
      $region46: #{stock_transformer_forward.1} parent=39 // pred_check_branch
        %531 = sbr.rel (%p529) target = $region48
      $region47: #{stock_transformer_forward.1} parent=39 // pred_region
        %p532 = scmp.lt.s32.totalorder %s31, 1
        %s533 = scalar_select %p532, %s31, 1
        %s534 = smul.addr %s533, 64
        %s535 = smul.addr %s534, 4
        %s536 = scalar_lea.vmem %s5, %s535
      $region48: #{stock_transformer_forward.1} parent=39 // pred_fallthru
        _
      // Predicated region
      $region49: #{stock_transformer_forward.1} parent=39 // pred_check
        %p537 = pneg %p196
      $region50: #{stock_transformer_forward.1} parent=39 // pred_check_branch
        %539 = sbr.rel (%p537) target = $region52
      $region51: #{stock_transformer_forward.1} parent=39 // pred_region
        %p540 = scmp.lt.s32.totalorder %s31, 1
        %s541 = scalar_select %p540, %s31, 1
        %s542 = smul.addr %s541, 64
        %s543 = smul.addr %s542, 4
        %s544 = scalar_lea.vmem %s6, %s543
      $region52: #{stock_transformer_forward.1} parent=39 // pred_fallthru
        _
      // Predicated region
      $region53: #{stock_transformer_forward.1} parent=39 // pred_check
        %p545 = pneg %p222
      $region54: #{stock_transformer_forward.1} parent=39 // pred_check_branch
        %547 = sbr.rel (%p545) target = $region56
      $region55: #{stock_transformer_forward.1} parent=39 // pred_region
        %p548 = scmp.lt.s32.totalorder %s31, 1
        %s549 = scalar_select %p548, %s31, 1
        %s550 = smul.addr %s549, 4
        %s551 = scalar_lea.vmem %s7, %s550
      $region56: #{stock_transformer_forward.1} parent=39 // pred_fallthru
        _
      // Predicated region
      $region57: #{stock_transformer_forward.1} parent=39 // pred_check
        %p552 = pneg %p248
      $region58: #{stock_transformer_forward.1} parent=39 // pred_check_branch
        %554 = sbr.rel (%p552) target = $region60
      $region59: #{stock_transformer_forward.1} parent=39 // pred_region
        %p555 = scmp.lt.s32.totalorder %s31, 1
        %s556 = scalar_select %p555, %s31, 1
        %s557 = smul.addr %s556, 4
        %s558 = scalar_lea.vmem %s8, %s557
      $region60: #{stock_transformer_forward.1} parent=39 // pred_fallthru
        _
      // Predicated region
      $region61: #{stock_transformer_forward.1} parent=39 // pred_check
        %p559 = pneg %p274
      $region62: #{stock_transformer_forward.1} parent=39 // pred_check_branch
        %561 = sbr.rel (%p559) target = $region64
      $region63: #{stock_transformer_forward.1} parent=39 // pred_region
        %p562 = scmp.lt.s32.totalorder %s31, 1
        %s563 = scalar_select %p562, %s31, 1
        %s564 = smul.addr %s563, 4
        %s565 = scalar_lea.vmem %s9, %s564
      $region64: #{stock_transformer_forward.1} parent=39 // pred_fallthru
        _
      // Predicated region
      $region65: #{stock_transformer_forward.1} parent=39 // pred_check
        %p566 = pneg %p300
      $region66: #{stock_transformer_forward.1} parent=39 // pred_check_branch
        %568 = sbr.rel (%p566) target = $region68
      $region67: #{stock_transformer_forward.1} parent=39 // pred_region
        %p569 = scmp.lt.s32.totalorder %s31, 1
        %s570 = scalar_select %p569, %s31, 1
        %s571 = smul.addr %s570, 16
        %s572 = smul.addr %s571, 4
        %s573 = scalar_lea.vmem %s10, %s572
      $region68: #{stock_transformer_forward.1} parent=39 // pred_fallthru
        _
      // Predicated region
      $region69: #{stock_transformer_forward.1} parent=39 // pred_check
        %p574 = pneg %p326
      $region70: #{stock_transformer_forward.1} parent=39 // pred_check_branch
        %576 = sbr.rel (%p574) target = $region72
      $region71: #{stock_transformer_forward.1} parent=39 // pred_region
        %p577 = scmp.lt.s32.totalorder %s31, 1
        %s578 = scalar_select %p577, %s31, 1
        %s579 = smul.addr %s578, 8
        %s580 = scalar_lea.vmem %s11, %s579
      $region72: #{stock_transformer_forward.1} parent=39 // pred_fallthru
        _
      // Predicated region
      $region73: #{stock_transformer_forward.1} parent=39 // pred_check
        %p581 = pneg %p352
      $region74: #{stock_transformer_forward.1} parent=39 // pred_check_branch
        %583 = sbr.rel (%p581) target = $region76
      $region75: #{stock_transformer_forward.1} parent=39 // pred_region
        %p584 = scmp.lt.s32.totalorder %s31, 1
        %s585 = scalar_select %p584, %s31, 1
        %s586 = smul.addr %s585, 32
        %s587 = smul.addr %s586, 4
        %s588 = scalar_lea.vmem %s12, %s587
      $region76: #{stock_transformer_forward.1} parent=39 // pred_fallthru
        _
      // Predicated region
      $region77: #{stock_transformer_forward.1} parent=39 // pred_check
        %p589 = pneg %p378
      $region78: #{stock_transformer_forward.1} parent=39 // pred_check_branch
        %591 = sbr.rel (%p589) target = $region80
      $region79: #{stock_transformer_forward.1} parent=39 // pred_region
        %p592 = scmp.lt.s32.totalorder %s31, 1
        %s593 = scalar_select %p592, %s31, 1
        %s594 = smul.addr %s593, 2
        %s595 = scalar_lea.vmem %s13, %s594
      $region80: #{stock_transformer_forward.1} parent=39 // pred_fallthru
        _
      // Predicated region
      $region81: #{stock_transformer_forward.1} parent=39 // pred_check
        %p596 = pneg %p404
      $region82: #{stock_transformer_forward.1} parent=39 // pred_check_branch
        %598 = sbr.rel (%p596) target = $region84
      $region83: #{stock_transformer_forward.1} parent=39 // pred_region
        %p599 = scmp.lt.s32.totalorder %s31, 1
        %s600 = scalar_select %p599, %s31, 1
        %s601 = smul.addr %s600, 32
        %s602 = smul.addr %s601, 4
        %s603 = scalar_lea.vmem %s14, %s602
      $region84: #{stock_transformer_forward.1} parent=39 // pred_fallthru
        _
    $region40: #{stock_transformer_forward.1} parent=5 // pred_fallthru
      _
    %p604 = scmp.le.s32.totalorder 1, %s23
    %p605 = scmp.lt.s32.totalorder %s23, 3
    %p606 = pnand %p604, %p605
    %p607 = pneg %p606
    // Predicated region
    $region85: #{stock_transformer_forward.1} parent=5 // pred_check
      _
    $region86: #{stock_transformer_forward.1} parent=5 // pred_check_branch
      %609 = sbr.rel (%p606) target = $region88
    $region87: #{stock_transformer_forward.1} parent=5 // pred_region
      %s610 = ssub.s32 %s23, 1
      %s611 = smul.u32 2, %s32
      %p612 = scmp.lt.s32.totalorder %s611, 1
      %s613 = scalar_select %p612, %s611, 1
      %s614 = smul.addr %s613, 8
      %s615 = scalar_lea.vmem %s0, %s614
      %p616 = pneg %p61
      %p617 = pneg %p58
      %p618 = pneg %p82
      %p619 = pneg %p79
      %p620 = pneg %p103
      %p621 = pneg %p100
      %p622 = pneg %p124
      %p623 = pneg %p121
      %p624 = scmp.lt.s32.totalorder %s33, 1
      %s625 = scalar_select %p624, %s33, 1
      %s626 = smul.addr %s625, 64
      %s627 = smul.addr %s626, 4
      %s628 = scalar_lea.vmem %s4, %s627
      %p629 = pneg %p150
      %p630 = pneg %p147
      %p631 = scmp.lt.s32.totalorder %s33, 1
      %s632 = scalar_select %p631, %s33, 1
      %s633 = smul.addr %s632, 64
      %s634 = smul.addr %s633, 4
      %s635 = scalar_lea.vmem %s5, %s634
      %p636 = pneg %p176
      %p637 = pneg %p173
      %p638 = scmp.lt.s32.totalorder %s33, 1
      %s639 = scalar_select %p638, %s33, 1
      %s640 = smul.addr %s639, 64
      %s641 = smul.addr %s640, 4
      %s642 = scalar_lea.vmem %s6, %s641
      %p643 = pneg %p202
      %p644 = pneg %p199
      %p645 = scmp.lt.s32.totalorder %s33, 1
      %s646 = scalar_select %p645, %s33, 1
      %s647 = smul.addr %s646, 4
      %s648 = scalar_lea.vmem %s7, %s647
      %p649 = pneg %p228
      %p650 = pneg %p225
      %p651 = scmp.lt.s32.totalorder %s33, 1
      %s652 = scalar_select %p651, %s33, 1
      %s653 = smul.addr %s652, 4
      %s654 = scalar_lea.vmem %s8, %s653
      %p655 = pneg %p254
      %p656 = pneg %p251
      %p657 = scmp.lt.s32.totalorder %s33, 1
      %s658 = scalar_select %p657, %s33, 1
      %s659 = smul.addr %s658, 4
      %s660 = scalar_lea.vmem %s9, %s659
      %p661 = pneg %p280
      %p662 = pneg %p277
      %p663 = scmp.lt.s32.totalorder %s33, 1
      %s664 = scalar_select %p663, %s33, 1
      %s665 = smul.addr %s664, 16
      %s666 = smul.addr %s665, 4
      %s667 = scalar_lea.vmem %s10, %s666
      %p668 = pneg %p306
      %p669 = pneg %p303
      %p670 = scmp.lt.s32.totalorder %s33, 1
      %s671 = scalar_select %p670, %s33, 1
      %s672 = smul.addr %s671, 8
      %s673 = scalar_lea.vmem %s11, %s672
      %p674 = pneg %p332
      %p675 = pneg %p329
      %p676 = scmp.lt.s32.totalorder %s33, 1
      %s677 = scalar_select %p676, %s33, 1
      %s678 = smul.addr %s677, 32
      %s679 = smul.addr %s678, 4
      %s680 = scalar_lea.vmem %s12, %s679
      %p681 = pneg %p358
      %p682 = pneg %p355
      %p683 = scmp.lt.s32.totalorder %s33, 1
      %s684 = scalar_select %p683, %s33, 1
      %s685 = smul.addr %s684, 2
      %s686 = scalar_lea.vmem %s13, %s685
      %p687 = pneg %p384
      %p688 = pneg %p381
      %p689 = scmp.lt.s32.totalorder %s33, 1
      %s690 = scalar_select %p689, %s33, 1
      %s691 = smul.addr %s690, 32
      %s692 = smul.addr %s691, 4
      %s693 = scalar_lea.vmem %s14, %s692
      %p694 = pneg %p410
      %p695 = pneg %p407
      %p696 = pneg %p431
      %p697 = pneg %p428
      %p698 = pneg %p452
      %p699 = pneg %p449
      %p700 = pneg %p478
      %p701 = pneg %p475
      %s702 = smul.u32 2, %s32
      %p703 = scmp.lt.s32.totalorder %s702, 1
      %s704 = scalar_select %p703, %s702, 1
      %s705 = smul.addr %s704, 8
      %s706 = scalar_lea.vmem %s17, %s705
      %s707 = smul.u32 2, %s32
      %p708 = scmp.lt.s32.totalorder %s707, 1
      %s709 = scalar_select %p708, %s707, 1
      %s710 = smul.addr %s709, 8
      %s711 = scalar_lea.vmem %s0, %s710
      %s712 = smul.u32 2, %s32
      %p713 = scmp.lt.s32.totalorder %s33, 1
      %s714 = scalar_select %p713, %s33, 1
      %s715 = smul.addr %s714, 64
      %s716 = smul.addr %s715, 4
      %s717 = scalar_lea.vmem %s4, %s716
      %p718 = scmp.lt.s32.totalorder %s33, 1
      %s719 = scalar_select %p718, %s33, 1
      %s720 = smul.addr %s719, 64
      %s721 = smul.addr %s720, 4
      %s722 = scalar_lea.vmem %s5, %s721
      %p723 = scmp.lt.s32.totalorder %s33, 1
      %s724 = scalar_select %p723, %s33, 1
      %s725 = smul.addr %s724, 64
      %s726 = smul.addr %s725, 4
      %s727 = scalar_lea.vmem %s6, %s726
      %p728 = scmp.lt.s32.totalorder %s33, 1
      %s729 = scalar_select %p728, %s33, 1
      %s730 = smul.addr %s729, 4
      %s731 = scalar_lea.vmem %s7, %s730
      %p732 = scmp.lt.s32.totalorder %s33, 1
      %s733 = scalar_select %p732, %s33, 1
      %s734 = smul.addr %s733, 4
      %s735 = scalar_lea.vmem %s8, %s734
      %p736 = scmp.lt.s32.totalorder %s33, 1
      %s737 = scalar_select %p736, %s33, 1
      %s738 = smul.addr %s737, 4
      %s739 = scalar_lea.vmem %s9, %s738
      %p740 = scmp.lt.s32.totalorder %s33, 1
      %s741 = scalar_select %p740, %s33, 1
      %s742 = smul.addr %s741, 16
      %s743 = smul.addr %s742, 4
      %s744 = scalar_lea.vmem %s10, %s743
      %p745 = scmp.lt.s32.totalorder %s33, 1
      %s746 = scalar_select %p745, %s33, 1
      %s747 = smul.addr %s746, 8
      %s748 = scalar_lea.vmem %s11, %s747
      %p749 = scmp.lt.s32.totalorder %s33, 1
      %s750 = scalar_select %p749, %s33, 1
      %s751 = smul.addr %s750, 32
      %s752 = smul.addr %s751, 4
      %s753 = scalar_lea.vmem %s12, %s752
      %p754 = scmp.lt.s32.totalorder %s33, 1
      %s755 = scalar_select %p754, %s33, 1
      %s756 = smul.addr %s755, 2
      %s757 = scalar_lea.vmem %s13, %s756
      %p758 = scmp.lt.s32.totalorder %s33, 1
      %s759 = scalar_select %p758, %s33, 1
      %s760 = smul.addr %s759, 32
      %s761 = smul.addr %s760, 4
      %s762 = scalar_lea.vmem %s14, %s761
      %s763 = smul.u32 2, %s32
      %p764 = scmp.lt.s32.totalorder %s763, 1
      %s765 = scalar_select %p764, %s763, 1
      %s766 = smul.addr %s765, 8
      %s767 = scalar_lea.vmem %s17, %s766
      %s768 = smul.u32 2, %s32
      %p770 = scmp.eq.s32.totalorder %s33, 0
      // Predicated region
      $region89: #{stock_transformer_forward.1} parent=87 // pred_check
        %p771 = pneg %p770
      $region90: #{stock_transformer_forward.1} parent=87 // pred_check_branch
        %773 = sbr.rel (%p771) target = $region92
      $region91: #{stock_transformer_forward.1} parent=87 // pred_region
        %v774 = vld [vmem:[%s711] sm:$0xff]
        %v775 = vld [vmem:[%s711 + $0x8] sm:$0xff]
        %v776 = vpack.c.bf16 %v775, %v774
        %v777 = vld [vmem:[%s2] sm:$0x3]
        %v778 = vld [vmem:[%s3] sm:$0x1]
        %v780 = vperm.slane %v778, 0
        %vm782 = vcmask 31744
        %v784 = vsel %vm782, %v776, 0
        %vm786 = vcmask 1041408
        %v788 = vsel %vm786, %v777, 0
        %790 = vmatpush.bf16.msra.mxu0 0
        %791 = vmatpush.bf16.msra.mxu0 0
        %792 = vmatpush.bf16.msra.mxu0 0
        %793 = vmatpush.bf16.msra.mxu0 0
        %794 = vmatpush.bf16.msra.mxu0 0
        %795 = vmatpush.bf16.msra.mxu0 0
        %796 = vmatpush.bf16.msra.mxu0 0
        %797 = vmatpush.bf16.msra.mxu0 %v788
        %798 = vmatmul.bf16.gmra.mxu0 %v784
        %v799 = vpop.f32.mrf.mxu0
        %v800 = vadd.f32 %v780, %v799
        %v801 = vpop.f32.mrf.mxu0
        %v802 = vadd.f32 %v780, %v801
        %803 = vdwg.mxu0
        %v804 = vld [vmem:[%s1] sm:$0xff]
        %v805 = vadd.f32 %v800, %v804
        %v806 = vadd.f32 %v802, %v804
        %807 = vst [vmem:[#allocation2] sm:$0xff] %v805
        %808 = vst [vmem:[#allocation2 + $0x8] sm:$0xff] %v806
      $region92: #{stock_transformer_forward.1} parent=87 // pred_fallthru
        _
      %v809 = vld [vmem:[#allocation2] sm:$0xff]
      %v810 = vld [vmem:[#allocation2 + $0x8] sm:$0xff]
      %v811 = vld [vmem:[%s748] sm:$0x3f]
      %v812 = vpack.c.bf16 %v810, %v809
      %v813 = vld [vmem:[%s717] sm:$0xf]
      %v814 = vld [vmem:[%s717 + $0x4] sm:$0xf]
      %v815 = vld [vmem:[%s717 + $0x8] sm:$0xf]
      %v816 = vld [vmem:[%s717 + $0xc] sm:$0xf]
      %v817 = vld [vmem:[%s717 + $0x10] sm:$0xf]
      %v818 = vld [vmem:[%s717 + $0x14] sm:$0xf]
      %v819 = vld [vmem:[%s717 + $0x18] sm:$0xf]
      %v820 = vld [vmem:[%s717 + $0x1c] sm:$0xf]
      %v821 = vld [vmem:[%s717 + $0x20] sm:$0xf]
      %v822 = vld [vmem:[%s717 + $0x24] sm:$0xf]
      %v823 = vld [vmem:[%s717 + $0x28] sm:$0xf]
      %v824 = vld [vmem:[%s717 + $0x2c] sm:$0xf]
      %v825 = vld [vmem:[%s717 + $0x30] sm:$0xf]
      %v826 = vld [vmem:[%s717 + $0x34] sm:$0xf]
      %v827 = vld [vmem:[%s717 + $0x38] sm:$0xf]
      %v828 = vld [vmem:[%s717 + $0x3c] sm:$0xf]
      %v829 = vld [vmem:[%s717 + $0x40] sm:$0xf]
      %v830 = vld [vmem:[%s717 + $0x44] sm:$0xf]
      %v831 = vld [vmem:[%s717 + $0x48] sm:$0xf]
      %v832 = vld [vmem:[%s717 + $0x4c] sm:$0xf]
      %v833 = vld [vmem:[%s717 + $0x50] sm:$0xf]
      %v834 = vld [vmem:[%s717 + $0x54] sm:$0xf]
      %v835 = vld [vmem:[%s717 + $0x58] sm:$0xf]
      %v836 = vld [vmem:[%s717 + $0x5c] sm:$0xf]
      %v837 = vld [vmem:[%s717 + $0x60] sm:$0xf]
      %v838 = vld [vmem:[%s717 + $0x64] sm:$0xf]
      %v839 = vld [vmem:[%s717 + $0x68] sm:$0xf]
      %v840 = vld [vmem:[%s717 + $0x6c] sm:$0xf]
      %v841 = vld [vmem:[%s717 + $0x70] sm:$0xf]
      %v842 = vld [vmem:[%s717 + $0x74] sm:$0xf]
      %v843 = vld [vmem:[%s717 + $0x78] sm:$0xf]
      %v844 = vld [vmem:[%s717 + $0x7c] sm:$0xf]
      %v845 = vld [vmem:[%s717 + $0x80] sm:$0xf]
      %v846 = vld [vmem:[%s717 + $0x84] sm:$0xf]
      %v847 = vld [vmem:[%s717 + $0x88] sm:$0xf]
      %v848 = vld [vmem:[%s717 + $0x8c] sm:$0xf]
      %v849 = vld [vmem:[%s717 + $0x90] sm:$0xf]
      %v850 = vld [vmem:[%s717 + $0x94] sm:$0xf]
      %v851 = vld [vmem:[%s717 + $0x98] sm:$0xf]
      %v852 = vld [vmem:[%s717 + $0x9c] sm:$0xf]
      %v853 = vld [vmem:[%s717 + $0xa0] sm:$0xf]
      %v854 = vld [vmem:[%s717 + $0xa4] sm:$0xf]
      %v855 = vld [vmem:[%s717 + $0xa8] sm:$0xf]
      %v856 = vld [vmem:[%s717 + $0xac] sm:$0xf]
      %v857 = vld [vmem:[%s717 + $0xb0] sm:$0xf]
      %v858 = vld [vmem:[%s717 + $0xb4] sm:$0xf]
      %v859 = vld [vmem:[%s717 + $0xb8] sm:$0xf]
      %v860 = vld [vmem:[%s717 + $0xbc] sm:$0xf]
      %v861 = vld [vmem:[%s717 + $0xc0] sm:$0xf]
      %v862 = vld [vmem:[%s717 + $0xc4] sm:$0xf]
      %v863 = vld [vmem:[%s717 + $0xc8] sm:$0xf]
      %v864 = vld [vmem:[%s717 + $0xcc] sm:$0xf]
      %v865 = vld [vmem:[%s717 + $0xd0] sm:$0xf]
      %v866 = vld [vmem:[%s717 + $0xd4] sm:$0xf]
      %v867 = vld [vmem:[%s717 + $0xd8] sm:$0xf]
      %v868 = vld [vmem:[%s717 + $0xdc] sm:$0xf]
      %v869 = vld [vmem:[%s717 + $0xe0] sm:$0xf]
      %v870 = vld [vmem:[%s717 + $0xe4] sm:$0xf]
      %v871 = vld [vmem:[%s717 + $0xe8] sm:$0xf]
      %v872 = vld [vmem:[%s717 + $0xec] sm:$0xf]
      %v873 = vld [vmem:[%s717 + $0xf0] sm:$0xf]
      %v874 = vld [vmem:[%s717 + $0xf4] sm:$0xf]
      %v875 = vld [vmem:[%s717 + $0xf8] sm:$0xf]
      %v876 = vld [vmem:[%s717 + $0xfc] sm:$0xf]
      %v877 = vld [vmem:[%s722] sm:$0xf]
      %v878 = vld [vmem:[%s722 + $0x4] sm:$0xf]
      %v879 = vld [vmem:[%s722 + $0x8] sm:$0xf]
      %v880 = vld [vmem:[%s722 + $0xc] sm:$0xf]
      %v881 = vld [vmem:[%s722 + $0x10] sm:$0xf]
      %v882 = vld [vmem:[%s722 + $0x14] sm:$0xf]
      %v883 = vld [vmem:[%s722 + $0x18] sm:$0xf]
      %v884 = vld [vmem:[%s722 + $0x1c] sm:$0xf]
      %v885 = vld [vmem:[%s722 + $0x20] sm:$0xf]
      %v886 = vld [vmem:[%s722 + $0x24] sm:$0xf]
      %v887 = vld [vmem:[%s722 + $0x28] sm:$0xf]
      %v888 = vld [vmem:[%s722 + $0x2c] sm:$0xf]
      %v889 = vld [vmem:[%s722 + $0x30] sm:$0xf]
      %v890 = vld [vmem:[%s722 + $0x34] sm:$0xf]
      %v891 = vld [vmem:[%s722 + $0x38] sm:$0xf]
      %v892 = vld [vmem:[%s722 + $0x3c] sm:$0xf]
      %v893 = vld [vmem:[%s722 + $0x40] sm:$0xf]
      %v894 = vld [vmem:[%s722 + $0x44] sm:$0xf]
      %v895 = vld [vmem:[%s722 + $0x48] sm:$0xf]
      %v896 = vld [vmem:[%s722 + $0x4c] sm:$0xf]
      %v897 = vld [vmem:[%s722 + $0x50] sm:$0xf]
      %v898 = vld [vmem:[%s722 + $0x54] sm:$0xf]
      %v899 = vld [vmem:[%s722 + $0x58] sm:$0xf]
      %v900 = vld [vmem:[%s722 + $0x5c] sm:$0xf]
      %v901 = vld [vmem:[%s722 + $0x60] sm:$0xf]
      %v902 = vld [vmem:[%s722 + $0x64] sm:$0xf]
      %v903 = vld [vmem:[%s722 + $0x68] sm:$0xf]
      %v904 = vld [vmem:[%s722 + $0x6c] sm:$0xf]
      %v905 = vld [vmem:[%s722 + $0x70] sm:$0xf]
      %v906 = vld [vmem:[%s722 + $0x74] sm:$0xf]
      %v907 = vld [vmem:[%s722 + $0x78] sm:$0xf]
      %v908 = vld [vmem:[%s722 + $0x7c] sm:$0xf]
      %v909 = vld [vmem:[%s722 + $0x80] sm:$0xf]
      %v910 = vld [vmem:[%s722 + $0x84] sm:$0xf]
      %v911 = vld [vmem:[%s722 + $0x88] sm:$0xf]
      %v912 = vld [vmem:[%s722 + $0x8c] sm:$0xf]
      %v913 = vld [vmem:[%s722 + $0x90] sm:$0xf]
      %v914 = vld [vmem:[%s722 + $0x94] sm:$0xf]
      %v915 = vld [vmem:[%s722 + $0x98] sm:$0xf]
      %v916 = vld [vmem:[%s722 + $0x9c] sm:$0xf]
      %v917 = vld [vmem:[%s722 + $0xa0] sm:$0xf]
      %v918 = vld [vmem:[%s722 + $0xa4] sm:$0xf]
      %v919 = vld [vmem:[%s722 + $0xa8] sm:$0xf]
      %v920 = vld [vmem:[%s722 + $0xac] sm:$0xf]
      %v921 = vld [vmem:[%s722 + $0xb0] sm:$0xf]
      %v922 = vld [vmem:[%s722 + $0xb4] sm:$0xf]
      %v923 = vld [vmem:[%s722 + $0xb8] sm:$0xf]
      %v924 = vld [vmem:[%s722 + $0xbc] sm:$0xf]
      %v925 = vld [vmem:[%s722 + $0xc0] sm:$0xf]
      %v926 = vld [vmem:[%s722 + $0xc4] sm:$0xf]
      %v927 = vld [vmem:[%s722 + $0xc8] sm:$0xf]
      %v928 = vld [vmem:[%s722 + $0xcc] sm:$0xf]
      %v929 = vld [vmem:[%s722 + $0xd0] sm:$0xf]
      %v930 = vld [vmem:[%s722 + $0xd4] sm:$0xf]
      %v931 = vld [vmem:[%s722 + $0xd8] sm:$0xf]
      %v932 = vld [vmem:[%s722 + $0xdc] sm:$0xf]
      %v933 = vld [vmem:[%s722 + $0xe0] sm:$0xf]
      %v934 = vld [vmem:[%s722 + $0xe4] sm:$0xf]
      %v935 = vld [vmem:[%s722 + $0xe8] sm:$0xf]
      %v936 = vld [vmem:[%s722 + $0xec] sm:$0xf]
      %v937 = vld [vmem:[%s722 + $0xf0] sm:$0xf]
      %v938 = vld [vmem:[%s722 + $0xf4] sm:$0xf]
      %v939 = vld [vmem:[%s722 + $0xf8] sm:$0xf]
      %v940 = vld [vmem:[%s722 + $0xfc] sm:$0xf]
      %v941 = vld [vmem:[%s727] sm:$0xf]
      %v942 = vld [vmem:[%s727 + $0x4] sm:$0xf]
      %v943 = vld [vmem:[%s727 + $0x8] sm:$0xf]
      %v944 = vld [vmem:[%s727 + $0xc] sm:$0xf]
      %v945 = vld [vmem:[%s727 + $0x10] sm:$0xf]
      %v946 = vld [vmem:[%s727 + $0x14] sm:$0xf]
      %v947 = vld [vmem:[%s727 + $0x18] sm:$0xf]
      %v948 = vld [vmem:[%s727 + $0x1c] sm:$0xf]
      %v949 = vld [vmem:[%s727 + $0x20] sm:$0xf]
      %v950 = vld [vmem:[%s727 + $0x24] sm:$0xf]
      %v951 = vld [vmem:[%s727 + $0x28] sm:$0xf]
      %v952 = vld [vmem:[%s727 + $0x2c] sm:$0xf]
      %v953 = vld [vmem:[%s727 + $0x30] sm:$0xf]
      %v954 = vld [vmem:[%s727 + $0x34] sm:$0xf]
      %v955 = vld [vmem:[%s727 + $0x38] sm:$0xf]
      %v956 = vld [vmem:[%s727 + $0x3c] sm:$0xf]
      %v957 = vld [vmem:[%s727 + $0x40] sm:$0xf]
      %v958 = vld [vmem:[%s727 + $0x44] sm:$0xf]
      %v959 = vld [vmem:[%s727 + $0x48] sm:$0xf]
      %v960 = vld [vmem:[%s727 + $0x4c] sm:$0xf]
      %v961 = vld [vmem:[%s727 + $0x50] sm:$0xf]
      %v962 = vld [vmem:[%s727 + $0x54] sm:$0xf]
      %v963 = vld [vmem:[%s727 + $0x58] sm:$0xf]
      %v964 = vld [vmem:[%s727 + $0x5c] sm:$0xf]
      %v965 = vld [vmem:[%s727 + $0x60] sm:$0xf]
      %v966 = vld [vmem:[%s727 + $0x64] sm:$0xf]
      %v967 = vld [vmem:[%s727 + $0x68] sm:$0xf]
      %v968 = vld [vmem:[%s727 + $0x6c] sm:$0xf]
      %v969 = vld [vmem:[%s727 + $0x70] sm:$0xf]
      %v970 = vld [vmem:[%s727 + $0x74] sm:$0xf]
      %v971 = vld [vmem:[%s727 + $0x78] sm:$0xf]
      %v972 = vld [vmem:[%s727 + $0x7c] sm:$0xf]
      %v973 = vld [vmem:[%s727 + $0x80] sm:$0xf]
      %v974 = vld [vmem:[%s727 + $0x84] sm:$0xf]
      %v975 = vld [vmem:[%s727 + $0x88] sm:$0xf]
      %v976 = vld [vmem:[%s727 + $0x8c] sm:$0xf]
      %v977 = vld [vmem:[%s727 + $0x90] sm:$0xf]
      %v978 = vld [vmem:[%s727 + $0x94] sm:$0xf]
      %v979 = vld [vmem:[%s727 + $0x98] sm:$0xf]
      %v980 = vld [vmem:[%s727 + $0x9c] sm:$0xf]
      %v981 = vld [vmem:[%s727 + $0xa0] sm:$0xf]
      %v982 = vld [vmem:[%s727 + $0xa4] sm:$0xf]
      %v983 = vld [vmem:[%s727 + $0xa8] sm:$0xf]
      %v984 = vld [vmem:[%s727 + $0xac] sm:$0xf]
      %v985 = vld [vmem:[%s727 + $0xb0] sm:$0xf]
      %v986 = vld [vmem:[%s727 + $0xb4] sm:$0xf]
      %v987 = vld [vmem:[%s727 + $0xb8] sm:$0xf]
      %v988 = vld [vmem:[%s727 + $0xbc] sm:$0xf]
      %v989 = vld [vmem:[%s727 + $0xc0] sm:$0xf]
      %v990 = vld [vmem:[%s727 + $0xc4] sm:$0xf]
      %v991 = vld [vmem:[%s727 + $0xc8] sm:$0xf]
      %v992 = vld [vmem:[%s727 + $0xcc] sm:$0xf]
      %v993 = vld [vmem:[%s727 + $0xd0] sm:$0xf]
      %v994 = vld [vmem:[%s727 + $0xd4] sm:$0xf]
      %v995 = vld [vmem:[%s727 + $0xd8] sm:$0xf]
      %v996 = vld [vmem:[%s727 + $0xdc] sm:$0xf]
      %v997 = vld [vmem:[%s727 + $0xe0] sm:$0xf]
      %v998 = vld [vmem:[%s727 + $0xe4] sm:$0xf]
      %v999 = vld [vmem:[%s727 + $0xe8] sm:$0xf]
      %v1000 = vld [vmem:[%s727 + $0xec] sm:$0xf]
      %v1001 = vld [vmem:[%s727 + $0xf0] sm:$0xf]
      %v1002 = vld [vmem:[%s727 + $0xf4] sm:$0xf]
      %v1003 = vld [vmem:[%s727 + $0xf8] sm:$0xf]
      %v1004 = vld [vmem:[%s727 + $0xfc] sm:$0xf]
      %v1005 = vld [vmem:[%s744] sm:$0xf]
      %v1006 = vld [vmem:[%s744 + $0x4] sm:$0xf]
      %v1007 = vld [vmem:[%s744 + $0x8] sm:$0xf]
      %v1008 = vld [vmem:[%s744 + $0xc] sm:$0xf]
      %v1009 = vld [vmem:[%s744 + $0x10] sm:$0xf]
      %v1010 = vld [vmem:[%s744 + $0x14] sm:$0xf]
      %v1011 = vld [vmem:[%s744 + $0x18] sm:$0xf]
      %v1012 = vld [vmem:[%s744 + $0x1c] sm:$0xf]
      %v1013 = vld [vmem:[%s744 + $0x20] sm:$0xf]
      %v1014 = vld [vmem:[%s744 + $0x24] sm:$0xf]
      %v1015 = vld [vmem:[%s744 + $0x28] sm:$0xf]
      %v1016 = vld [vmem:[%s744 + $0x2c] sm:$0xf]
      %v1017 = vld [vmem:[%s744 + $0x30] sm:$0xf]
      %v1018 = vld [vmem:[%s744 + $0x34] sm:$0xf]
      %v1019 = vld [vmem:[%s744 + $0x38] sm:$0xf]
      %v1020 = vld [vmem:[%s744 + $0x3c] sm:$0xf]
      %v1021 = vld [vmem:[%s731] sm:$0xf]
      %v1022 = vld [vmem:[%s735] sm:$0xf]
      %v1023 = vld [vmem:[%s739] sm:$0xf]
      %v1024 = vperm.slane %v1021, 0
      %v1041 = vunpack.c.l.b16 %v813
      %v1042 = vunpack.c.l.b16 %v814
      %v1043 = vunpack.c.l.b16 %v815
      %v1044 = vunpack.c.l.b16 %v816
      %v1045 = vunpack.c.l.b16 %v817
      %v1046 = vunpack.c.l.b16 %v818
      %v1047 = vunpack.c.l.b16 %v819
      %v1048 = vunpack.c.l.b16 %v820
      %v1049 = vunpack.c.l.b16 %v821
      %v1050 = vunpack.c.l.b16 %v822
      %v1051 = vunpack.c.l.b16 %v823
      %v1052 = vunpack.c.l.b16 %v824
      %v1053 = vunpack.c.l.b16 %v825
      %v1054 = vunpack.c.l.b16 %v826
      %v1055 = vunpack.c.l.b16 %v827
      %v1056 = vunpack.c.l.b16 %v828
      %v1057 = vpack.c.b16 %v1042, %v1041
      %v1058 = vpack.c.b16 %v1044, %v1043
      %v1059 = vpack.c.b16 %v1046, %v1045
      %v1060 = vpack.c.b16 %v1048, %v1047
      %v1061 = vpack.c.b16 %v1050, %v1049
      %v1062 = vpack.c.b16 %v1052, %v1051
      %v1063 = vpack.c.b16 %v1054, %v1053
      %v1064 = vpack.c.b16 %v1056, %v1055
      %1073 = vmatpush.bf16.msra.mxu0 %v1064
      %1074 = vmatpush.bf16.msra.mxu0 %v1063
      %1075 = vmatpush.bf16.msra.mxu0 %v1062
      %1076 = vmatpush.bf16.msra.mxu0 %v1061
      %1077 = vmatpush.bf16.msra.mxu0 %v1060
      %1078 = vmatpush.bf16.msra.mxu0 %v1059
      %1079 = vmatpush.bf16.msra.mxu0 %v1058
      %1080 = vmatpush.bf16.msra.mxu0 %v1057
      %1081 = vmatmul.bf16.gmra.mxu0 %v812
      %v1082 = vpop.f32.mrf.mxu0
      %v1083 = vadd.f32 %v1024, %v1082
      %v1084 = vpop.f32.mrf.mxu0
      %v1085 = vadd.f32 %v1024, %v1084
      %1086 = vdwg.mxu0
      %v1087 = vperm.slane %v1022, 0
      %v1104 = vunpack.c.l.b16 %v877
      %v1105 = vunpack.c.l.b16 %v878
      %v1106 = vunpack.c.l.b16 %v879
      %v1107 = vunpack.c.l.b16 %v880
      %v1108 = vunpack.c.l.b16 %v881
      %v1109 = vunpack.c.l.b16 %v882
      %v1110 = vunpack.c.l.b16 %v883
      %v1111 = vunpack.c.l.b16 %v884
      %v1112 = vunpack.c.l.b16 %v885
      %v1113 = vunpack.c.l.b16 %v886
      %v1114 = vunpack.c.l.b16 %v887
      %v1115 = vunpack.c.l.b16 %v888
      %v1116 = vunpack.c.l.b16 %v889
      %v1117 = vunpack.c.l.b16 %v890
      %v1118 = vunpack.c.l.b16 %v891
      %v1119 = vunpack.c.l.b16 %v892
      %v1120 = vpack.c.b16 %v1105, %v1104
      %v1121 = vpack.c.b16 %v1107, %v1106
      %v1122 = vpack.c.b16 %v1109, %v1108
      %v1123 = vpack.c.b16 %v1111, %v1110
      %v1124 = vpack.c.b16 %v1113, %v1112
      %v1125 = vpack.c.b16 %v1115, %v1114
      %v1126 = vpack.c.b16 %v1117, %v1116
      %v1127 = vpack.c.b16 %v1119, %v1118
      %1136 = vmatpush.bf16.msra.mxu0 %v1127
      %1137 = vmatpush.bf16.msra.mxu0 %v1126
      %1138 = vmatpush.bf16.msra.mxu0 %v1125
      %1139 = vmatpush.bf16.msra.mxu0 %v1124
      %1140 = vmatpush.bf16.msra.mxu0 %v1123
      %1141 = vmatpush.bf16.msra.mxu0 %v1122
      %1142 = vmatpush.bf16.msra.mxu0 %v1121
      %1143 = vmatpush.bf16.msra.mxu0 %v1120
      %1144 = vmatmul.bf16.gmra.mxu0 %v812
      %v1145 = vpop.f32.mrf.mxu0
      %v1146 = vadd.f32 %v1087, %v1145
      %v1147 = vpop.f32.mrf.mxu0
      %v1148 = vadd.f32 %v1087, %v1147
      %1149 = vdwg.mxu0
      %v1150 = vperm.slane %v1023, 0
      %v1167 = vunpack.c.l.b16 %v941
      %v1168 = vunpack.c.l.b16 %v942
      %v1169 = vunpack.c.l.b16 %v943
      %v1170 = vunpack.c.l.b16 %v944
      %v1171 = vunpack.c.l.b16 %v945
      %v1172 = vunpack.c.l.b16 %v946
      %v1173 = vunpack.c.l.b16 %v947
      %v1174 = vunpack.c.l.b16 %v948
      %v1175 = vunpack.c.l.b16 %v949
      %v1176 = vunpack.c.l.b16 %v950
      %v1177 = vunpack.c.l.b16 %v951
      %v1178 = vunpack.c.l.b16 %v952
      %v1179 = vunpack.c.l.b16 %v953
      %v1180 = vunpack.c.l.b16 %v954
      %v1181 = vunpack.c.l.b16 %v955
      %v1182 = vunpack.c.l.b16 %v956
      %v1183 = vpack.c.b16 %v1168, %v1167
      %v1184 = vpack.c.b16 %v1170, %v1169
      %v1185 = vpack.c.b16 %v1172, %v1171
      %v1186 = vpack.c.b16 %v1174, %v1173
      %v1187 = vpack.c.b16 %v1176, %v1175
      %v1188 = vpack.c.b16 %v1178, %v1177
      %v1189 = vpack.c.b16 %v1180, %v1179
      %v1190 = vpack.c.b16 %v1182, %v1181
      %1199 = vmatpush.bf16.msra.mxu0 %v1190
      %1200 = vmatpush.bf16.msra.mxu0 %v1189
      %1201 = vmatpush.bf16.msra.mxu0 %v1188
      %1202 = vmatpush.bf16.msra.mxu0 %v1187
      %1203 = vmatpush.bf16.msra.mxu0 %v1186
      %1204 = vmatpush.bf16.msra.mxu0 %v1185
      %1205 = vmatpush.bf16.msra.mxu0 %v1184
      %1206 = vmatpush.bf16.msra.mxu0 %v1183
      %1207 = vmatmul.bf16.gmra.mxu0 %v812
      %v1208 = vpop.f32.mrf.mxu0
      %v1209 = vadd.f32 %v1150, %v1208
      %v1210 = vpop.f32.mrf.mxu0
      %v1211 = vadd.f32 %v1150, %v1210
      %1212 = vdwg.mxu0
      %v1213 = vpack.c.bf16 %v1083, %v1083
      %v1214 = vpack.c.bf16 %v1085, %v1085
      %v1215 = vpack.c.bf16 %v1146, %v1146
      %v1216 = vpack.c.bf16 %v1148, %v1148
      %v1217 = vpack.c.bf16 %v1209, %v1209
      %v1218 = vpack.c.bf16 %v1211, %v1211
      %vm1219 = vcmask 261120
      %v1221 = vsel %vm1219, %v1213, 0
      %v1224 = vsel %vm1219, %v1215, 0
      %1226 = vmatpush.bf16.xpose.msra.mxu0 0
      %1227 = vmatpush.bf16.xpose.msra.mxu0 0
      %1228 = vmatpush.bf16.xpose.msra.mxu0 0
      %1229 = vmatpush.bf16.xpose.msra.mxu0 0
      %1230 = vmatpush.bf16.xpose.msra.mxu0 0
      %1231 = vmatpush.bf16.xpose.msra.mxu0 0
      %1232 = vmatpush.bf16.xpose.msra.mxu0 0
      %1233 = vmatpush.bf16.xpose.msra.mxu0 %v1224
      %1234 = vmatmul.bf16.gmra.mxu0 %v1221
      %v1235 = vpop.f32.mrf.mxu0
      %v1236 = vadd.f32 0.0, %v1235
      %v1237 = vpop.f32.mrf.mxu0
      %1238 = vdwg.mxu0
      %v1240 = vsel %vm1219, %v1214, 0
      %v1243 = vsel %vm1219, %v1216, 0
      %1245 = vmatpush.bf16.xpose.msra.mxu0 0
      %1246 = vmatpush.bf16.xpose.msra.mxu0 0
      %1247 = vmatpush.bf16.xpose.msra.mxu0 0
      %1248 = vmatpush.bf16.xpose.msra.mxu0 0
      %1249 = vmatpush.bf16.xpose.msra.mxu0 0
      %1250 = vmatpush.bf16.xpose.msra.mxu0 0
      %1251 = vmatpush.bf16.xpose.msra.mxu0 0
      %1252 = vmatpush.bf16.xpose.msra.mxu0 %v1243
      %1253 = vmatmul.bf16.gmra.mxu0 %v1240
      %v1254 = vpop.f32.mrf.mxu0
      %v1255 = vadd.f32 0.0, %v1254
      %v1256 = vpop.f32.mrf.mxu0
      %1257 = vdwg.mxu0
      %vm1258 = vcmask 64512
      %v1259 = vsel %vm1258, %v1236, -inf
      %1260 = vmax.xlane.f32.xlu0 %v1259
      %v1261 = vpop.xlane.xlu0 %1260
      %v1262 = vsel %vm1258, %v1255, -inf
      %1263 = vmax.xlane.f32.xlu0 %v1262
      %v1264 = vpop.xlane.xlu0 %1263
      %v1265 = vsub.f32 %v1236, %v1261
      %v1266 = vsub.f32 %v1255, %v1264
      %v1267 = vmul.f32 %v1265, 1.442695
      %v1268 = vpow.pop %v1267
      %v1269 = vmul.f32 %v1266, 1.442695
      %v1270 = vpow.pop %v1269
      %v1271 = vsel %vm1258, %v1268, 0.0
      %1272 = vadd.xlane.f32.xlu0 %v1271
      %v1273 = vpop.xlane.xlu0 %1272
      %v1274 = vsel %vm1258, %v1270, 0.0
      %1275 = vadd.xlane.f32.xlu0 %v1274
      %v1276 = vpop.xlane.xlu0 %1275
      %v1277 = vrcp.pop %v1273
      %v1278 = vrcp.pop %v1276
      %v1279 = vmul.f32 %v1268, %v1277
      %v1280 = vmul.f32 %v1270, %v1278
      %v1281 = vpack.c.bf16 %v1279, %v1279
      %v1282 = vpack.c.bf16 %v1280, %v1280
      %v1284 = vsel %vm1258, %v1281, 0
      %vm1286 = vcmask 1043456
      %v1288 = vsel %vm1286, %v1217, 0
      %1290 = vmatpush.bf16.msra.mxu0 0
      %1291 = vmatpush.bf16.msra.mxu0 0
      %1292 = vmatpush.bf16.msra.mxu0 0
      %1293 = vmatpush.bf16.msra.mxu0 0
      %1294 = vmatpush.bf16.msra.mxu0 0
      %1295 = vmatpush.bf16.msra.mxu0 0
      %1296 = vmatpush.bf16.msra.mxu0 0
      %1297 = vmatpush.bf16.msra.mxu0 %v1288
      %1298 = vmatmul.bf16.gmra.mxu0 %v1284
      %v1299 = vpop.f32.mrf.mxu0
      %v1300 = vadd.f32 0.0, %v1299
      %v1301 = vpop.f32.mrf.mxu0
      %1302 = vdwg.mxu0
      %v1304 = vsel %vm1258, %v1282, 0
      %v1307 = vsel %vm1286, %v1218, 0
      %1309 = vmatpush.bf16.msra.mxu0 0
      %1310 = vmatpush.bf16.msra.mxu0 0
      %1311 = vmatpush.bf16.msra.mxu0 0
      %1312 = vmatpush.bf16.msra.mxu0 0
      %1313 = vmatpush.bf16.msra.mxu0 0
      %1314 = vmatpush.bf16.msra.mxu0 0
      %1315 = vmatpush.bf16.msra.mxu0 0
      %1316 = vmatpush.bf16.msra.mxu0 %v1307
      %1317 = vmatmul.bf16.gmra.mxu0 %v1304
      %v1318 = vpop.f32.mrf.mxu0
      %v1319 = vadd.f32 0.0, %v1318
      %v1320 = vpop.f32.mrf.mxu0
      %1321 = vdwg.mxu0
      %v1322 = vpack.c.bf16 %v1319, %v1300
      %v1323 = vperm.slane %v1021, 1
      %v1340 = vunpack.c.l.b16 %v829
      %v1341 = vunpack.c.l.b16 %v830
      %v1342 = vunpack.c.l.b16 %v831
      %v1343 = vunpack.c.l.b16 %v832
      %v1344 = vunpack.c.l.b16 %v833
      %v1345 = vunpack.c.l.b16 %v834
      %v1346 = vunpack.c.l.b16 %v835
      %v1347 = vunpack.c.l.b16 %v836
      %v1348 = vunpack.c.l.b16 %v837
      %v1349 = vunpack.c.l.b16 %v838
      %v1350 = vunpack.c.l.b16 %v839
      %v1351 = vunpack.c.l.b16 %v840
      %v1352 = vunpack.c.l.b16 %v841
      %v1353 = vunpack.c.l.b16 %v842
      %v1354 = vunpack.c.l.b16 %v843
      %v1355 = vunpack.c.l.b16 %v844
      %v1356 = vpack.c.b16 %v1341, %v1340
      %v1357 = vpack.c.b16 %v1343, %v1342
      %v1358 = vpack.c.b16 %v1345, %v1344
      %v1359 = vpack.c.b16 %v1347, %v1346
      %v1360 = vpack.c.b16 %v1349, %v1348
      %v1361 = vpack.c.b16 %v1351, %v1350
      %v1362 = vpack.c.b16 %v1353, %v1352
      %v1363 = vpack.c.b16 %v1355, %v1354
      %1372 = vmatpush.bf16.msra.mxu0 %v1363
      %1373 = vmatpush.bf16.msra.mxu0 %v1362
      %1374 = vmatpush.bf16.msra.mxu0 %v1361
      %1375 = vmatpush.bf16.msra.mxu0 %v1360
      %1376 = vmatpush.bf16.msra.mxu0 %v1359
      %1377 = vmatpush.bf16.msra.mxu0 %v1358
      %1378 = vmatpush.bf16.msra.mxu0 %v1357
      %1379 = vmatpush.bf16.msra.mxu0 %v1356
      %1380 = vmatmul.bf16.gmra.mxu0 %v812
      %v1381 = vpop.f32.mrf.mxu0
      %v1382 = vadd.f32 %v1323, %v1381
      %v1383 = vpop.f32.mrf.mxu0
      %v1384 = vadd.f32 %v1323, %v1383
      %1385 = vdwg.mxu0
      %v1386 = vperm.slane %v1022, 1
      %v1403 = vunpack.c.l.b16 %v893
      %v1404 = vunpack.c.l.b16 %v894
      %v1405 = vunpack.c.l.b16 %v895
      %v1406 = vunpack.c.l.b16 %v896
      %v1407 = vunpack.c.l.b16 %v897
      %v1408 = vunpack.c.l.b16 %v898
      %v1409 = vunpack.c.l.b16 %v899
      %v1410 = vunpack.c.l.b16 %v900
      %v1411 = vunpack.c.l.b16 %v901
      %v1412 = vunpack.c.l.b16 %v902
      %v1413 = vunpack.c.l.b16 %v903
      %v1414 = vunpack.c.l.b16 %v904
      %v1415 = vunpack.c.l.b16 %v905
      %v1416 = vunpack.c.l.b16 %v906
      %v1417 = vunpack.c.l.b16 %v907
      %v1418 = vunpack.c.l.b16 %v908
      %v1419 = vpack.c.b16 %v1404, %v1403
      %v1420 = vpack.c.b16 %v1406, %v1405
      %v1421 = vpack.c.b16 %v1408, %v1407
      %v1422 = vpack.c.b16 %v1410, %v1409
      %v1423 = vpack.c.b16 %v1412, %v1411
      %v1424 = vpack.c.b16 %v1414, %v1413
      %v1425 = vpack.c.b16 %v1416, %v1415
      %v1426 = vpack.c.b16 %v1418, %v1417
      %1435 = vmatpush.bf16.msra.mxu0 %v1426
      %1436 = vmatpush.bf16.msra.mxu0 %v1425
      %1437 = vmatpush.bf16.msra.mxu0 %v1424
      %1438 = vmatpush.bf16.msra.mxu0 %v1423
      %1439 = vmatpush.bf16.msra.mxu0 %v1422
      %1440 = vmatpush.bf16.msra.mxu0 %v1421
      %1441 = vmatpush.bf16.msra.mxu0 %v1420
      %1442 = vmatpush.bf16.msra.mxu0 %v1419
      %1443 = vmatmul.bf16.gmra.mxu0 %v812
      %v1444 = vpop.f32.mrf.mxu0
      %v1445 = vadd.f32 %v1386, %v1444
      %v1446 = vpop.f32.mrf.mxu0
      %v1447 = vadd.f32 %v1386, %v1446
      %1448 = vdwg.mxu0
      %v1449 = vperm.slane %v1023, 1
      %v1466 = vunpack.c.l.b16 %v957
      %v1467 = vunpack.c.l.b16 %v958
      %v1468 = vunpack.c.l.b16 %v959
      %v1469 = vunpack.c.l.b16 %v960
      %v1470 = vunpack.c.l.b16 %v961
      %v1471 = vunpack.c.l.b16 %v962
      %v1472 = vunpack.c.l.b16 %v963
      %v1473 = vunpack.c.l.b16 %v964
      %v1474 = vunpack.c.l.b16 %v965
      %v1475 = vunpack.c.l.b16 %v966
      %v1476 = vunpack.c.l.b16 %v967
      %v1477 = vunpack.c.l.b16 %v968
      %v1478 = vunpack.c.l.b16 %v969
      %v1479 = vunpack.c.l.b16 %v970
      %v1480 = vunpack.c.l.b16 %v971
      %v1481 = vunpack.c.l.b16 %v972
      %v1482 = vpack.c.b16 %v1467, %v1466
      %v1483 = vpack.c.b16 %v1469, %v1468
      %v1484 = vpack.c.b16 %v1471, %v1470
      %v1485 = vpack.c.b16 %v1473, %v1472
      %v1486 = vpack.c.b16 %v1475, %v1474
      %v1487 = vpack.c.b16 %v1477, %v1476
      %v1488 = vpack.c.b16 %v1479, %v1478
      %v1489 = vpack.c.b16 %v1481, %v1480
      %1498 = vmatpush.bf16.msra.mxu0 %v1489
      %1499 = vmatpush.bf16.msra.mxu0 %v1488
      %1500 = vmatpush.bf16.msra.mxu0 %v1487
      %1501 = vmatpush.bf16.msra.mxu0 %v1486
      %1502 = vmatpush.bf16.msra.mxu0 %v1485
      %1503 = vmatpush.bf16.msra.mxu0 %v1484
      %1504 = vmatpush.bf16.msra.mxu0 %v1483
      %1505 = vmatpush.bf16.msra.mxu0 %v1482
      %1506 = vmatmul.bf16.gmra.mxu0 %v812
      %v1507 = vpop.f32.mrf.mxu0
      %v1508 = vadd.f32 %v1449, %v1507
      %v1509 = vpop.f32.mrf.mxu0
      %v1510 = vadd.f32 %v1449, %v1509
      %1511 = vdwg.mxu0
      %v1512 = vpack.c.bf16 %v1382, %v1382
      %v1513 = vpack.c.bf16 %v1384, %v1384
      %v1514 = vpack.c.bf16 %v1445, %v1445
      %v1515 = vpack.c.bf16 %v1447, %v1447
      %v1516 = vpack.c.bf16 %v1508, %v1508
      %v1517 = vpack.c.bf16 %v1510, %v1510
      %v1519 = vsel %vm1219, %v1512, 0
      %v1522 = vsel %vm1219, %v1514, 0
      %1524 = vmatpush.bf16.xpose.msra.mxu0 0
      %1525 = vmatpush.bf16.xpose.msra.mxu0 0
      %1526 = vmatpush.bf16.xpose.msra.mxu0 0
      %1527 = vmatpush.bf16.xpose.msra.mxu0 0
      %1528 = vmatpush.bf16.xpose.msra.mxu0 0
      %1529 = vmatpush.bf16.xpose.msra.mxu0 0
      %1530 = vmatpush.bf16.xpose.msra.mxu0 0
      %1531 = vmatpush.bf16.xpose.msra.mxu0 %v1522
      %1532 = vmatmul.bf16.gmra.mxu0 %v1519
      %v1533 = vpop.f32.mrf.mxu0
      %v1534 = vadd.f32 0.0, %v1533
      %v1535 = vpop.f32.mrf.mxu0
      %1536 = vdwg.mxu0
      %v1538 = vsel %vm1219, %v1513, 0
      %v1541 = vsel %vm1219, %v1515, 0
      %1543 = vmatpush.bf16.xpose.msra.mxu0 0
      %1544 = vmatpush.bf16.xpose.msra.mxu0 0
      %1545 = vmatpush.bf16.xpose.msra.mxu0 0
      %1546 = vmatpush.bf16.xpose.msra.mxu0 0
      %1547 = vmatpush.bf16.xpose.msra.mxu0 0
      %1548 = vmatpush.bf16.xpose.msra.mxu0 0
      %1549 = vmatpush.bf16.xpose.msra.mxu0 0
      %1550 = vmatpush.bf16.xpose.msra.mxu0 %v1541
      %1551 = vmatmul.bf16.gmra.mxu0 %v1538
      %v1552 = vpop.f32.mrf.mxu0
      %v1553 = vadd.f32 0.0, %v1552
      %v1554 = vpop.f32.mrf.mxu0
      %1555 = vdwg.mxu0
      %v1556 = vsel %vm1258, %v1534, -inf
      %1557 = vmax.xlane.f32.xlu0 %v1556
      %v1558 = vpop.xlane.xlu0 %1557
      %v1559 = vsel %vm1258, %v1553, -inf
      %1560 = vmax.xlane.f32.xlu0 %v1559
      %v1561 = vpop.xlane.xlu0 %1560
      %v1562 = vsub.f32 %v1534, %v1558
      %v1563 = vsub.f32 %v1553, %v1561
      %v1564 = vmul.f32 %v1562, 1.442695
      %v1565 = vpow.pop %v1564
      %v1566 = vmul.f32 %v1563, 1.442695
      %v1567 = vpow.pop %v1566
      %v1568 = vsel %vm1258, %v1565, 0.0
      %1569 = vadd.xlane.f32.xlu0 %v1568
      %v1570 = vpop.xlane.xlu0 %1569
      %v1571 = vsel %vm1258, %v1567, 0.0
      %1572 = vadd.xlane.f32.xlu0 %v1571
      %v1573 = vpop.xlane.xlu0 %1572
      %v1574 = vrcp.pop %v1570
      %v1575 = vrcp.pop %v1573
      %v1576 = vmul.f32 %v1565, %v1574
      %v1577 = vmul.f32 %v1567, %v1575
      %v1578 = vpack.c.bf16 %v1576, %v1576
      %v1579 = vpack.c.bf16 %v1577, %v1577
      %v1581 = vsel %vm1258, %v1578, 0
      %v1584 = vsel %vm1286, %v1516, 0
      %1586 = vmatpush.bf16.msra.mxu0 0
      %1587 = vmatpush.bf16.msra.mxu0 0
      %1588 = vmatpush.bf16.msra.mxu0 0
      %1589 = vmatpush.bf16.msra.mxu0 0
      %1590 = vmatpush.bf16.msra.mxu0 0
      %1591 = vmatpush.bf16.msra.mxu0 0
      %1592 = vmatpush.bf16.msra.mxu0 0
      %1593 = vmatpush.bf16.msra.mxu0 %v1584
      %1594 = vmatmul.bf16.gmra.mxu0 %v1581
      %v1595 = vpop.f32.mrf.mxu0
      %v1596 = vadd.f32 0.0, %v1595
      %v1597 = vpop.f32.mrf.mxu0
      %1598 = vdwg.mxu0
      %v1600 = vsel %vm1258, %v1579, 0
      %v1603 = vsel %vm1286, %v1517, 0
      %1605 = vmatpush.bf16.msra.mxu0 0
      %1606 = vmatpush.bf16.msra.mxu0 0
      %1607 = vmatpush.bf16.msra.mxu0 0
      %1608 = vmatpush.bf16.msra.mxu0 0
      %1609 = vmatpush.bf16.msra.mxu0 0
      %1610 = vmatpush.bf16.msra.mxu0 0
      %1611 = vmatpush.bf16.msra.mxu0 0
      %1612 = vmatpush.bf16.msra.mxu0 %v1603
      %1613 = vmatmul.bf16.gmra.mxu0 %v1600
      %v1614 = vpop.f32.mrf.mxu0
      %v1615 = vadd.f32 0.0, %v1614
      %v1616 = vpop.f32.mrf.mxu0
      %1617 = vdwg.mxu0
      %v1618 = vpack.c.bf16 %v1615, %v1596
      %v1623 = vunpack.c.l.b16 %v1009
      %v1624 = vunpack.c.l.b16 %v1010
      %v1625 = vunpack.c.l.b16 %v1011
      %v1626 = vunpack.c.l.b16 %v1012
      %v1627 = vpack.c.b16 %v1624, %v1623
      %v1628 = vpack.c.b16 %v1626, %v1625
      %v1632 = vsel %vm1219, %v1618, 0
      %1634 = vmatpush.bf16.msra.mxu0 0
      %1635 = vmatpush.bf16.msra.mxu0 0
      %1636 = vmatpush.bf16.msra.mxu0 0
      %1637 = vmatpush.bf16.msra.mxu0 0
      %1638 = vmatpush.bf16.msra.mxu0 0
      %1639 = vmatpush.bf16.msra.mxu0 0
      %1640 = vmatpush.bf16.msra.mxu0 %v1628
      %1641 = vmatpush.bf16.msra.mxu0 %v1627
      %1642 = vmatmul.bf16.gmra.mxu0 %v1632
      %v1643 = vpop.f32.mrf.mxu0
      %v1644 = vadd.f32 0.0, %v1643
      %v1645 = vpop.f32.mrf.mxu0
      %v1646 = vadd.f32 0.0, %v1645
      %1647 = vdwg.mxu0
      %v1652 = vunpack.c.l.b16 %v1005
      %v1653 = vunpack.c.l.b16 %v1006
      %v1654 = vunpack.c.l.b16 %v1007
      %v1655 = vunpack.c.l.b16 %v1008
      %v1656 = vpack.c.b16 %v1653, %v1652
      %v1657 = vpack.c.b16 %v1655, %v1654
      %v1661 = vsel %vm1219, %v1322, 0
      %1663 = vmatpush.bf16.msra.mxu0 0
      %1664 = vmatpush.bf16.msra.mxu0 0
      %1665 = vmatpush.bf16.msra.mxu0 0
      %1666 = vmatpush.bf16.msra.mxu0 0
      %1667 = vmatpush.bf16.msra.mxu0 0
      %1668 = vmatpush.bf16.msra.mxu0 0
      %1669 = vmatpush.bf16.msra.mxu0 %v1657
      %1670 = vmatpush.bf16.msra.mxu0 %v1656
      %1671 = vmatmul.bf16.gmra.mxu0 %v1661
      %v1672 = vpop.f32.mrf.mxu0
      %v1673 = vadd.f32 %v1644, %v1672
      %v1674 = vpop.f32.mrf.mxu0
      %v1675 = vadd.f32 %v1646, %v1674
      %1676 = vdwg.mxu0
      %v1677 = vperm.slane %v1021, 2
      %v1694 = vunpack.c.l.b16 %v845
      %v1695 = vunpack.c.l.b16 %v846
      %v1696 = vunpack.c.l.b16 %v847
      %v1697 = vunpack.c.l.b16 %v848
      %v1698 = vunpack.c.l.b16 %v849
      %v1699 = vunpack.c.l.b16 %v850
      %v1700 = vunpack.c.l.b16 %v851
      %v1701 = vunpack.c.l.b16 %v852
      %v1702 = vunpack.c.l.b16 %v853
      %v1703 = vunpack.c.l.b16 %v854
      %v1704 = vunpack.c.l.b16 %v855
      %v1705 = vunpack.c.l.b16 %v856
      %v1706 = vunpack.c.l.b16 %v857
      %v1707 = vunpack.c.l.b16 %v858
      %v1708 = vunpack.c.l.b16 %v859
      %v1709 = vunpack.c.l.b16 %v860
      %v1710 = vpack.c.b16 %v1695, %v1694
      %v1711 = vpack.c.b16 %v1697, %v1696
      %v1712 = vpack.c.b16 %v1699, %v1698
      %v1713 = vpack.c.b16 %v1701, %v1700
      %v1714 = vpack.c.b16 %v1703, %v1702
      %v1715 = vpack.c.b16 %v1705, %v1704
      %v1716 = vpack.c.b16 %v1707, %v1706
      %v1717 = vpack.c.b16 %v1709, %v1708
      %1726 = vmatpush.bf16.msra.mxu0 %v1717
      %1727 = vmatpush.bf16.msra.mxu0 %v1716
      %1728 = vmatpush.bf16.msra.mxu0 %v1715
      %1729 = vmatpush.bf16.msra.mxu0 %v1714
      %1730 = vmatpush.bf16.msra.mxu0 %v1713
      %1731 = vmatpush.bf16.msra.mxu0 %v1712
      %1732 = vmatpush.bf16.msra.mxu0 %v1711
      %1733 = vmatpush.bf16.msra.mxu0 %v1710
      %1734 = vmatmul.bf16.gmra.mxu0 %v812
      %v1735 = vpop.f32.mrf.mxu0
      %v1736 = vadd.f32 %v1677, %v1735
      %v1737 = vpop.f32.mrf.mxu0
      %v1738 = vadd.f32 %v1677, %v1737
      %1739 = vdwg.mxu0
      %v1740 = vperm.slane %v1022, 2
      %v1757 = vunpack.c.l.b16 %v909
      %v1758 = vunpack.c.l.b16 %v910
      %v1759 = vunpack.c.l.b16 %v911
      %v1760 = vunpack.c.l.b16 %v912
      %v1761 = vunpack.c.l.b16 %v913
      %v1762 = vunpack.c.l.b16 %v914
      %v1763 = vunpack.c.l.b16 %v915
      %v1764 = vunpack.c.l.b16 %v916
      %v1765 = vunpack.c.l.b16 %v917
      %v1766 = vunpack.c.l.b16 %v918
      %v1767 = vunpack.c.l.b16 %v919
      %v1768 = vunpack.c.l.b16 %v920
      %v1769 = vunpack.c.l.b16 %v921
      %v1770 = vunpack.c.l.b16 %v922
      %v1771 = vunpack.c.l.b16 %v923
      %v1772 = vunpack.c.l.b16 %v924
      %v1773 = vpack.c.b16 %v1758, %v1757
      %v1774 = vpack.c.b16 %v1760, %v1759
      %v1775 = vpack.c.b16 %v1762, %v1761
      %v1776 = vpack.c.b16 %v1764, %v1763
      %v1777 = vpack.c.b16 %v1766, %v1765
      %v1778 = vpack.c.b16 %v1768, %v1767
      %v1779 = vpack.c.b16 %v1770, %v1769
      %v1780 = vpack.c.b16 %v1772, %v1771
      %1789 = vmatpush.bf16.msra.mxu0 %v1780
      %1790 = vmatpush.bf16.msra.mxu0 %v1779
      %1791 = vmatpush.bf16.msra.mxu0 %v1778
      %1792 = vmatpush.bf16.msra.mxu0 %v1777
      %1793 = vmatpush.bf16.msra.mxu0 %v1776
      %1794 = vmatpush.bf16.msra.mxu0 %v1775
      %1795 = vmatpush.bf16.msra.mxu0 %v1774
      %1796 = vmatpush.bf16.msra.mxu0 %v1773
      %1797 = vmatmul.bf16.gmra.mxu0 %v812
      %v1798 = vpop.f32.mrf.mxu0
      %v1799 = vadd.f32 %v1740, %v1798
      %v1800 = vpop.f32.mrf.mxu0
      %v1801 = vadd.f32 %v1740, %v1800
      %1802 = vdwg.mxu0
      %v1803 = vperm.slane %v1023, 2
      %v1820 = vunpack.c.l.b16 %v973
      %v1821 = vunpack.c.l.b16 %v974
      %v1822 = vunpack.c.l.b16 %v975
      %v1823 = vunpack.c.l.b16 %v976
      %v1824 = vunpack.c.l.b16 %v977
      %v1825 = vunpack.c.l.b16 %v978
      %v1826 = vunpack.c.l.b16 %v979
      %v1827 = vunpack.c.l.b16 %v980
      %v1828 = vunpack.c.l.b16 %v981
      %v1829 = vunpack.c.l.b16 %v982
      %v1830 = vunpack.c.l.b16 %v983
      %v1831 = vunpack.c.l.b16 %v984
      %v1832 = vunpack.c.l.b16 %v985
      %v1833 = vunpack.c.l.b16 %v986
      %v1834 = vunpack.c.l.b16 %v987
      %v1835 = vunpack.c.l.b16 %v988
      %v1836 = vpack.c.b16 %v1821, %v1820
      %v1837 = vpack.c.b16 %v1823, %v1822
      %v1838 = vpack.c.b16 %v1825, %v1824
      %v1839 = vpack.c.b16 %v1827, %v1826
      %v1840 = vpack.c.b16 %v1829, %v1828
      %v1841 = vpack.c.b16 %v1831, %v1830
      %v1842 = vpack.c.b16 %v1833, %v1832
      %v1843 = vpack.c.b16 %v1835, %v1834
      %1852 = vmatpush.bf16.msra.mxu0 %v1843
      %1853 = vmatpush.bf16.msra.mxu0 %v1842
      %1854 = vmatpush.bf16.msra.mxu0 %v1841
      %1855 = vmatpush.bf16.msra.mxu0 %v1840
      %1856 = vmatpush.bf16.msra.mxu0 %v1839
      %1857 = vmatpush.bf16.msra.mxu0 %v1838
      %1858 = vmatpush.bf16.msra.mxu0 %v1837
      %1859 = vmatpush.bf16.msra.mxu0 %v1836
      %1860 = vmatmul.bf16.gmra.mxu0 %v812
      %v1861 = vpop.f32.mrf.mxu0
      %v1862 = vadd.f32 %v1803, %v1861
      %v1863 = vpop.f32.mrf.mxu0
      %v1864 = vadd.f32 %v1803, %v1863
      %1865 = vdwg.mxu0
      %v1866 = vpack.c.bf16 %v1736, %v1736
      %v1867 = vpack.c.bf16 %v1738, %v1738
      %v1868 = vpack.c.bf16 %v1799, %v1799
      %v1869 = vpack.c.bf16 %v1801, %v1801
      %v1870 = vpack.c.bf16 %v1862, %v1862
      %v1871 = vpack.c.bf16 %v1864, %v1864
      %v1873 = vsel %vm1219, %v1866, 0
      %v1876 = vsel %vm1219, %v1868, 0
      %1878 = vmatpush.bf16.xpose.msra.mxu0 0
      %1879 = vmatpush.bf16.xpose.msra.mxu0 0
      %1880 = vmatpush.bf16.xpose.msra.mxu0 0
      %1881 = vmatpush.bf16.xpose.msra.mxu0 0
      %1882 = vmatpush.bf16.xpose.msra.mxu0 0
      %1883 = vmatpush.bf16.xpose.msra.mxu0 0
      %1884 = vmatpush.bf16.xpose.msra.mxu0 0
      %1885 = vmatpush.bf16.xpose.msra.mxu0 %v1876
      %1886 = vmatmul.bf16.gmra.mxu0 %v1873
      %v1887 = vpop.f32.mrf.mxu0
      %v1888 = vadd.f32 0.0, %v1887
      %v1889 = vpop.f32.mrf.mxu0
      %1890 = vdwg.mxu0
      %v1892 = vsel %vm1219, %v1867, 0
      %v1895 = vsel %vm1219, %v1869, 0
      %1897 = vmatpush.bf16.xpose.msra.mxu0 0
      %1898 = vmatpush.bf16.xpose.msra.mxu0 0
      %1899 = vmatpush.bf16.xpose.msra.mxu0 0
      %1900 = vmatpush.bf16.xpose.msra.mxu0 0
      %1901 = vmatpush.bf16.xpose.msra.mxu0 0
      %1902 = vmatpush.bf16.xpose.msra.mxu0 0
      %1903 = vmatpush.bf16.xpose.msra.mxu0 0
      %1904 = vmatpush.bf16.xpose.msra.mxu0 %v1895
      %1905 = vmatmul.bf16.gmra.mxu0 %v1892
      %v1906 = vpop.f32.mrf.mxu0
      %v1907 = vadd.f32 0.0, %v1906
      %v1908 = vpop.f32.mrf.mxu0
      %1909 = vdwg.mxu0
      %v1910 = vsel %vm1258, %v1888, -inf
      %1911 = vmax.xlane.f32.xlu0 %v1910
      %v1912 = vpop.xlane.xlu0 %1911
      %v1913 = vsel %vm1258, %v1907, -inf
      %1914 = vmax.xlane.f32.xlu0 %v1913
      %v1915 = vpop.xlane.xlu0 %1914
      %v1916 = vsub.f32 %v1888, %v1912
      %v1917 = vsub.f32 %v1907, %v1915
      %v1918 = vmul.f32 %v1916, 1.442695
      %v1919 = vpow.pop %v1918
      %v1920 = vmul.f32 %v1917, 1.442695
      %v1921 = vpow.pop %v1920
      %v1922 = vsel %vm1258, %v1919, 0.0
      %1923 = vadd.xlane.f32.xlu0 %v1922
      %v1924 = vpop.xlane.xlu0 %1923
      %v1925 = vsel %vm1258, %v1921, 0.0
      %1926 = vadd.xlane.f32.xlu0 %v1925
      %v1927 = vpop.xlane.xlu0 %1926
      %v1928 = vrcp.pop %v1924
      %v1929 = vrcp.pop %v1927
      %v1930 = vmul.f32 %v1919, %v1928
      %v1931 = vmul.f32 %v1921, %v1929
      %v1932 = vpack.c.bf16 %v1930, %v1930
      %v1933 = vpack.c.bf16 %v1931, %v1931
      %v1935 = vsel %vm1258, %v1932, 0
      %v1938 = vsel %vm1286, %v1870, 0
      %1940 = vmatpush.bf16.msra.mxu0 0
      %1941 = vmatpush.bf16.msra.mxu0 0
      %1942 = vmatpush.bf16.msra.mxu0 0
      %1943 = vmatpush.bf16.msra.mxu0 0
      %1944 = vmatpush.bf16.msra.mxu0 0
      %1945 = vmatpush.bf16.msra.mxu0 0
      %1946 = vmatpush.bf16.msra.mxu0 0
      %1947 = vmatpush.bf16.msra.mxu0 %v1938
      %1948 = vmatmul.bf16.gmra.mxu0 %v1935
      %v1949 = vpop.f32.mrf.mxu0
      %v1950 = vadd.f32 0.0, %v1949
      %v1951 = vpop.f32.mrf.mxu0
      %1952 = vdwg.mxu0
      %v1954 = vsel %vm1258, %v1933, 0
      %v1957 = vsel %vm1286, %v1871, 0
      %1959 = vmatpush.bf16.msra.mxu0 0
      %1960 = vmatpush.bf16.msra.mxu0 0
      %1961 = vmatpush.bf16.msra.mxu0 0
      %1962 = vmatpush.bf16.msra.mxu0 0
      %1963 = vmatpush.bf16.msra.mxu0 0
      %1964 = vmatpush.bf16.msra.mxu0 0
      %1965 = vmatpush.bf16.msra.mxu0 0
      %1966 = vmatpush.bf16.msra.mxu0 %v1957
      %1967 = vmatmul.bf16.gmra.mxu0 %v1954
      %v1968 = vpop.f32.mrf.mxu0
      %v1969 = vadd.f32 0.0, %v1968
      %v1970 = vpop.f32.mrf.mxu0
      %1971 = vdwg.mxu0
      %v1972 = vpack.c.bf16 %v1969, %v1950
      %v1977 = vunpack.c.l.b16 %v1013
      %v1978 = vunpack.c.l.b16 %v1014
      %v1979 = vunpack.c.l.b16 %v1015
      %v1980 = vunpack.c.l.b16 %v1016
      %v1981 = vpack.c.b16 %v1978, %v1977
      %v1982 = vpack.c.b16 %v1980, %v1979
      %v1986 = vsel %vm1219, %v1972, 0
      %1988 = vmatpush.bf16.msra.mxu0 0
      %1989 = vmatpush.bf16.msra.mxu0 0
      %1990 = vmatpush.bf16.msra.mxu0 0
      %1991 = vmatpush.bf16.msra.mxu0 0
      %1992 = vmatpush.bf16.msra.mxu0 0
      %1993 = vmatpush.bf16.msra.mxu0 0
      %1994 = vmatpush.bf16.msra.mxu0 %v1982
      %1995 = vmatpush.bf16.msra.mxu0 %v1981
      %1996 = vmatmul.bf16.gmra.mxu0 %v1986
      %v1997 = vpop.f32.mrf.mxu0
      %v1998 = vadd.f32 0.0, %v1997
      %v1999 = vpop.f32.mrf.mxu0
      %v2000 = vadd.f32 0.0, %v1999
      %2001 = vdwg.mxu0
      %v2002 = vadd.f32 %v1673, %v1998
      %v2003 = vadd.f32 %v1675, %v2000
      %v2004 = vperm.slane %v1021, 3
      %v2021 = vunpack.c.l.b16 %v861
      %v2022 = vunpack.c.l.b16 %v862
      %v2023 = vunpack.c.l.b16 %v863
      %v2024 = vunpack.c.l.b16 %v864
      %v2025 = vunpack.c.l.b16 %v865
      %v2026 = vunpack.c.l.b16 %v866
      %v2027 = vunpack.c.l.b16 %v867
      %v2028 = vunpack.c.l.b16 %v868
      %v2029 = vunpack.c.l.b16 %v869
      %v2030 = vunpack.c.l.b16 %v870
      %v2031 = vunpack.c.l.b16 %v871
      %v2032 = vunpack.c.l.b16 %v872
      %v2033 = vunpack.c.l.b16 %v873
      %v2034 = vunpack.c.l.b16 %v874
      %v2035 = vunpack.c.l.b16 %v875
      %v2036 = vunpack.c.l.b16 %v876
      %v2037 = vpack.c.b16 %v2022, %v2021
      %v2038 = vpack.c.b16 %v2024, %v2023
      %v2039 = vpack.c.b16 %v2026, %v2025
      %v2040 = vpack.c.b16 %v2028, %v2027
      %v2041 = vpack.c.b16 %v2030, %v2029
      %v2042 = vpack.c.b16 %v2032, %v2031
      %v2043 = vpack.c.b16 %v2034, %v2033
      %v2044 = vpack.c.b16 %v2036, %v2035
      %2053 = vmatpush.bf16.msra.mxu0 %v2044
      %2054 = vmatpush.bf16.msra.mxu0 %v2043
      %2055 = vmatpush.bf16.msra.mxu0 %v2042
      %2056 = vmatpush.bf16.msra.mxu0 %v2041
      %2057 = vmatpush.bf16.msra.mxu0 %v2040
      %2058 = vmatpush.bf16.msra.mxu0 %v2039
      %2059 = vmatpush.bf16.msra.mxu0 %v2038
      %2060 = vmatpush.bf16.msra.mxu0 %v2037
      %2061 = vmatmul.bf16.gmra.mxu0 %v812
      %v2062 = vpop.f32.mrf.mxu0
      %v2063 = vadd.f32 %v2004, %v2062
      %v2064 = vpop.f32.mrf.mxu0
      %v2065 = vadd.f32 %v2004, %v2064
      %2066 = vdwg.mxu0
      %v2067 = vperm.slane %v1022, 3
      %v2084 = vunpack.c.l.b16 %v925
      %v2085 = vunpack.c.l.b16 %v926
      %v2086 = vunpack.c.l.b16 %v927
      %v2087 = vunpack.c.l.b16 %v928
      %v2088 = vunpack.c.l.b16 %v929
      %v2089 = vunpack.c.l.b16 %v930
      %v2090 = vunpack.c.l.b16 %v931
      %v2091 = vunpack.c.l.b16 %v932
      %v2092 = vunpack.c.l.b16 %v933
      %v2093 = vunpack.c.l.b16 %v934
      %v2094 = vunpack.c.l.b16 %v935
      %v2095 = vunpack.c.l.b16 %v936
      %v2096 = vunpack.c.l.b16 %v937
      %v2097 = vunpack.c.l.b16 %v938
      %v2098 = vunpack.c.l.b16 %v939
      %v2099 = vunpack.c.l.b16 %v940
      %v2100 = vpack.c.b16 %v2085, %v2084
      %v2101 = vpack.c.b16 %v2087, %v2086
      %v2102 = vpack.c.b16 %v2089, %v2088
      %v2103 = vpack.c.b16 %v2091, %v2090
      %v2104 = vpack.c.b16 %v2093, %v2092
      %v2105 = vpack.c.b16 %v2095, %v2094
      %v2106 = vpack.c.b16 %v2097, %v2096
      %v2107 = vpack.c.b16 %v2099, %v2098
      %2116 = vmatpush.bf16.msra.mxu0 %v2107
      %2117 = vmatpush.bf16.msra.mxu0 %v2106
      %2118 = vmatpush.bf16.msra.mxu0 %v2105
      %2119 = vmatpush.bf16.msra.mxu0 %v2104
      %2120 = vmatpush.bf16.msra.mxu0 %v2103
      %2121 = vmatpush.bf16.msra.mxu0 %v2102
      %2122 = vmatpush.bf16.msra.mxu0 %v2101
      %2123 = vmatpush.bf16.msra.mxu0 %v2100
      %2124 = vmatmul.bf16.gmra.mxu0 %v812
      %v2125 = vpop.f32.mrf.mxu0
      %v2126 = vadd.f32 %v2067, %v2125
      %v2127 = vpop.f32.mrf.mxu0
      %v2128 = vadd.f32 %v2067, %v2127
      %2129 = vdwg.mxu0
      %v2130 = vperm.slane %v1023, 3
      %v2147 = vunpack.c.l.b16 %v989
      %v2148 = vunpack.c.l.b16 %v990
      %v2149 = vunpack.c.l.b16 %v991
      %v2150 = vunpack.c.l.b16 %v992
      %v2151 = vunpack.c.l.b16 %v993
      %v2152 = vunpack.c.l.b16 %v994
      %v2153 = vunpack.c.l.b16 %v995
      %v2154 = vunpack.c.l.b16 %v996
      %v2155 = vunpack.c.l.b16 %v997
      %v2156 = vunpack.c.l.b16 %v998
      %v2157 = vunpack.c.l.b16 %v999
      %v2158 = vunpack.c.l.b16 %v1000
      %v2159 = vunpack.c.l.b16 %v1001
      %v2160 = vunpack.c.l.b16 %v1002
      %v2161 = vunpack.c.l.b16 %v1003
      %v2162 = vunpack.c.l.b16 %v1004
      %v2163 = vpack.c.b16 %v2148, %v2147
      %v2164 = vpack.c.b16 %v2150, %v2149
      %v2165 = vpack.c.b16 %v2152, %v2151
      %v2166 = vpack.c.b16 %v2154, %v2153
      %v2167 = vpack.c.b16 %v2156, %v2155
      %v2168 = vpack.c.b16 %v2158, %v2157
      %v2169 = vpack.c.b16 %v2160, %v2159
      %v2170 = vpack.c.b16 %v2162, %v2161
      %2179 = vmatpush.bf16.msra.mxu0 %v2170
      %2180 = vmatpush.bf16.msra.mxu0 %v2169
      %2181 = vmatpush.bf16.msra.mxu0 %v2168
      %2182 = vmatpush.bf16.msra.mxu0 %v2167
      %2183 = vmatpush.bf16.msra.mxu0 %v2166
      %2184 = vmatpush.bf16.msra.mxu0 %v2165
      %2185 = vmatpush.bf16.msra.mxu0 %v2164
      %2186 = vmatpush.bf16.msra.mxu0 %v2163
      %2187 = vmatmul.bf16.gmra.mxu0 %v812
      %v2188 = vpop.f32.mrf.mxu0
      %v2189 = vadd.f32 %v2130, %v2188
      %v2190 = vpop.f32.mrf.mxu0
      %v2191 = vadd.f32 %v2130, %v2190
      %2192 = vdwg.mxu0
      %v2193 = vpack.c.bf16 %v2063, %v2063
      %v2194 = vpack.c.bf16 %v2065, %v2065
      %v2195 = vpack.c.bf16 %v2126, %v2126
      %v2196 = vpack.c.bf16 %v2128, %v2128
      %v2197 = vpack.c.bf16 %v2189, %v2189
      %v2198 = vpack.c.bf16 %v2191, %v2191
      %v2200 = vsel %vm1219, %v2193, 0
      %v2203 = vsel %vm1219, %v2195, 0
      %2205 = vmatpush.bf16.xpose.msra.mxu0 0
      %2206 = vmatpush.bf16.xpose.msra.mxu0 0
      %2207 = vmatpush.bf16.xpose.msra.mxu0 0
      %2208 = vmatpush.bf16.xpose.msra.mxu0 0
      %2209 = vmatpush.bf16.xpose.msra.mxu0 0
      %2210 = vmatpush.bf16.xpose.msra.mxu0 0
      %2211 = vmatpush.bf16.xpose.msra.mxu0 0
      %2212 = vmatpush.bf16.xpose.msra.mxu0 %v2203
      %2213 = vmatmul.bf16.gmra.mxu0 %v2200
      %v2214 = vpop.f32.mrf.mxu0
      %v2215 = vadd.f32 0.0, %v2214
      %v2216 = vpop.f32.mrf.mxu0
      %2217 = vdwg.mxu0
      %v2219 = vsel %vm1219, %v2194, 0
      %v2222 = vsel %vm1219, %v2196, 0
      %2224 = vmatpush.bf16.xpose.msra.mxu0 0
      %2225 = vmatpush.bf16.xpose.msra.mxu0 0
      %2226 = vmatpush.bf16.xpose.msra.mxu0 0
      %2227 = vmatpush.bf16.xpose.msra.mxu0 0
      %2228 = vmatpush.bf16.xpose.msra.mxu0 0
      %2229 = vmatpush.bf16.xpose.msra.mxu0 0
      %2230 = vmatpush.bf16.xpose.msra.mxu0 0
      %2231 = vmatpush.bf16.xpose.msra.mxu0 %v2222
      %2232 = vmatmul.bf16.gmra.mxu0 %v2219
      %v2233 = vpop.f32.mrf.mxu0
      %v2234 = vadd.f32 0.0, %v2233
      %v2235 = vpop.f32.mrf.mxu0
      %2236 = vdwg.mxu0
      %v2237 = vsel %vm1258, %v2215, -inf
      %2238 = vmax.xlane.f32.xlu0 %v2237
      %v2239 = vpop.xlane.xlu0 %2238
      %v2240 = vsel %vm1258, %v2234, -inf
      %2241 = vmax.xlane.f32.xlu0 %v2240
      %v2242 = vpop.xlane.xlu0 %2241
      %v2243 = vsub.f32 %v2215, %v2239
      %v2244 = vsub.f32 %v2234, %v2242
      %v2245 = vmul.f32 %v2243, 1.442695
      %v2246 = vpow.pop %v2245
      %v2247 = vmul.f32 %v2244, 1.442695
      %v2248 = vpow.pop %v2247
      %v2249 = vsel %vm1258, %v2246, 0.0
      %2250 = vadd.xlane.f32.xlu0 %v2249
      %v2251 = vpop.xlane.xlu0 %2250
      %v2252 = vsel %vm1258, %v2248, 0.0
      %2253 = vadd.xlane.f32.xlu0 %v2252
      %v2254 = vpop.xlane.xlu0 %2253
      %v2255 = vrcp.pop %v2251
      %v2256 = vrcp.pop %v2254
      %v2257 = vmul.f32 %v2246, %v2255
      %v2258 = vmul.f32 %v2248, %v2256
      %v2259 = vpack.c.bf16 %v2257, %v2257
      %v2260 = vpack.c.bf16 %v2258, %v2258
      %v2262 = vsel %vm1258, %v2259, 0
      %v2265 = vsel %vm1286, %v2197, 0
      %2267 = vmatpush.bf16.msra.mxu0 0
      %2268 = vmatpush.bf16.msra.mxu0 0
      %2269 = vmatpush.bf16.msra.mxu0 0
      %2270 = vmatpush.bf16.msra.mxu0 0
      %2271 = vmatpush.bf16.msra.mxu0 0
      %2272 = vmatpush.bf16.msra.mxu0 0
      %2273 = vmatpush.bf16.msra.mxu0 0
      %2274 = vmatpush.bf16.msra.mxu0 %v2265
      %2275 = vmatmul.bf16.gmra.mxu0 %v2262
      %v2276 = vpop.f32.mrf.mxu0
      %v2277 = vadd.f32 0.0, %v2276
      %v2278 = vpop.f32.mrf.mxu0
      %2279 = vdwg.mxu0
      %v2281 = vsel %vm1258, %v2260, 0
      %v2284 = vsel %vm1286, %v2198, 0
      %2286 = vmatpush.bf16.msra.mxu0 0
      %2287 = vmatpush.bf16.msra.mxu0 0
      %2288 = vmatpush.bf16.msra.mxu0 0
      %2289 = vmatpush.bf16.msra.mxu0 0
      %2290 = vmatpush.bf16.msra.mxu0 0
      %2291 = vmatpush.bf16.msra.mxu0 0
      %2292 = vmatpush.bf16.msra.mxu0 0
      %2293 = vmatpush.bf16.msra.mxu0 %v2284
      %2294 = vmatmul.bf16.gmra.mxu0 %v2281
      %v2295 = vpop.f32.mrf.mxu0
      %v2296 = vadd.f32 0.0, %v2295
      %v2297 = vpop.f32.mrf.mxu0
      %2298 = vdwg.mxu0
      %v2299 = vpack.c.bf16 %v2296, %v2277
      %v2304 = vunpack.c.l.b16 %v1017
      %v2305 = vunpack.c.l.b16 %v1018
      %v2306 = vunpack.c.l.b16 %v1019
      %v2307 = vunpack.c.l.b16 %v1020
      %v2308 = vpack.c.b16 %v2305, %v2304
      %v2309 = vpack.c.b16 %v2307, %v2306
      %v2313 = vsel %vm1219, %v2299, 0
      %2315 = vmatpush.bf16.msra.mxu0 0
      %2316 = vmatpush.bf16.msra.mxu0 0
      %2317 = vmatpush.bf16.msra.mxu0 0
      %2318 = vmatpush.bf16.msra.mxu0 0
      %2319 = vmatpush.bf16.msra.mxu0 0
      %2320 = vmatpush.bf16.msra.mxu0 0
      %2321 = vmatpush.bf16.msra.mxu0 %v2309
      %2322 = vmatpush.bf16.msra.mxu0 %v2308
      %2323 = vmatmul.bf16.gmra.mxu0 %v2313
      %v2324 = vpop.f32.mrf.mxu0
      %v2325 = vadd.f32 0.0, %v2324
      %v2326 = vpop.f32.mrf.mxu0
      %v2327 = vadd.f32 0.0, %v2326
      %2328 = vdwg.mxu0
      %v2329 = vadd.f32 %v2002, %v2325
      %v2330 = vadd.f32 %v2003, %v2327
      %v2331 = vperm.slane %v811, 0
      %v2332 = vadd.f32 %v2329, %v2331
      %v2333 = vadd.f32 %v2330, %v2331
      %v2334 = vadd.f32 %v809, %v2332
      %v2335 = vadd.f32 %v810, %v2333
      %2336 = vadd.xlane.f32.xlu0 %v2334
      %v2337 = vpop.xlane.xlu0 %2336
      %2338 = vadd.xlane.f32.xlu0 %v2335
      %v2339 = vpop.xlane.xlu0 %2338
      %v2340 = vrcp.pop 128.0
      %v2341 = vmul.f32 128.0, %v2340
      %v2342 = vsub.f32 1.0, %v2341
      %v2343 = vmul.f32 %v2340, %v2342
      %v2344 = vadd.f32 %v2340, %v2343
      %vm2345 = vweird.f32 %v2340
      %v2346 = vsel %vm2345, %v2340, %v2344
      %v2347 = vmul.f32 %v2337, %v2346
      %v2348 = vmul.f32 %v2339, %v2346
      %v2349 = vsub.f32 %v2334, %v2347
      %v2350 = vsub.f32 %v2335, %v2348
      %v2351 = vmul.f32 %v2349, %v2349
      %v2352 = vmul.f32 %v2350, %v2350
      %2353 = vadd.xlane.f32.xlu0 %v2351
      %v2354 = vpop.xlane.xlu0 %2353
      %2355 = vadd.xlane.f32.xlu0 %v2352
      %v2356 = vpop.xlane.xlu0 %2355
      %v2357 = vmul.f32 %v2354, %v2346
      %v2358 = vmul.f32 %v2356, %v2346
      %v2359 = vadd.f32 %v2357, 1e-05
      %v2360 = vadd.f32 %v2358, 1e-05
      %v2361 = vrsqrt.pop %v2359
      %v2362 = vmul.f32 %v2361, %v2359
      %v2363 = vmul.f32 %v2362, %v2361
      %v2364 = vmul.f32 0.5, %v2363
      %v2365 = vsub.f32 1.5, %v2364
      %v2366 = vmul.f32 %v2361, %v2365
      %vm2367 = vweird.f32 %v2359
      %vm2368 = vweird.f32 %v2361
      %vm2369 = vmor %vm2367, %vm2368
      %v2370 = vsel %vm2369, %v2361, %v2366
      %v2371 = vrsqrt.pop %v2360
      %v2372 = vmul.f32 %v2371, %v2360
      %v2373 = vmul.f32 %v2372, %v2371
      %v2374 = vmul.f32 0.5, %v2373
      %v2375 = vsub.f32 1.5, %v2374
      %v2376 = vmul.f32 %v2371, %v2375
      %vm2377 = vweird.f32 %v2360
      %vm2378 = vweird.f32 %v2371
      %vm2379 = vmor %vm2377, %vm2378
      %v2380 = vsel %vm2379, %v2371, %v2376
      %v2381 = vmul.f32 %v2349, %v2370
      %v2382 = vmul.f32 %v2350, %v2380
      %v2383 = vperm.slane %v811, 1
      %v2384 = vmul.f32 %v2381, %v2383
      %v2385 = vmul.f32 %v2382, %v2383
      %v2386 = vperm.slane %v811, 2
      %v2387 = vadd.f32 %v2384, %v2386
      %v2388 = vadd.f32 %v2385, %v2386
      %v2389 = vpack.c.bf16 %v2388, %v2387
      %v2390 = vld [vmem:[%s753] sm:$0xff]
      %v2391 = vld [vmem:[%s753 + $0x8] sm:$0xff]
      %v2392 = vld [vmem:[%s753 + $0x10] sm:$0xff]
      %v2393 = vld [vmem:[%s753 + $0x18] sm:$0xff]
      %v2394 = vld [vmem:[%s753 + $0x20] sm:$0xff]
      %v2395 = vld [vmem:[%s753 + $0x28] sm:$0xff]
      %v2396 = vld [vmem:[%s753 + $0x30] sm:$0xff]
      %v2397 = vld [vmem:[%s753 + $0x38] sm:$0xff]
      %v2398 = vld [vmem:[%s753 + $0x40] sm:$0xff]
      %v2399 = vld [vmem:[%s753 + $0x48] sm:$0xff]
      %v2400 = vld [vmem:[%s753 + $0x50] sm:$0xff]
      %v2401 = vld [vmem:[%s753 + $0x58] sm:$0xff]
      %v2402 = vld [vmem:[%s753 + $0x60] sm:$0xff]
      %v2403 = vld [vmem:[%s753 + $0x68] sm:$0xff]
      %v2404 = vld [vmem:[%s753 + $0x70] sm:$0xff]
      %v2405 = vld [vmem:[%s753 + $0x78] sm:$0xff]
      %v2406 = vld [vmem:[%s757] sm:$0x3]
      %v2408 = vperm.slane %v2406, 0
      %v2409 = vperm.slane %v2406, 1
      %v2428 = vunpack.c.l.b16 %v2390
      %v2429 = vunpack.c.h.b16 %v2390
      %v2430 = vunpack.c.l.b16 %v2391
      %v2431 = vunpack.c.h.b16 %v2391
      %v2432 = vunpack.c.l.b16 %v2392
      %v2433 = vunpack.c.h.b16 %v2392
      %v2434 = vunpack.c.l.b16 %v2393
      %v2435 = vunpack.c.h.b16 %v2393
      %v2436 = vunpack.c.l.b16 %v2394
      %v2437 = vunpack.c.h.b16 %v2394
      %v2438 = vunpack.c.l.b16 %v2395
      %v2439 = vunpack.c.h.b16 %v2395
      %v2440 = vunpack.c.l.b16 %v2396
      %v2441 = vunpack.c.h.b16 %v2396
      %v2442 = vunpack.c.l.b16 %v2397
      %v2443 = vunpack.c.h.b16 %v2397
      %v2444 = vunpack.c.l.b16 %v2398
      %v2445 = vunpack.c.h.b16 %v2398
      %v2446 = vunpack.c.l.b16 %v2399
      %v2447 = vunpack.c.h.b16 %v2399
      %v2448 = vunpack.c.l.b16 %v2400
      %v2449 = vunpack.c.h.b16 %v2400
      %v2450 = vunpack.c.l.b16 %v2401
      %v2451 = vunpack.c.h.b16 %v2401
      %v2452 = vunpack.c.l.b16 %v2402
      %v2453 = vunpack.c.h.b16 %v2402
      %v2454 = vunpack.c.l.b16 %v2403
      %v2455 = vunpack.c.h.b16 %v2403
      %v2456 = vunpack.c.l.b16 %v2404
      %v2457 = vunpack.c.h.b16 %v2404
      %v2458 = vunpack.c.l.b16 %v2405
      %v2459 = vunpack.c.h.b16 %v2405
      %v2460 = vpack.c.b16 %v2430, %v2428
      %v2461 = vpack.c.b16 %v2431, %v2429
      %v2462 = vpack.c.b16 %v2434, %v2432
      %v2463 = vpack.c.b16 %v2435, %v2433
      %v2464 = vpack.c.b16 %v2438, %v2436
      %v2465 = vpack.c.b16 %v2439, %v2437
      %v2466 = vpack.c.b16 %v2442, %v2440
      %v2467 = vpack.c.b16 %v2443, %v2441
      %v2468 = vpack.c.b16 %v2446, %v2444
      %v2469 = vpack.c.b16 %v2447, %v2445
      %v2470 = vpack.c.b16 %v2450, %v2448
      %v2471 = vpack.c.b16 %v2451, %v2449
      %v2472 = vpack.c.b16 %v2454, %v2452
      %v2473 = vpack.c.b16 %v2455, %v2453
      %v2474 = vpack.c.b16 %v2458, %v2456
      %v2475 = vpack.c.b16 %v2459, %v2457
      %2492 = vmatpush.bf16.msra.mxu0 %v2474
      %2493 = vmatpush.bf16.msra.mxu0 %v2472
      %2494 = vmatpush.bf16.msra.mxu0 %v2470
      %2495 = vmatpush.bf16.msra.mxu0 %v2468
      %2496 = vmatpush.bf16.msra.mxu0 %v2466
      %2497 = vmatpush.bf16.msra.mxu0 %v2464
      %2498 = vmatpush.bf16.msra.mxu0 %v2462
      %2499 = vmatpush.bf16.msra.mxu0 %v2460
      %2500 = vmatmul.bf16.gmra.mxu0 %v2389
      %v2501 = vpop.f32.mrf.mxu0
      %v2502 = vadd.f32 %v2408, %v2501
      %v2503 = vpop.f32.mrf.mxu0
      %v2504 = vadd.f32 %v2408, %v2503
      %2505 = vdwg.mxu0
      %2506 = vmatpush.bf16.msra.mxu0 %v2475
      %2507 = vmatpush.bf16.msra.mxu0 %v2473
      %2508 = vmatpush.bf16.msra.mxu0 %v2471
      %2509 = vmatpush.bf16.msra.mxu0 %v2469
      %2510 = vmatpush.bf16.msra.mxu0 %v2467
      %2511 = vmatpush.bf16.msra.mxu0 %v2465
      %2512 = vmatpush.bf16.msra.mxu0 %v2463
      %2513 = vmatpush.bf16.msra.mxu0 %v2461
      %2514 = vmatmul.bf16.gmra.mxu0 %v2389
      %v2515 = vpop.f32.mrf.mxu0
      %v2516 = vadd.f32 %v2409, %v2515
      %v2517 = vpop.f32.mrf.mxu0
      %v2518 = vadd.f32 %v2409, %v2517
      %2519 = vdwg.mxu0
      %v2520 = vmax.f32 %v2502, 0.0
      %v2521 = vmax.f32 %v2516, 0.0
      %v2522 = vmax.f32 %v2504, 0.0
      %v2523 = vmax.f32 %v2518, 0.0
      %v2524 = vpack.c.bf16 %v2522, %v2520
      %v2525 = vpack.c.bf16 %v2523, %v2521
      %v2526 = vld [vmem:[%s762] sm:$0xf]
      %v2527 = vld [vmem:[%s762 + $0x4] sm:$0xf]
      %v2528 = vld [vmem:[%s762 + $0x8] sm:$0xf]
      %v2529 = vld [vmem:[%s762 + $0xc] sm:$0xf]
      %v2530 = vld [vmem:[%s762 + $0x10] sm:$0xf]
      %v2531 = vld [vmem:[%s762 + $0x14] sm:$0xf]
      %v2532 = vld [vmem:[%s762 + $0x18] sm:$0xf]
      %v2533 = vld [vmem:[%s762 + $0x1c] sm:$0xf]
      %v2534 = vld [vmem:[%s762 + $0x20] sm:$0xf]
      %v2535 = vld [vmem:[%s762 + $0x24] sm:$0xf]
      %v2536 = vld [vmem:[%s762 + $0x28] sm:$0xf]
      %v2537 = vld [vmem:[%s762 + $0x2c] sm:$0xf]
      %v2538 = vld [vmem:[%s762 + $0x30] sm:$0xf]
      %v2539 = vld [vmem:[%s762 + $0x34] sm:$0xf]
      %v2540 = vld [vmem:[%s762 + $0x38] sm:$0xf]
      %v2541 = vld [vmem:[%s762 + $0x3c] sm:$0xf]
      %v2542 = vld [vmem:[%s762 + $0x40] sm:$0xf]
      %v2543 = vld [vmem:[%s762 + $0x44] sm:$0xf]
      %v2544 = vld [vmem:[%s762 + $0x48] sm:$0xf]
      %v2545 = vld [vmem:[%s762 + $0x4c] sm:$0xf]
      %v2546 = vld [vmem:[%s762 + $0x50] sm:$0xf]
      %v2547 = vld [vmem:[%s762 + $0x54] sm:$0xf]
      %v2548 = vld [vmem:[%s762 + $0x58] sm:$0xf]
      %v2549 = vld [vmem:[%s762 + $0x5c] sm:$0xf]
      %v2550 = vld [vmem:[%s762 + $0x60] sm:$0xf]
      %v2551 = vld [vmem:[%s762 + $0x64] sm:$0xf]
      %v2552 = vld [vmem:[%s762 + $0x68] sm:$0xf]
      %v2553 = vld [vmem:[%s762 + $0x6c] sm:$0xf]
      %v2554 = vld [vmem:[%s762 + $0x70] sm:$0xf]
      %v2555 = vld [vmem:[%s762 + $0x74] sm:$0xf]
      %v2556 = vld [vmem:[%s762 + $0x78] sm:$0xf]
      %v2557 = vld [vmem:[%s762 + $0x7c] sm:$0xf]
      %v2558 = vperm.slane %v811, 3
      %v2591 = vunpack.c.l.b16 %v2526
      %v2592 = vunpack.c.l.b16 %v2527
      %v2593 = vunpack.c.l.b16 %v2528
      %v2594 = vunpack.c.l.b16 %v2529
      %v2595 = vunpack.c.l.b16 %v2530
      %v2596 = vunpack.c.l.b16 %v2531
      %v2597 = vunpack.c.l.b16 %v2532
      %v2598 = vunpack.c.l.b16 %v2533
      %v2599 = vunpack.c.l.b16 %v2534
      %v2600 = vunpack.c.l.b16 %v2535
      %v2601 = vunpack.c.l.b16 %v2536
      %v2602 = vunpack.c.l.b16 %v2537
      %v2603 = vunpack.c.l.b16 %v2538
      %v2604 = vunpack.c.l.b16 %v2539
      %v2605 = vunpack.c.l.b16 %v2540
      %v2606 = vunpack.c.l.b16 %v2541
      %v2607 = vunpack.c.l.b16 %v2542
      %v2608 = vunpack.c.l.b16 %v2543
      %v2609 = vunpack.c.l.b16 %v2544
      %v2610 = vunpack.c.l.b16 %v2545
      %v2611 = vunpack.c.l.b16 %v2546
      %v2612 = vunpack.c.l.b16 %v2547
      %v2613 = vunpack.c.l.b16 %v2548
      %v2614 = vunpack.c.l.b16 %v2549
      %v2615 = vunpack.c.l.b16 %v2550
      %v2616 = vunpack.c.l.b16 %v2551
      %v2617 = vunpack.c.l.b16 %v2552
      %v2618 = vunpack.c.l.b16 %v2553
      %v2619 = vunpack.c.l.b16 %v2554
      %v2620 = vunpack.c.l.b16 %v2555
      %v2621 = vunpack.c.l.b16 %v2556
      %v2622 = vunpack.c.l.b16 %v2557
      %v2623 = vpack.c.b16 %v2592, %v2591
      %v2624 = vpack.c.b16 %v2594, %v2593
      %v2625 = vpack.c.b16 %v2596, %v2595
      %v2626 = vpack.c.b16 %v2598, %v2597
      %v2627 = vpack.c.b16 %v2600, %v2599
      %v2628 = vpack.c.b16 %v2602, %v2601
      %v2629 = vpack.c.b16 %v2604, %v2603
      %v2630 = vpack.c.b16 %v2606, %v2605
      %v2631 = vpack.c.b16 %v2608, %v2607
      %v2632 = vpack.c.b16 %v2610, %v2609
      %v2633 = vpack.c.b16 %v2612, %v2611
      %v2634 = vpack.c.b16 %v2614, %v2613
      %v2635 = vpack.c.b16 %v2616, %v2615
      %v2636 = vpack.c.b16 %v2618, %v2617
      %v2637 = vpack.c.b16 %v2620, %v2619
      %v2638 = vpack.c.b16 %v2622, %v2621
      %2655 = vmatpush.bf16.msra.mxu0 %v2630
      %2656 = vmatpush.bf16.msra.mxu0 %v2629
      %2657 = vmatpush.bf16.msra.mxu0 %v2628
      %2658 = vmatpush.bf16.msra.mxu0 %v2627
      %2659 = vmatpush.bf16.msra.mxu0 %v2626
      %2660 = vmatpush.bf16.msra.mxu0 %v2625
      %2661 = vmatpush.bf16.msra.mxu0 %v2624
      %2662 = vmatpush.bf16.msra.mxu0 %v2623
      %2663 = vmatmul.bf16.gmra.mxu0 %v2524
      %v2664 = vpop.f32.mrf.mxu0
      %v2665 = vadd.f32 %v2558, %v2664
      %v2666 = vpop.f32.mrf.mxu0
      %v2667 = vadd.f32 %v2558, %v2666
      %2668 = vdwg.mxu0
      %2669 = vmatpush.bf16.msra.mxu0 %v2638
      %2670 = vmatpush.bf16.msra.mxu0 %v2637
      %2671 = vmatpush.bf16.msra.mxu0 %v2636
      %2672 = vmatpush.bf16.msra.mxu0 %v2635
      %2673 = vmatpush.bf16.msra.mxu0 %v2634
      %2674 = vmatpush.bf16.msra.mxu0 %v2633
      %2675 = vmatpush.bf16.msra.mxu0 %v2632
      %2676 = vmatpush.bf16.msra.mxu0 %v2631
      %2677 = vmatmul.bf16.gmra.mxu0 %v2525
      %v2678 = vpop.f32.mrf.mxu0
      %v2679 = vadd.f32 %v2665, %v2678
      %v2680 = vpop.f32.mrf.mxu0
      %v2681 = vadd.f32 %v2667, %v2680
      %2682 = vdwg.mxu0
      %v2683 = vadd.f32 %v2387, %v2679
      %v2684 = vadd.f32 %v2388, %v2681
      %2685 = vadd.xlane.f32.xlu0 %v2683
      %v2686 = vpop.xlane.xlu0 %2685
      %2687 = vadd.xlane.f32.xlu0 %v2684
      %v2688 = vpop.xlane.xlu0 %2687
      %v2689 = vmul.f32 %v2686, %v2346
      %v2690 = vmul.f32 %v2688, %v2346
      %v2691 = vsub.f32 %v2683, %v2689
      %v2692 = vsub.f32 %v2684, %v2690
      %v2693 = vmul.f32 %v2691, %v2691
      %v2694 = vmul.f32 %v2692, %v2692
      %2695 = vadd.xlane.f32.xlu0 %v2693
      %v2696 = vpop.xlane.xlu0 %2695
      %2697 = vadd.xlane.f32.xlu0 %v2694
      %v2698 = vpop.xlane.xlu0 %2697
      %v2699 = vmul.f32 %v2696, %v2346
      %v2700 = vmul.f32 %v2698, %v2346
      %v2701 = vadd.f32 %v2699, 1e-05
      %v2702 = vadd.f32 %v2700, 1e-05
      %v2703 = vrsqrt.pop %v2701
      %v2704 = vmul.f32 %v2703, %v2701
      %v2705 = vmul.f32 %v2704, %v2703
      %v2706 = vmul.f32 0.5, %v2705
      %v2707 = vsub.f32 1.5, %v2706
      %v2708 = vmul.f32 %v2703, %v2707
      %vm2709 = vweird.f32 %v2701
      %vm2710 = vweird.f32 %v2703
      %vm2711 = vmor %vm2709, %vm2710
      %v2712 = vsel %vm2711, %v2703, %v2708
      %v2713 = vrsqrt.pop %v2702
      %v2714 = vmul.f32 %v2713, %v2702
      %v2715 = vmul.f32 %v2714, %v2713
      %v2716 = vmul.f32 0.5, %v2715
      %v2717 = vsub.f32 1.5, %v2716
      %v2718 = vmul.f32 %v2713, %v2717
      %vm2719 = vweird.f32 %v2702
      %vm2720 = vweird.f32 %v2713
      %vm2721 = vmor %vm2719, %vm2720
      %v2722 = vsel %vm2721, %v2713, %v2718
      %v2723 = vmul.f32 %v2691, %v2712
      %v2724 = vmul.f32 %v2692, %v2722
      %v2725 = vperm.slane %v811, 4
      %v2726 = vmul.f32 %v2723, %v2725
      %v2727 = vmul.f32 %v2724, %v2725
      %v2728 = vperm.slane %v811, 5
      %v2729 = vadd.f32 %v2726, %v2728
      %v2730 = vadd.f32 %v2727, %v2728
      %2731 = vst [vmem:[#allocation2] sm:$0xff] %v2729
      %2732 = vst [vmem:[#allocation2 + $0x8] sm:$0xff] %v2730
      %p2733 = scmp.eq.s32.totalorder %s33, 1
      // Predicated region
      $region93: #{stock_transformer_forward.1} parent=87 // pred_check
        %p2734 = pneg %p2733
      $region94: #{stock_transformer_forward.1} parent=87 // pred_check_branch
        %2736 = sbr.rel (%p2734) target = $region96
      $region95: #{stock_transformer_forward.1} parent=87 // pred_region
        %v2737 = vpack.c.bf16 %v2730, %v2729
        %v2738 = vld [vmem:[%s15] sm:$0xf]
        %v2739 = vld [vmem:[%s15 + $0x4] sm:$0xf]
        %v2740 = vld [vmem:[%s15 + $0x8] sm:$0xf]
        %v2741 = vld [vmem:[%s15 + $0xc] sm:$0xf]
        %v2742 = vld [vmem:[%s15 + $0x10] sm:$0xf]
        %v2743 = vld [vmem:[%s15 + $0x14] sm:$0xf]
        %v2744 = vld [vmem:[%s15 + $0x18] sm:$0xf]
        %v2745 = vld [vmem:[%s15 + $0x1c] sm:$0xf]
        %v2746 = vld [vmem:[%s15 + $0x20] sm:$0xf]
        %v2747 = vld [vmem:[%s15 + $0x24] sm:$0xf]
        %v2748 = vld [vmem:[%s15 + $0x28] sm:$0xf]
        %v2749 = vld [vmem:[%s15 + $0x2c] sm:$0xf]
        %v2750 = vld [vmem:[%s15 + $0x30] sm:$0xf]
        %v2751 = vld [vmem:[%s15 + $0x34] sm:$0xf]
        %v2752 = vld [vmem:[%s15 + $0x38] sm:$0xf]
        %v2753 = vld [vmem:[%s15 + $0x3c] sm:$0xf]
        %v2754 = vld [vmem:[%s16] sm:$0x1]
        %v2756 = vperm.slane %v2754, 0
        %v2774 = vunpack.c.l.b16 %v2738
        %v2775 = vunpack.c.l.b16 %v2739
        %v2776 = vunpack.c.l.b16 %v2740
        %v2777 = vunpack.c.l.b16 %v2741
        %v2778 = vunpack.c.l.b16 %v2742
        %v2779 = vunpack.c.l.b16 %v2743
        %v2780 = vunpack.c.l.b16 %v2744
        %v2781 = vunpack.c.l.b16 %v2745
        %v2782 = vunpack.c.l.b16 %v2746
        %v2783 = vunpack.c.l.b16 %v2747
        %v2784 = vunpack.c.l.b16 %v2748
        %v2785 = vunpack.c.l.b16 %v2749
        %v2786 = vunpack.c.l.b16 %v2750
        %v2787 = vunpack.c.l.b16 %v2751
        %v2788 = vunpack.c.l.b16 %v2752
        %v2789 = vunpack.c.l.b16 %v2753
        %v2790 = vpack.c.b16 %v2775, %v2774
        %v2791 = vpack.c.b16 %v2777, %v2776
        %v2792 = vpack.c.b16 %v2779, %v2778
        %v2793 = vpack.c.b16 %v2781, %v2780
        %v2794 = vpack.c.b16 %v2783, %v2782
        %v2795 = vpack.c.b16 %v2785, %v2784
        %v2796 = vpack.c.b16 %v2787, %v2786
        %v2797 = vpack.c.b16 %v2789, %v2788
        %2806 = vmatpush.bf16.msra.mxu0 %v2797
        %2807 = vmatpush.bf16.msra.mxu0 %v2796
        %2808 = vmatpush.bf16.msra.mxu0 %v2795
        %2809 = vmatpush.bf16.msra.mxu0 %v2794
        %2810 = vmatpush.bf16.msra.mxu0 %v2793
        %2811 = vmatpush.bf16.msra.mxu0 %v2792
        %2812 = vmatpush.bf16.msra.mxu0 %v2791
        %2813 = vmatpush.bf16.msra.mxu0 %v2790
        %2814 = vmatmul.bf16.gmra.mxu0 %v2737
        %v2815 = vpop.f32.mrf.mxu0
        %v2816 = vadd.f32 %v2756, %v2815
        %v2817 = vpop.f32.mrf.mxu0
        %v2818 = vadd.f32 %v2756, %v2817
        %2819 = vdwg.mxu0
        %vm2820 = vcmask 31744
        %2821 = vst.msk [vmem:[%s767] sm:$0xff] %vm2820, %v2816
        %2822 = vst.msk [vmem:[%s767 + $0x8] sm:$0xff] %vm2820, %v2818
      $region96: #{stock_transformer_forward.1} parent=87 // pred_fallthru
        _
      %s2823 = smul.u32 2, %s32
      %p2824 = scmp.lt.s32.totalorder %s2823, 1
      %s2825 = scalar_select %p2824, %s2823, 1
      %s2826 = smul.addr %s2825, 8
      %s2827 = scalar_lea.vmem %s17, %s2826
      // Predicated region
      $region97: #{stock_transformer_forward.1} parent=87 // pred_check
        %p2828 = pneg %p475
      $region98: #{stock_transformer_forward.1} parent=87 // pred_check_branch
        %2830 = sbr.rel (%p2828) target = $region100
      $region99: #{stock_transformer_forward.1} parent=87 // pred_region
        %s2831 = smul.u32 2, %s32
      $region100: #{stock_transformer_forward.1} parent=87 // pred_fallthru
        _
      // Predicated region
      $region101: #{stock_transformer_forward.1} parent=87 // pred_check
        %p2832 = pneg %p475
      $region102: #{stock_transformer_forward.1} parent=87 // pred_check_branch
        %2834 = sbr.rel (%p2832) target = $region104
      $region103: #{stock_transformer_forward.1} parent=87 // pred_region
        %s2835 = smul.u32 2, %s32
        %p2836 = scmp.lt.s32.totalorder %s2835, 1
        %s2837 = scalar_select %p2836, %s2835, 1
        %s2838 = smul.addr %s2837, 8
        %s2839 = scalar_lea.vmem %s17, %s2838
      $region104: #{stock_transformer_forward.1} parent=87 // pred_fallthru
        _
    $region88: #{stock_transformer_forward.1} parent=5 // pred_fallthru
      _
    %p2840 = scmp.le.s32.totalorder 2, %s23
    // Predicated region
    $region105: #{stock_transformer_forward.1} parent=5 // pred_check
      %p2841 = pneg %p2840
    $region106: #{stock_transformer_forward.1} parent=5 // pred_check_branch
      %2843 = sbr.rel (%p2841) target = $region108
    $region107: #{stock_transformer_forward.1} parent=5 // pred_region
      %s2844 = ssub.s32 %s23, 2
    $region108: #{stock_transformer_forward.1} parent=5 // pred_fallthru
      _
  $region6: #{stock_transformer_forward.1} parent=0 // loop_footer
    %s27 = sadd.s32 1, %s23
  $region7: #{stock_transformer_forward.1} parent=0 // loop_footer_branch
    %22 = sbr.rel target = $region3
  $region8: #{stock_transformer_forward.1} parent=0 // loop_exit
    _

</llo_original>
